<compile_context>
chip_gen: v5e
topology: v5e:2x2
jax: 0.10.0
libtpu: 0.0.40
codegen_flags: <defaults>
</compile_context>

<pallas_src>
import functools
import math

import jax
import jax.numpy as jnp
from jax.experimental import pallas as pl
from jax.experimental.pallas import tpu as pltpu

LANE = 128  # TPU lane width; also the row/contraction tile size used here.


# --------------------------------------------------------------------------
# Kernel (one EvolveGCN-O layer; optional fused Linear + log_softmax epilogue)
# --------------------------------------------------------------------------
def _make_layer_kernel(num_classes=None):
    final = num_classes is not None

    def kernel(*refs):
        if final:
            (wg_t_ref, bg_ref, w0_ref, a_ref, x_ref,
             wlin_t_ref, blin_ref, out_ref, w_scr, acc_scr) = refs
        else:
            (wg_t_ref, bg_ref, w0_ref, a_ref, x_ref,
             out_ref, w_scr, acc_scr) = refs

        k = pl.program_id(1)
        nk = pl.num_programs(1)
        f_pad = w0_ref.shape[0]

        @pl.when(k == 0)
        def _prologue():
            # EvolveGCN-O weight evolution: W' = GRUCell(W, W), gates (r, z, n).
            # Recomputed once per row tile (tiny [F,6F] matmul, negligible vs the
            # A@X work) so the kernel stays correct if the row axis is sharded
            # across TensorCores; a single global prologue would not be.
            w0 = w0_ref[...]
            g = jnp.dot(w0, wg_t_ref[...],
                        preferred_element_type=jnp.float32) + bg_ref[...]
            gi = g[:, :3 * f_pad]
            gh = g[:, 3 * f_pad:]
            i_r, i_z, i_n = gi[:, :f_pad], gi[:, f_pad:2 * f_pad], gi[:, 2 * f_pad:]
            h_r, h_z, h_n = gh[:, :f_pad], gh[:, f_pad:2 * f_pad], gh[:, 2 * f_pad:]
            r = jax.nn.sigmoid(i_r + h_r)
            z = jax.nn.sigmoid(i_z + h_z)
            n = jnp.tanh(i_n + r * h_n)
            w_scr[...] = ((1.0 - z) * n + z * w0).astype(jnp.bfloat16)
            acc_scr[...] = jnp.zeros_like(acc_scr)

        # K-tiled contraction: A_hat row-tile (bf16) @ X k-tile (bf16), f32 acc.
        acc_scr[...] += jnp.dot(a_ref[...], x_ref[...],
                                preferred_element_type=jnp.float32)

        @pl.when(k == nk - 1)
        def _epilogue():
            # Apply the evolved weight once per row tile, then ReLU.
            h = jnp.dot(acc_scr[...].astype(jnp.bfloat16), w_scr[...],
                        preferred_element_type=jnp.float32)
            h = jnp.maximum(h, 0.0)
            # F.dropout(training=False) -> identity (eval semantics).
            if final:
                logits = jnp.dot(h.astype(jnp.bfloat16), wlin_t_ref[...],
                                 preferred_element_type=jnp.float32) + blin_ref[...]
                # Mask padded class lanes so they do not pollute the softmax.
                lane = jax.lax.broadcasted_iota(jnp.int32, logits.shape, 1)
                logits = jnp.where(lane < num_classes, logits, -1e30)
                m = jnp.max(logits, axis=-1, keepdims=True)
                s = logits - m
                lse = jnp.log(jnp.sum(jnp.exp(s), axis=-1, keepdims=True))
                out_ref[...] = s - lse
            else:
                out_ref[...] = h.astype(out_ref.dtype)

    return kernel


# --------------------------------------------------------------------------
# pallas_call wrapper for one layer
# --------------------------------------------------------------------------
def _evolve_gcn_layer(a_hat, x, lp, linear=None, num_classes=None,
                      tile_m=LANE, tile_k=LANE):
    n_pad = a_hat.shape[0]
    f_pad = x.shape[1]
    assert n_pad % tile_m == 0 and n_pad % tile_k == 0
    final = linear is not None

    in_specs = [
        pl.BlockSpec((f_pad, 6 * f_pad), lambda i, k: (0, 0)),  # fused GRU W_ih|W_hh (f32)
        pl.BlockSpec((1, 6 * f_pad), lambda i, k: (0, 0)),      # fused GRU biases (f32)
        pl.BlockSpec((f_pad, f_pad), lambda i, k: (0, 0)),      # GCN weight W0 (f32)
        pl.BlockSpec((tile_m, tile_k), lambda i, k: (i, k)),    # A_hat block (bf16)
        pl.BlockSpec((tile_k, f_pad), lambda i, k: (k, 0)),     # X block (bf16)
    ]
    args = [lp["wg_t"], lp["bg"], lp["w0"], a_hat, x]

    if final:
        c_pad = linear["wlin_t"].shape[1]
        in_specs += [
            pl.BlockSpec((f_pad, c_pad), lambda i, k: (0, 0)),  # Linear W^T (bf16)
            pl.BlockSpec((1, c_pad), lambda i, k: (0, 0)),      # Linear bias (f32)
        ]
        args += [linear["wlin_t"], linear["blin"]]
        out_shape = jax.ShapeDtypeStruct((n_pad, c_pad), jnp.float32)
        out_dim = c_pad
    else:
        out_shape = jax.ShapeDtypeStruct((n_pad, f_pad), jnp.bfloat16)
        out_dim = f_pad

    return pl.pallas_call(
        _make_layer_kernel(num_classes if final else None),
        out_shape=out_shape,
        grid=(n_pad // tile_m, n_pad // tile_k),
        in_specs=in_specs,
        out_specs=pl.BlockSpec((tile_m, out_dim), lambda i, k: (i, 0)),
        scratch_shapes=[pltpu.VMEM((f_pad, f_pad), jnp.bfloat16),    # evolved W'
                        pltpu.VMEM((tile_m, f_pad), jnp.float32)],   # A@X accumulator
        compiler_params=pltpu.CompilerParams(
            dimension_semantics=("parallel", "arbitrary")),
    )(*args)


@functools.partial(jax.jit, static_argnames=("num_classes",))
def recurrent_gcn_forward(x_pad, a_hat_pad, params, *, num_classes):
    h = _evolve_gcn_layer(a_hat_pad, x_pad, params["layer0"])
    return _evolve_gcn_layer(a_hat_pad, h, params["layer1"],
                             linear=params["linear"], num_classes=num_classes)


# --------------------------------------------------------------------------
# Plain-JAX glue: graph normalization, padding, deterministic parameter init
# --------------------------------------------------------------------------
def build_normalized_adjacency(edge_index, num_nodes, improved=True):
    """Dense GCN normalization: A_hat = D^-1/2 (A + fill*I) D^-1/2."""
    src, dst = edge_index[0], edge_index[1]
    w = jnp.ones(src.shape[0], dtype=jnp.float32)
    a = jnp.zeros((num_nodes, num_nodes), jnp.float32)
    a = a.at[dst, src].add(w)
    fill = 2.0 if improved else 1.0
    a = a + fill * jnp.eye(num_nodes, dtype=jnp.float32)
    deg = a.sum(axis=1)
    dinv = jnp.where(deg > 0, 1.0 / jnp.sqrt(deg), 0.0)
    return dinv[:, None] * a * dinv[None, :]


def _round_up(v, m):
    return ((v + m - 1) // m) * m


def _pad2(x, rows, cols):
    return jnp.zeros((rows, cols), x.dtype).at[:x.shape[0], :x.shape[1]].set(x)


def _pad_gates(m, f, f_pad, row_pad):
    """[R, 3F] (gates r,z,n in F-wide blocks) -> [row_pad, 3*F_pad], gate blocks
    placed on F_pad (lane-aligned) boundaries, zeros elsewhere."""
    out = jnp.zeros((row_pad, 3 * f_pad), m.dtype)
    for g in range(3):
        out = out.at[:m.shape[0], g * f_pad:g * f_pad + f].set(
            m[:, g * f:(g + 1) * f])
    return out


def init_params(key, node_features, num_classes, f_pad, c_pad):
    f, c = node_features, num_classes
    ks = jax.random.split(key, 12)

    def u(k, shape, bound):
        return jax.random.uniform(k, shape, jnp.float32, -bound, bound)

    stdv = 1.0 / math.sqrt(f)

    def make_layer(base):
        w0 = u(ks[base + 0], (f, f), stdv)            # GCN weight
        wih_t = u(ks[base + 1], (f, 3 * f), stdv)     # GRU W_ih^T (r,z,n)
        whh_t = u(ks[base + 2], (f, 3 * f), stdv)     # GRU W_hh^T
        bih = u(ks[base + 3], (1, 3 * f), stdv)
        bhh = u(ks[base + 4], (1, 3 * f), stdv)
        wg_t = jnp.concatenate([_pad_gates(wih_t, f, f_pad, f_pad),
                                _pad_gates(whh_t, f, f_pad, f_pad)], axis=1)
        bg = jnp.concatenate([_pad_gates(bih, f, f_pad, 1),
                              _pad_gates(bhh, f, f_pad, 1)], axis=1)
        return {"w0": _pad2(w0, f_pad, f_pad), "wg_t": wg_t, "bg": bg}

    lin_bound = 1.0 / math.sqrt(f)
    wlin_t = u(ks[10], (f, c), lin_bound)             # Linear W^T
    blin = u(ks[11], (1, c), lin_bound)
    return {
        "layer0": make_layer(0),
        "layer1": make_layer(5),
        "linear": {"wlin_t": _pad2(wlin_t, f_pad, c_pad).astype(jnp.bfloat16),
                   "blin": _pad2(blin, 1, c_pad)},
    }


# --------------------------------------------------------------------------
if __name__ == "__main__":
    N, F_DIM, C, E = 16, 32, 8, 48   # nodes, node_features, num_classes, edges
    N_PAD = _round_up(N, LANE)
    F_PAD = _round_up(F_DIM, LANE)
    C_PAD = _round_up(C, LANE)

    key = jax.random.PRNGKey(0)
    kx, ks, ko, kp = jax.random.split(key, 4)

    x = jax.random.normal(kx, (N, F_DIM), jnp.float32)
    src = jax.random.randint(ks, (E,), 0, N)
    off = jax.random.randint(ko, (E,), 1, N)
    dst = (src + off) % N                       # no pre-existing self-loops
    edge_index = jnp.stack([src, dst])

    a_hat = build_normalized_adjacency(edge_index, N, improved=True)
    a_hat_pad = _pad2(a_hat, N_PAD, N_PAD).astype(jnp.bfloat16)
    x_pad = _pad2(x, N_PAD, F_PAD).astype(jnp.bfloat16)
    params = init_params(kp, F_DIM, C, F_PAD, C_PAD)

    out_pad = recurrent_gcn_forward(x_pad, a_hat_pad, params, num_classes=C)
    out_pad = jax.block_until_ready(out_pad)
    out = out_pad[:N, :C]

    assert out.shape == (N, C)
    assert bool(jnp.all(jnp.isfinite(out)))
    # log_softmax rows must sum (in prob space) to ~1
    assert bool(jnp.allclose(jnp.sum(jnp.exp(out), axis=-1), 1.0, atol=1e-3))
    print("KERNEL_OK")
</pallas_src>

<mosaic_0001>
module attributes {stable_mosaic.version = 11 : i64} {
  func.func @kernel(%arg0: i32, %arg1: i32, %arg2: memref<128x768xf32, #tpu.memory_space<vmem>>, %arg3: memref<1x768xf32, #tpu.memory_space<vmem>>, %arg4: memref<128x128xf32, #tpu.memory_space<vmem>>, %arg5: memref<128x128xbf16, #tpu.memory_space<vmem>>, %arg6: memref<128x128xbf16, #tpu.memory_space<vmem>>, %arg7: memref<128x128xbf16, #tpu.memory_space<vmem>>, %arg8: memref<128x128xbf16, #tpu.memory_space<vmem>>, %arg9: memref<128x128xf32, #tpu.memory_space<vmem>>) attributes {dimension_semantics = [#tpu.dimension_semantics<parallel>, #tpu.dimension_semantics<arbitrary>], iteration_bounds = array<i64: 1, 1>, scalar_prefetch = 0 : i64, scratch_operands = 2 : i64, tpu.core_type = #tpu.core_type<tc>, window_params = [{pipeline_mode = #tpu.pipeline_mode<synchronous>, transform_indices = @transform_0, window_bounds = array<i64: 128, 768>}, {pipeline_mode = #tpu.pipeline_mode<synchronous>, transform_indices = @transform_1, window_bounds = array<i64: 1, 768>}, {pipeline_mode = #tpu.pipeline_mode<synchronous>, transform_indices = @transform_2, window_bounds = array<i64: 128, 128>}, {transform_indices = @transform_3, window_bounds = array<i64: 128, 128>}, {transform_indices = @transform_4, window_bounds = array<i64: 128, 128>}, {transform_indices = @transform_5, window_bounds = array<i64: 128, 128>}]} {
    %c0_i32 = arith.constant 0 : i32
    %0 = arith.cmpi eq, %arg1, %c0_i32 : i32
    %1 = arith.extui %0 : i1 to i32
    %c0_i32_0 = arith.constant 0 : i32
    %2 = arith.cmpi ne, %1, %c0_i32_0 : i32
    scf.if %2 {
      %c0_10 = arith.constant 0 : index
      %c0_11 = arith.constant 0 : index
      %12 = vector.load %arg4[%c0_10, %c0_11] : memref<128x128xf32, #tpu.memory_space<vmem>>, vector<128x128xf32>
      %c0_12 = arith.constant 0 : index
      %c0_13 = arith.constant 0 : index
      %13 = vector.load %arg2[%c0_12, %c0_13] : memref<128x768xf32, #tpu.memory_space<vmem>>, vector<128x768xf32>
      %cst_14 = arith.constant dense<0.000000e+00> : vector<128x768xf32>
      %14 = tpu.matmul %12, %13, %cst_14 {dimension_numbers = #tpu.dot_dimension_numbers<[1], [0], [0], [1], [0, 0, 1, 1], [], []>} : vector<128x128xf32>, vector<128x768xf32>, vector<128x768xf32> -> vector<128x768xf32>
      %c0_15 = arith.constant 0 : index
      %c0_16 = arith.constant 0 : index
      %15 = vector.load %arg3[%c0_15, %c0_16] : memref<1x768xf32, #tpu.memory_space<vmem>>, vector<1x768xf32>
      %16 = vector.broadcast %15 : vector<1x768xf32> to vector<128x768xf32>
      %17 = arith.addf %14, %16 : vector<128x768xf32>
      %18 = vector.extract_strided_slice %17 {offsets = [0, 0], sizes = [128, 384], strides = [1, 1]} : vector<128x768xf32> to vector<128x384xf32>
      %19 = vector.extract_strided_slice %17 {offsets = [0, 384], sizes = [128, 384], strides = [1, 1]} : vector<128x768xf32> to vector<128x384xf32>
      %20 = vector.extract_strided_slice %18 {offsets = [0, 0], sizes = [128, 128], strides = [1, 1]} : vector<128x384xf32> to vector<128x128xf32>
      %21 = vector.extract_strided_slice %18 {offsets = [0, 128], sizes = [128, 128], strides = [1, 1]} : vector<128x384xf32> to vector<128x128xf32>
      %22 = vector.extract_strided_slice %18 {offsets = [0, 256], sizes = [128, 128], strides = [1, 1]} : vector<128x384xf32> to vector<128x128xf32>
      %23 = vector.extract_strided_slice %19 {offsets = [0, 0], sizes = [128, 128], strides = [1, 1]} : vector<128x384xf32> to vector<128x128xf32>
      %24 = vector.extract_strided_slice %19 {offsets = [0, 128], sizes = [128, 128], strides = [1, 1]} : vector<128x384xf32> to vector<128x128xf32>
      %25 = vector.extract_strided_slice %19 {offsets = [0, 256], sizes = [128, 128], strides = [1, 1]} : vector<128x384xf32> to vector<128x128xf32>
      %26 = arith.addf %20, %23 : vector<128x128xf32>
      %27 = arith.negf %26 : vector<128x128xf32>
      %28 = math.exp %27 : vector<128x128xf32>
      %cst_17 = arith.constant 1.000000e+00 : f32
      %29 = vector.broadcast %cst_17 : f32 to vector<128x128xf32>
      %30 = arith.addf %29, %28 : vector<128x128xf32>
      %31 = arith.divf %29, %30 : vector<128x128xf32>
      %32 = arith.addf %21, %24 : vector<128x128xf32>
      %33 = arith.negf %32 : vector<128x128xf32>
      %34 = math.exp %33 : vector<128x128xf32>
      %cst_18 = arith.constant 1.000000e+00 : f32
      %35 = vector.broadcast %cst_18 : f32 to vector<128x128xf32>
      %36 = arith.addf %35, %34 : vector<128x128xf32>
      %37 = arith.divf %35, %36 : vector<128x128xf32>
      %38 = arith.mulf %31, %25 : vector<128x128xf32>
      %39 = arith.addf %22, %38 : vector<128x128xf32>
      %40 = math.tanh %39 : vector<128x128xf32>
      %cst_19 = arith.constant 1.000000e+00 : f32
      %41 = vector.broadcast %cst_19 : f32 to vector<128x128xf32>
      %42 = arith.subf %41, %37 : vector<128x128xf32>
      %43 = arith.mulf %42, %40 : vector<128x128xf32>
      %44 = arith.mulf %37, %12 : vector<128x128xf32>
      %45 = arith.addf %43, %44 : vector<128x128xf32>
      %46 = arith.truncf %45 : vector<128x128xf32> to vector<128x128xbf16>
      %c0_20 = arith.constant 0 : index
      %c0_21 = arith.constant 0 : index
      %47 = vector.load %arg8[%c0_20, %c0_21] : memref<128x128xbf16, #tpu.memory_space<vmem>>, vector<128x128xbf16>
      tpu.vector_store %arg8[%c0_20, %c0_21], %46 {strides = array<i32>} : memref<128x128xbf16, #tpu.memory_space<vmem>>, vector<128x128xbf16>,
      %cst_22 = arith.constant 0.000000e+00 : f32
      %48 = vector.broadcast %cst_22 : f32 to vector<128x128xf32>
      %c0_23 = arith.constant 0 : index
      %c0_24 = arith.constant 0 : index
      %49 = vector.load %arg9[%c0_23, %c0_24] : memref<128x128xf32, #tpu.memory_space<vmem>>, vector<128x128xf32>
      tpu.vector_store %arg9[%c0_23, %c0_24], %48 {strides = array<i32>} : memref<128x128xf32, #tpu.memory_space<vmem>>, vector<128x128xf32>,
    } else {
    }
    %c0 = arith.constant 0 : index
    %c0_1 = arith.constant 0 : index
    %3 = vector.load %arg9[%c0, %c0_1] : memref<128x128xf32, #tpu.memory_space<vmem>>, vector<128x128xf32>
    %c0_2 = arith.constant 0 : index
    %c0_3 = arith.constant 0 : index
    %4 = vector.load %arg5[%c0_2, %c0_3] : memref<128x128xbf16, #tpu.memory_space<vmem>>, vector<128x128xbf16>
    %c0_4 = arith.constant 0 : index
    %c0_5 = arith.constant 0 : index
    %5 = vector.load %arg6[%c0_4, %c0_5] : memref<128x128xbf16, #tpu.memory_space<vmem>>, vector<128x128xbf16>
    %cst = arith.constant dense<0.000000e+00> : vector<128x128xf32>
    %6 = tpu.matmul %4, %5, %cst {dimension_numbers = #tpu.dot_dimension_numbers<[1], [0], [0], [1], [0, 0, 1, 1], [], []>} : vector<128x128xbf16>, vector<128x128xbf16>, vector<128x128xf32> -> vector<128x128xf32>
    %7 = arith.addf %3, %6 : vector<128x128xf32>
    %c0_6 = arith.constant 0 : index
    %c0_7 = arith.constant 0 : index
    %8 = vector.load %arg9[%c0_6, %c0_7] : memref<128x128xf32, #tpu.memory_space<vmem>>, vector<128x128xf32>
    tpu.vector_store %arg9[%c0_6, %c0_7], %7 {strides = array<i32>} : memref<128x128xf32, #tpu.memory_space<vmem>>, vector<128x128xf32>,
    %c0_i32_8 = arith.constant 0 : i32
    %9 = arith.cmpi eq, %arg1, %c0_i32_8 : i32
    %10 = arith.extui %9 : i1 to i32
    %c0_i32_9 = arith.constant 0 : i32
    %11 = arith.cmpi ne, %10, %c0_i32_9 : i32
    scf.if %11 {
      %c0_10 = arith.constant 0 : index
      %c0_11 = arith.constant 0 : index
      %12 = vector.load %arg9[%c0_10, %c0_11] : memref<128x128xf32, #tpu.memory_space<vmem>>, vector<128x128xf32>
      %13 = arith.truncf %12 : vector<128x128xf32> to vector<128x128xbf16>
      %c0_12 = arith.constant 0 : index
      %c0_13 = arith.constant 0 : index
      %14 = vector.load %arg8[%c0_12, %c0_13] : memref<128x128xbf16, #tpu.memory_space<vmem>>, vector<128x128xbf16>
      %cst_14 = arith.constant dense<0.000000e+00> : vector<128x128xf32>
      %15 = tpu.matmul %13, %14, %cst_14 {dimension_numbers = #tpu.dot_dimension_numbers<[1], [0], [0], [1], [0, 0, 1, 1], [], []>} : vector<128x128xbf16>, vector<128x128xbf16>, vector<128x128xf32> -> vector<128x128xf32>
      %cst_15 = arith.constant 0.000000e+00 : f32
      %16 = vector.broadcast %cst_15 : f32 to vector<128x128xf32>
      %17 = arith.maximumf %15, %16 : vector<128x128xf32>
      %18 = arith.truncf %17 : vector<128x128xf32> to vector<128x128xbf16>
      %c0_16 = arith.constant 0 : index
      %c0_17 = arith.constant 0 : index
      %19 = vector.load %arg7[%c0_16, %c0_17] : memref<128x128xbf16, #tpu.memory_space<vmem>>, vector<128x128xbf16>
      tpu.vector_store %arg7[%c0_16, %c0_17], %18 {strides = array<i32>} : memref<128x128xbf16, #tpu.memory_space<vmem>>, vector<128x128xbf16>,
    } else {
    }
    return
  }
  func.func @transform_0(%arg0: i32, %arg1: i32) -> (i32, i32) {
    %c0_i32 = arith.constant 0 : i32
    %c0_i32_0 = arith.constant 0 : i32
    %c0_i32_1 = arith.constant 0 : i32
    return %c0_i32, %c0_i32_0 : i32, i32
  }
  func.func @transform_1(%arg0: i32, %arg1: i32) -> (i32, i32) {
    %c0_i32 = arith.constant 0 : i32
    %c0_i32_0 = arith.constant 0 : i32
    %c0_i32_1 = arith.constant 0 : i32
    return %c0_i32, %c0_i32_0 : i32, i32
  }
  func.func @transform_2(%arg0: i32, %arg1: i32) -> (i32, i32) {
    %c0_i32 = arith.constant 0 : i32
    %c0_i32_0 = arith.constant 0 : i32
    %c0_i32_1 = arith.constant 0 : i32
    return %c0_i32, %c0_i32_0 : i32, i32
  }
  func.func @transform_3(%arg0: i32, %arg1: i32) -> (i32, i32) {
    %c0_i32 = arith.constant 0 : i32
    return %arg0, %arg1 : i32, i32
  }
  func.func @transform_4(%arg0: i32, %arg1: i32) -> (i32, i32) {
    %c0_i32 = arith.constant 0 : i32
    %c0_i32_0 = arith.constant 0 : i32
    return %arg1, %c0_i32 : i32, i32
  }
  func.func @transform_5(%arg0: i32, %arg1: i32) -> (i32, i32) {
    %c0_i32 = arith.constant 0 : i32
    %c0_i32_0 = arith.constant 0 : i32
    return %arg0, %c0_i32 : i32, i32
  }
}

module attributes {stable_mosaic.version = 11 : i64} {
  func.func @kernel(%arg0: i32, %arg1: i32, %arg2: memref<128x768xf32, #tpu.memory_space<vmem>>, %arg3: memref<1x768xf32, #tpu.memory_space<vmem>>, %arg4: memref<128x128xf32, #tpu.memory_space<vmem>>, %arg5: memref<128x128xbf16, #tpu.memory_space<vmem>>, %arg6: memref<128x128xbf16, #tpu.memory_space<vmem>>, %arg7: memref<128x128xbf16, #tpu.memory_space<vmem>>, %arg8: memref<1x128xf32, #tpu.memory_space<vmem>>, %arg9: memref<128x128xf32, #tpu.memory_space<vmem>>, %arg10: memref<128x128xbf16, #tpu.memory_space<vmem>>, %arg11: memref<128x128xf32, #tpu.memory_space<vmem>>) attributes {dimension_semantics = [#tpu.dimension_semantics<parallel>, #tpu.dimension_semantics<arbitrary>], iteration_bounds = array<i64: 1, 1>, scalar_prefetch = 0 : i64, scratch_operands = 2 : i64, tpu.core_type = #tpu.core_type<tc>, window_params = [{pipeline_mode = #tpu.pipeline_mode<synchronous>, transform_indices = @transform_0, window_bounds = array<i64: 128, 768>}, {pipeline_mode = #tpu.pipeline_mode<synchronous>, transform_indices = @transform_1, window_bounds = array<i64: 1, 768>}, {pipeline_mode = #tpu.pipeline_mode<synchronous>, transform_indices = @transform_2, window_bounds = array<i64: 128, 128>}, {transform_indices = @transform_3, window_bounds = array<i64: 128, 128>}, {transform_indices = @transform_4, window_bounds = array<i64: 128, 128>}, {pipeline_mode = #tpu.pipeline_mode<synchronous>, transform_indices = @transform_5, window_bounds = array<i64: 128, 128>}, {pipeline_mode = #tpu.pipeline_mode<synchronous>, transform_indices = @transform_6, window_bounds = array<i64: 1, 128>}, {transform_indices = @transform_7, window_bounds = array<i64: 128, 128>}]} {
    %c0_i32 = arith.constant 0 : i32
    %0 = arith.cmpi eq, %arg1, %c0_i32 : i32
    %1 = arith.extui %0 : i1 to i32
    %c0_i32_0 = arith.constant 0 : i32
    %2 = arith.cmpi ne, %1, %c0_i32_0 : i32
    scf.if %2 {
      %c0_10 = arith.constant 0 : index
      %c0_11 = arith.constant 0 : index
      %12 = vector.load %arg4[%c0_10, %c0_11] : memref<128x128xf32, #tpu.memory_space<vmem>>, vector<128x128xf32>
      %c0_12 = arith.constant 0 : index
      %c0_13 = arith.constant 0 : index
      %13 = vector.load %arg2[%c0_12, %c0_13] : memref<128x768xf32, #tpu.memory_space<vmem>>, vector<128x768xf32>
      %cst_14 = arith.constant dense<0.000000e+00> : vector<128x768xf32>
      %14 = tpu.matmul %12, %13, %cst_14 {dimension_numbers = #tpu.dot_dimension_numbers<[1], [0], [0], [1], [0, 0, 1, 1], [], []>} : vector<128x128xf32>, vector<128x768xf32>, vector<128x768xf32> -> vector<128x768xf32>
      %c0_15 = arith.constant 0 : index
      %c0_16 = arith.constant 0 : index
      %15 = vector.load %arg3[%c0_15, %c0_16] : memref<1x768xf32, #tpu.memory_space<vmem>>, vector<1x768xf32>
      %16 = vector.broadcast %15 : vector<1x768xf32> to vector<128x768xf32>
      %17 = arith.addf %14, %16 : vector<128x768xf32>
      %18 = vector.extract_strided_slice %17 {offsets = [0, 0], sizes = [128, 384], strides = [1, 1]} : vector<128x768xf32> to vector<128x384xf32>
      %19 = vector.extract_strided_slice %17 {offsets = [0, 384], sizes = [128, 384], strides = [1, 1]} : vector<128x768xf32> to vector<128x384xf32>
      %20 = vector.extract_strided_slice %18 {offsets = [0, 0], sizes = [128, 128], strides = [1, 1]} : vector<128x384xf32> to vector<128x128xf32>
      %21 = vector.extract_strided_slice %18 {offsets = [0, 128], sizes = [128, 128], strides = [1, 1]} : vector<128x384xf32> to vector<128x128xf32>
      %22 = vector.extract_strided_slice %18 {offsets = [0, 256], sizes = [128, 128], strides = [1, 1]} : vector<128x384xf32> to vector<128x128xf32>
      %23 = vector.extract_strided_slice %19 {offsets = [0, 0], sizes = [128, 128], strides = [1, 1]} : vector<128x384xf32> to vector<128x128xf32>
      %24 = vector.extract_strided_slice %19 {offsets = [0, 128], sizes = [128, 128], strides = [1, 1]} : vector<128x384xf32> to vector<128x128xf32>
      %25 = vector.extract_strided_slice %19 {offsets = [0, 256], sizes = [128, 128], strides = [1, 1]} : vector<128x384xf32> to vector<128x128xf32>
      %26 = arith.addf %20, %23 : vector<128x128xf32>
      %27 = arith.negf %26 : vector<128x128xf32>
      %28 = math.exp %27 : vector<128x128xf32>
      %cst_17 = arith.constant 1.000000e+00 : f32
      %29 = vector.broadcast %cst_17 : f32 to vector<128x128xf32>
      %30 = arith.addf %29, %28 : vector<128x128xf32>
      %31 = arith.divf %29, %30 : vector<128x128xf32>
      %32 = arith.addf %21, %24 : vector<128x128xf32>
      %33 = arith.negf %32 : vector<128x128xf32>
      %34 = math.exp %33 : vector<128x128xf32>
      %cst_18 = arith.constant 1.000000e+00 : f32
      %35 = vector.broadcast %cst_18 : f32 to vector<128x128xf32>
      %36 = arith.addf %35, %34 : vector<128x128xf32>
      %37 = arith.divf %35, %36 : vector<128x128xf32>
      %38 = arith.mulf %31, %25 : vector<128x128xf32>
      %39 = arith.addf %22, %38 : vector<128x128xf32>
      %40 = math.tanh %39 : vector<128x128xf32>
      %cst_19 = arith.constant 1.000000e+00 : f32
      %41 = vector.broadcast %cst_19 : f32 to vector<128x128xf32>
      %42 = arith.subf %41, %37 : vector<128x128xf32>
      %43 = arith.mulf %42, %40 : vector<128x128xf32>
      %44 = arith.mulf %37, %12 : vector<128x128xf32>
      %45 = arith.addf %43, %44 : vector<128x128xf32>
      %46 = arith.truncf %45 : vector<128x128xf32> to vector<128x128xbf16>
      %c0_20 = arith.constant 0 : index
      %c0_21 = arith.constant 0 : index
      %47 = vector.load %arg10[%c0_20, %c0_21] : memref<128x128xbf16, #tpu.memory_space<vmem>>, vector<128x128xbf16>
      tpu.vector_store %arg10[%c0_20, %c0_21], %46 {strides = array<i32>} : memref<128x128xbf16, #tpu.memory_space<vmem>>, vector<128x128xbf16>,
      %cst_22 = arith.constant 0.000000e+00 : f32
      %48 = vector.broadcast %cst_22 : f32 to vector<128x128xf32>
      %c0_23 = arith.constant 0 : index
      %c0_24 = arith.constant 0 : index
      %49 = vector.load %arg11[%c0_23, %c0_24] : memref<128x128xf32, #tpu.memory_space<vmem>>, vector<128x128xf32>
      tpu.vector_store %arg11[%c0_23, %c0_24], %48 {strides = array<i32>} : memref<128x128xf32, #tpu.memory_space<vmem>>, vector<128x128xf32>,
    } else {
    }
    %c0 = arith.constant 0 : index
    %c0_1 = arith.constant 0 : index
    %3 = vector.load %arg11[%c0, %c0_1] : memref<128x128xf32, #tpu.memory_space<vmem>>, vector<128x128xf32>
    %c0_2 = arith.constant 0 : index
    %c0_3 = arith.constant 0 : index
    %4 = vector.load %arg5[%c0_2, %c0_3] : memref<128x128xbf16, #tpu.memory_space<vmem>>, vector<128x128xbf16>
    %c0_4 = arith.constant 0 : index
    %c0_5 = arith.constant 0 : index
    %5 = vector.load %arg6[%c0_4, %c0_5] : memref<128x128xbf16, #tpu.memory_space<vmem>>, vector<128x128xbf16>
    %cst = arith.constant dense<0.000000e+00> : vector<128x128xf32>
    %6 = tpu.matmul %4, %5, %cst {dimension_numbers = #tpu.dot_dimension_numbers<[1], [0], [0], [1], [0, 0, 1, 1], [], []>} : vector<128x128xbf16>, vector<128x128xbf16>, vector<128x128xf32> -> vector<128x128xf32>
    %7 = arith.addf %3, %6 : vector<128x128xf32>
    %c0_6 = arith.constant 0 : index
    %c0_7 = arith.constant 0 : index
    %8 = vector.load %arg11[%c0_6, %c0_7] : memref<128x128xf32, #tpu.memory_space<vmem>>, vector<128x128xf32>
    tpu.vector_store %arg11[%c0_6, %c0_7], %7 {strides = array<i32>} : memref<128x128xf32, #tpu.memory_space<vmem>>, vector<128x128xf32>,
    %c0_i32_8 = arith.constant 0 : i32
    %9 = arith.cmpi eq, %arg1, %c0_i32_8 : i32
    %10 = arith.extui %9 : i1 to i32
    %c0_i32_9 = arith.constant 0 : i32
    %11 = arith.cmpi ne, %10, %c0_i32_9 : i32
    scf.if %11 {
      %c0_10 = arith.constant 0 : index
      %c0_11 = arith.constant 0 : index
      %12 = vector.load %arg11[%c0_10, %c0_11] : memref<128x128xf32, #tpu.memory_space<vmem>>, vector<128x128xf32>
      %13 = arith.truncf %12 : vector<128x128xf32> to vector<128x128xbf16>
      %c0_12 = arith.constant 0 : index
      %c0_13 = arith.constant 0 : index
      %14 = vector.load %arg10[%c0_12, %c0_13] : memref<128x128xbf16, #tpu.memory_space<vmem>>, vector<128x128xbf16>
      %cst_14 = arith.constant dense<0.000000e+00> : vector<128x128xf32>
      %15 = tpu.matmul %13, %14, %cst_14 {dimension_numbers = #tpu.dot_dimension_numbers<[1], [0], [0], [1], [0, 0, 1, 1], [], []>} : vector<128x128xbf16>, vector<128x128xbf16>, vector<128x128xf32> -> vector<128x128xf32>
      %cst_15 = arith.constant 0.000000e+00 : f32
      %16 = vector.broadcast %cst_15 : f32 to vector<128x128xf32>
      %17 = arith.maximumf %15, %16 : vector<128x128xf32>
      %18 = arith.truncf %17 : vector<128x128xf32> to vector<128x128xbf16>
      %c0_16 = arith.constant 0 : index
      %c0_17 = arith.constant 0 : index
      %19 = vector.load %arg7[%c0_16, %c0_17] : memref<128x128xbf16, #tpu.memory_space<vmem>>, vector<128x128xbf16>
      %cst_18 = arith.constant dense<0.000000e+00> : vector<128x128xf32>
      %20 = tpu.matmul %18, %19, %cst_18 {dimension_numbers = #tpu.dot_dimension_numbers<[1], [0], [0], [1], [0, 0, 1, 1], [], []>} : vector<128x128xbf16>, vector<128x128xbf16>, vector<128x128xf32> -> vector<128x128xf32>
      %c0_19 = arith.constant 0 : index
      %c0_20 = arith.constant 0 : index
      %21 = vector.load %arg8[%c0_19, %c0_20] : memref<1x128xf32, #tpu.memory_space<vmem>>, vector<1x128xf32>
      %22 = vector.broadcast %21 : vector<1x128xf32> to vector<128x128xf32>
      %23 = arith.addf %20, %22 : vector<128x128xf32>
      %24 = tpu.iota {dimensions = array<i32: 1>} : vector<128x128xi32>
      %c8_i32 = arith.constant 8 : i32
      %25 = vector.broadcast %c8_i32 : i32 to vector<128x128xi32>
      %26 = arith.cmpi slt, %24, %25 : vector<128x128xi32>
      %cst_21 = arith.constant -1.000000e+30 : f32
      %27 = vector.broadcast %cst_21 : f32 to vector<128x128xf32>
      %28 = arith.select %26, %23, %27 : vector<128x128xi1>, vector<128x128xf32>
      %cst_22 = arith.constant dense<0xFF800000> : vector<128xf32>
      %29 = vector.multi_reduction <maximumf>, %28, %cst_22 [1] : vector<128x128xf32> to vector<128xf32>
      %30 = vector.shape_cast %29 : vector<128xf32> to vector<128x1xf32>
      %31 = vector.broadcast %30 : vector<128x1xf32> to vector<128x128xf32>
      %32 = arith.subf %28, %31 : vector<128x128xf32>
      %33 = math.exp %32 : vector<128x128xf32>
      %cst_23 = arith.constant dense<0.000000e+00> : vector<128xf32>
      %34 = vector.multi_reduction <add>, %33, %cst_23 [1] : vector<128x128xf32> to vector<128xf32>
      %35 = vector.shape_cast %34 : vector<128xf32> to vector<128x1xf32>
      %36 = math.log %35 : vector<128x1xf32>
      %37 = vector.broadcast %36 : vector<128x1xf32> to vector<128x128xf32>
      %38 = arith.subf %32, %37 : vector<128x128xf32>
      %c0_24 = arith.constant 0 : index
      %c0_25 = arith.constant 0 : index
      %39 = vector.load %arg9[%c0_24, %c0_25] : memref<128x128xf32, #tpu.memory_space<vmem>>, vector<128x128xf32>
      tpu.vector_store %arg9[%c0_24, %c0_25], %38 {strides = array<i32>} : memref<128x128xf32, #tpu.memory_space<vmem>>, vector<128x128xf32>,
    } else {
    }
    return
  }
  func.func @transform_0(%arg0: i32, %arg1: i32) -> (i32, i32) {
    %c0_i32 = arith.constant 0 : i32
    %c0_i32_0 = arith.constant 0 : i32
    %c0_i32_1 = arith.constant 0 : i32
    return %c0_i32, %c0_i32_0 : i32, i32
  }
  func.func @transform_1(%arg0: i32, %arg1: i32) -> (i32, i32) {
    %c0_i32 = arith.constant 0 : i32
    %c0_i32_0 = arith.constant 0 : i32
    %c0_i32_1 = arith.constant 0 : i32
    return %c0_i32, %c0_i32_0 : i32, i32
  }
  func.func @transform_2(%arg0: i32, %arg1: i32) -> (i32, i32) {
    %c0_i32 = arith.constant 0 : i32
    %c0_i32_0 = arith.constant 0 : i32
    %c0_i32_1 = arith.constant 0 : i32
    return %c0_i32, %c0_i32_0 : i32, i32
  }
  func.func @transform_3(%arg0: i32, %arg1: i32) -> (i32, i32) {
    %c0_i32 = arith.constant 0 : i32
    return %arg0, %arg1 : i32, i32
  }
  func.func @transform_4(%arg0: i32, %arg1: i32) -> (i32, i32) {
    %c0_i32 = arith.constant 0 : i32
    %c0_i32_0 = arith.constant 0 : i32
    return %arg1, %c0_i32 : i32, i32
  }
  func.func @transform_5(%arg0: i32, %arg1: i32) -> (i32, i32) {
    %c0_i32 = arith.constant 0 : i32
    %c0_i32_0 = arith.constant 0 : i32
    %c0_i32_1 = arith.constant 0 : i32
    return %c0_i32, %c0_i32_0 : i32, i32
  }
  func.func @transform_6(%arg0: i32, %arg1: i32) -> (i32, i32) {
    %c0_i32 = arith.constant 0 : i32
    %c0_i32_0 = arith.constant 0 : i32
    %c0_i32_1 = arith.constant 0 : i32
    return %c0_i32, %c0_i32_0 : i32, i32
  }
  func.func @transform_7(%arg0: i32, %arg1: i32) -> (i32, i32) {
    %c0_i32 = arith.constant 0 : i32
    %c0_i32_0 = arith.constant 0 : i32
    return %arg0, %c0_i32 : i32, i32
  }
}

</mosaic_0001>

<llo_original>
// kernel: recurrent_gcn_forward.3
$region0: #{recurrent_gcn_forward.3}
  #allocation0 [shape = 'u32[]', space=smem, size = 0x4, offset = 0x4, fixed_abs, tag = 'smem constant byte address 0x4 - core index']
  #allocation1 [shape = 'u32[72,128]{1,0:T(1,128)}', space=vmem, size = 0x9000, scoped, tag = 'internal scratch']
  #allocation2 [shape = 'bf16[128,128]{1,0:T(8,128)(2,1)}', space=vmem, size = 0x8000, scoped, tag = 'scratch operand']
  #allocation3 [shape = 'f32[128,128]{1,0:T(8,128)}', space=vmem, size = 0x10000, scoped, tag = 'scratch operand']
  %s0 = inlined_call_operand.hbm [shape: f32[128,768], index: 0, kind: input, shape index: {}]
  %s1 = inlined_call_operand.hbm [shape: f32[1,768], index: 1, kind: input, shape index: {}]
  %s2 = inlined_call_operand.hbm [shape: f32[128,128], index: 2, kind: input, shape index: {}]
  %s3 = inlined_call_operand.hbm [shape: bf16[128,128], index: 3, kind: input, shape index: {}]
  %s4 = inlined_call_operand.vmem [shape: bf16[128,128], index: 4, kind: input, shape index: {}]
  %s5 = inlined_call_operand.hbm [shape: bf16[128,128], index: 5, kind: input, shape index: {}]
  %s6 = inlined_call_operand.vmem [shape: f32[1,128], index: 6, kind: input, shape index: {}]
  %s7 = inlined_call_operand.hbm [shape: f32[128,128], index: 7, kind: output, shape index: {}]
  %s8 = sld [smem:[#allocation0]]
  $region66: #{recurrent_gcn_forward.3} parent=0
    _
  %s10 = ssub.s32 1, %s8
  %s11 = scalar_select 0, %s10, %s8
  $region1: #{recurrent_gcn_forward.3} parent=0
    #allocation4 [shape = 'u8[393216]{0}', space=vmem, size = 0x60000, scoped, tag = 'input window, operand 0, single buffered']
    #allocation5 [shape = 's32[1]{0}', space=sflag, size = 0x4, scoped, tag = 'scoped memory for recurrent_gcn_forward.3']
    #allocation6 [shape = 's32[1]{0}', space=sflag, size = 0x4, scoped, tag = 'scoped memory for recurrent_gcn_forward.3']
    #allocation7 [shape = 'u8[3072]{0}', space=vmem, size = 0xc00, scoped, tag = 'input window, operand 1, single buffered']
    #allocation8 [shape = 's32[1]{0}', space=sflag, size = 0x4, scoped, tag = 'scoped memory for recurrent_gcn_forward.3']
    #allocation9 [shape = 'u8[65536]{0}', space=vmem, size = 0x10000, scoped, tag = 'input window, operand 2, single buffered']
    #allocation10 [shape = 'u8[32768]{0}', space=vmem, size = 0x8000, scoped, tag = 'input window, operand 3, single buffered']
    #allocation11 [shape = 's32[1]{0}', space=sflag, size = 0x4, scoped, tag = 'scoped memory for recurrent_gcn_forward.3']
    #allocation12 [shape = 'u8[32768]{0}', space=vmem, size = 0x8000, scoped, tag = 'input window, operand 5, single buffered']
    #allocation13 [shape = 'u8[65536]{0}', space=vmem, size = 0x10000, scoped, tag = 'output window, operand 0, single buffered']
    %12 = vsyncpa [#allocation5], 0
    %13 = vsyncpa [#allocation8], 0
    %14 = vsyncpa [#allocation11], 0
    %15 = vsyncpa [#allocation6], 0
    // Predicated region
    $region2: #{recurrent_gcn_forward.3} parent=1 // pred_check
      _
    $region3: #{recurrent_gcn_forward.3} parent=1 // pred_check_branch
      %17 = sbr.rel (0) target = $region5
    $region4: #{recurrent_gcn_forward.3} parent=1 // pred_region
      %19 = vsyncadd [#allocation5], 0
      %s20 = sshll.u32 %s0, 4
      %s21 = int_to_ptr.hbm [resolvable:$true] %s20
      %s22 = sshll.u32 [#allocation4], 4
      %s23 = int_to_ptr.vmem [resolvable:$true] %s22
      %28 = dma.hbm_to_vmem [thread:$0]  %s21, 12288, %s23, [#allocation5], 768, 768, 48
    $region5: #{recurrent_gcn_forward.3} parent=1 // pred_fallthru
      _
    // Predicated region
    $region6: #{recurrent_gcn_forward.3} parent=1 // pred_check
      _
    $region7: #{recurrent_gcn_forward.3} parent=1 // pred_check_branch
      %30 = sbr.rel (0) target = $region9
    $region8: #{recurrent_gcn_forward.3} parent=1 // pred_region
      %32 = vsyncadd [#allocation8], 0
      %s34 = sshll.u32 %s1, 4
      %s35 = int_to_ptr.hbm [resolvable:$true] %s34
      %s36 = sshll.u32 [#allocation7], 4
      %s37 = int_to_ptr.vmem [resolvable:$true] %s36
      %39 = dma.hbm_to_vmem [thread:$0]  %s35, 96, %s37, [#allocation8]
    $region9: #{recurrent_gcn_forward.3} parent=1 // pred_fallthru
      _
    // Predicated region
    $region10: #{recurrent_gcn_forward.3} parent=1 // pred_check
      _
    $region11: #{recurrent_gcn_forward.3} parent=1 // pred_check_branch
      %41 = sbr.rel (0) target = $region13
    $region12: #{recurrent_gcn_forward.3} parent=1 // pred_region
      %43 = vsyncadd [#allocation8], 0
      %s44 = sshll.u32 %s2, 4
      %s45 = int_to_ptr.hbm [resolvable:$true] %s44
      %s46 = sshll.u32 [#allocation9], 4
      %s47 = int_to_ptr.vmem [resolvable:$true] %s46
      %52 = dma.hbm_to_vmem [thread:$0]  %s45, 2048, %s47, [#allocation8], 128, 128, 8
    $region13: #{recurrent_gcn_forward.3} parent=1 // pred_fallthru
      _
    // Predicated region
    $region14: #{recurrent_gcn_forward.3} parent=1 // pred_check
      _
    $region15: #{recurrent_gcn_forward.3} parent=1 // pred_check_branch
      %54 = sbr.rel (0) target = $region17
    $region16: #{recurrent_gcn_forward.3} parent=1 // pred_region
      %56 = vsyncadd [#allocation11], 0
      %s57 = sshll.u32 %s3, 4
      %s58 = int_to_ptr.hbm [resolvable:$true] %s57
      %s59 = sshll.u32 [#allocation10], 4
      %s60 = int_to_ptr.vmem [resolvable:$true] %s59
      %65 = dma.hbm_to_vmem [thread:$0]  %s58, 1024, %s60, [#allocation11], 64, 64, 4
    $region17: #{recurrent_gcn_forward.3} parent=1 // pred_fallthru
      _
    // Predicated region
    $region18: #{recurrent_gcn_forward.3} parent=1 // pred_check
      _
    $region19: #{recurrent_gcn_forward.3} parent=1 // pred_check_branch
      %67 = sbr.rel (0) target = $region21
    $region20: #{recurrent_gcn_forward.3} parent=1 // pred_region
      _
    $region21: #{recurrent_gcn_forward.3} parent=1 // pred_fallthru
      _
    // Predicated region
    $region22: #{recurrent_gcn_forward.3} parent=1 // pred_check
      _
    $region23: #{recurrent_gcn_forward.3} parent=1 // pred_check_branch
      %69 = sbr.rel (0) target = $region25
    $region24: #{recurrent_gcn_forward.3} parent=1 // pred_region
      %71 = vsyncadd [#allocation11], 0
      %s72 = sshll.u32 %s5, 4
      %s73 = int_to_ptr.hbm [resolvable:$true] %s72
      %s74 = sshll.u32 [#allocation12], 4
      %s75 = int_to_ptr.vmem [resolvable:$true] %s74
      %80 = dma.hbm_to_vmem [thread:$0]  %s73, 1024, %s75, [#allocation11], 64, 64, 4
    $region25: #{recurrent_gcn_forward.3} parent=1 // pred_fallthru
      _
    // Predicated region
    $region26: #{recurrent_gcn_forward.3} parent=1 // pred_check
      _
    $region27: #{recurrent_gcn_forward.3} parent=1 // pred_check_branch
      %82 = sbr.rel (0) target = $region29
    $region28: #{recurrent_gcn_forward.3} parent=1 // pred_region
      _
    $region29: #{recurrent_gcn_forward.3} parent=1 // pred_fallthru
      _
    // Predicated region
    $region30: #{recurrent_gcn_forward.3} parent=1 // pred_check
      _
    $region31: #{recurrent_gcn_forward.3} parent=1 // pred_check_branch
      %84 = sbr.rel (0) target = $region33
    $region32: #{recurrent_gcn_forward.3} parent=1 // pred_region
      %86 = dma.done [#allocation5], 12288
    $region33: #{recurrent_gcn_forward.3} parent=1 // pred_fallthru
      _
    // Predicated region
    $region34: #{recurrent_gcn_forward.3} parent=1 // pred_check
      _
    $region35: #{recurrent_gcn_forward.3} parent=1 // pred_check_branch
      %88 = sbr.rel (0) target = $region37
    $region36: #{recurrent_gcn_forward.3} parent=1 // pred_region
      %90 = dma.done [#allocation8], 96
    $region37: #{recurrent_gcn_forward.3} parent=1 // pred_fallthru
      _
    // Predicated region
    $region38: #{recurrent_gcn_forward.3} parent=1 // pred_check
      _
    $region39: #{recurrent_gcn_forward.3} parent=1 // pred_check_branch
      %92 = sbr.rel (0) target = $region41
    $region40: #{recurrent_gcn_forward.3} parent=1 // pred_region
      %94 = dma.done [#allocation8], 2048
    $region41: #{recurrent_gcn_forward.3} parent=1 // pred_fallthru
      _
    // Predicated region
    $region42: #{recurrent_gcn_forward.3} parent=1 // pred_check
      _
    $region43: #{recurrent_gcn_forward.3} parent=1 // pred_check_branch
      %96 = sbr.rel (0) target = $region45
    $region44: #{recurrent_gcn_forward.3} parent=1 // pred_region
      %98 = dma.done [#allocation11], 1024
    $region45: #{recurrent_gcn_forward.3} parent=1 // pred_fallthru
      _
    // Predicated region
    $region46: #{recurrent_gcn_forward.3} parent=1 // pred_check
      _
    $region47: #{recurrent_gcn_forward.3} parent=1 // pred_check_branch
      %100 = sbr.rel (0) target = $region49
    $region48: #{recurrent_gcn_forward.3} parent=1 // pred_region
      %102 = dma.done [#allocation11], 1024
    $region49: #{recurrent_gcn_forward.3} parent=1 // pred_fallthru
      _
    %p103 = scmp.eq.s32.totalorder 0, 0
    // Predicated region
    $region50: #{recurrent_gcn_forward.3} parent=1 // pred_check
      %p104 = pneg %p103
    $region51: #{recurrent_gcn_forward.3} parent=1 // pred_check_branch
      %106 = sbr.rel (%p104) target = $region53
    $region52: #{recurrent_gcn_forward.3} parent=1 // pred_region
      %v107 = vld [vmem:[#allocation9] sm:$0xff]
      %v108 = vld [vmem:[#allocation9 + $0x8] sm:$0xff]
      %v109 = vld [vmem:[#allocation9 + $0x10] sm:$0xff]
      %v110 = vld [vmem:[#allocation9 + $0x18] sm:$0xff]
      %v111 = vld [vmem:[#allocation9 + $0x20] sm:$0xff]
      %v112 = vld [vmem:[#allocation9 + $0x28] sm:$0xff]
      %v113 = vld [vmem:[#allocation9 + $0x30] sm:$0xff]
      %v114 = vld [vmem:[#allocation9 + $0x38] sm:$0xff]
      %v115 = vld [vmem:[#allocation9 + $0x40] sm:$0xff]
      %v116 = vld [vmem:[#allocation9 + $0x48] sm:$0xff]
      %v117 = vld [vmem:[#allocation9 + $0x50] sm:$0xff]
      %v118 = vld [vmem:[#allocation9 + $0x58] sm:$0xff]
      %v119 = vld [vmem:[#allocation9 + $0x60] sm:$0xff]
      %v120 = vld [vmem:[#allocation9 + $0x68] sm:$0xff]
      %v121 = vld [vmem:[#allocation9 + $0x70] sm:$0xff]
      %v122 = vld [vmem:[#allocation9 + $0x78] sm:$0xff]
      %v123 = vld [vmem:[#allocation4] sm:$0xff]
      %v124 = vld [vmem:[#allocation4 + $0x8] sm:$0xff]
      %v125 = vld [vmem:[#allocation4 + $0x10] sm:$0xff]
      %v126 = vld [vmem:[#allocation4 + $0x18] sm:$0xff]
      %v127 = vld [vmem:[#allocation4 + $0x20] sm:$0xff]
      %v128 = vld [vmem:[#allocation4 + $0x28] sm:$0xff]
      %v129 = vld [vmem:[#allocation4 + $0x30] sm:$0xff]
      %v130 = vld [vmem:[#allocation4 + $0x38] sm:$0xff]
      %v131 = vld [vmem:[#allocation4 + $0x40] sm:$0xff]
      %v132 = vld [vmem:[#allocation4 + $0x48] sm:$0xff]
      %v133 = vld [vmem:[#allocation4 + $0x50] sm:$0xff]
      %v134 = vld [vmem:[#allocation4 + $0x58] sm:$0xff]
      %v135 = vld [vmem:[#allocation4 + $0x60] sm:$0xff]
      %v136 = vld [vmem:[#allocation4 + $0x68] sm:$0xff]
      %v137 = vld [vmem:[#allocation4 + $0x70] sm:$0xff]
      %v138 = vld [vmem:[#allocation4 + $0x78] sm:$0xff]
      %v139 = vld [vmem:[#allocation4 + $0x80] sm:$0xff]
      %v140 = vld [vmem:[#allocation4 + $0x88] sm:$0xff]
      %v141 = vld [vmem:[#allocation4 + $0x90] sm:$0xff]
      %v142 = vld [vmem:[#allocation4 + $0x98] sm:$0xff]
      %v143 = vld [vmem:[#allocation4 + $0xa0] sm:$0xff]
      %v144 = vld [vmem:[#allocation4 + $0xa8] sm:$0xff]
      %v145 = vld [vmem:[#allocation4 + $0xb0] sm:$0xff]
      %v146 = vld [vmem:[#allocation4 + $0xb8] sm:$0xff]
      %v147 = vld [vmem:[#allocation4 + $0xc0] sm:$0xff]
      %v148 = vld [vmem:[#allocation4 + $0xc8] sm:$0xff]
      %v149 = vld [vmem:[#allocation4 + $0xd0] sm:$0xff]
      %v150 = vld [vmem:[#allocation4 + $0xd8] sm:$0xff]
      %v151 = vld [vmem:[#allocation4 + $0xe0] sm:$0xff]
      %v152 = vld [vmem:[#allocation4 + $0xe8] sm:$0xff]
      %v153 = vld [vmem:[#allocation4 + $0xf0] sm:$0xff]
      %v154 = vld [vmem:[#allocation4 + $0xf8] sm:$0xff]
      %v155 = vld [vmem:[#allocation4 + $0x100] sm:$0xff]
      %v156 = vld [vmem:[#allocation4 + $0x108] sm:$0xff]
      %v157 = vld [vmem:[#allocation4 + $0x110] sm:$0xff]
      %v158 = vld [vmem:[#allocation4 + $0x118] sm:$0xff]
      %v159 = vld [vmem:[#allocation4 + $0x120] sm:$0xff]
      %v160 = vld [vmem:[#allocation4 + $0x128] sm:$0xff]
      %v161 = vld [vmem:[#allocation4 + $0x130] sm:$0xff]
      %v162 = vld [vmem:[#allocation4 + $0x138] sm:$0xff]
      %v163 = vld [vmem:[#allocation4 + $0x140] sm:$0xff]
      %v164 = vld [vmem:[#allocation4 + $0x148] sm:$0xff]
      %v165 = vld [vmem:[#allocation4 + $0x150] sm:$0xff]
      %v166 = vld [vmem:[#allocation4 + $0x158] sm:$0xff]
      %v167 = vld [vmem:[#allocation4 + $0x160] sm:$0xff]
      %v168 = vld [vmem:[#allocation4 + $0x168] sm:$0xff]
      %v169 = vld [vmem:[#allocation4 + $0x170] sm:$0xff]
      %v170 = vld [vmem:[#allocation4 + $0x178] sm:$0xff]
      %v171 = vld [vmem:[#allocation4 + $0x180] sm:$0xff]
      %v172 = vld [vmem:[#allocation4 + $0x188] sm:$0xff]
      %v173 = vld [vmem:[#allocation4 + $0x190] sm:$0xff]
      %v174 = vld [vmem:[#allocation4 + $0x198] sm:$0xff]
      %v175 = vld [vmem:[#allocation4 + $0x1a0] sm:$0xff]
      %v176 = vld [vmem:[#allocation4 + $0x1a8] sm:$0xff]
      %v177 = vld [vmem:[#allocation4 + $0x1b0] sm:$0xff]
      %v178 = vld [vmem:[#allocation4 + $0x1b8] sm:$0xff]
      %v179 = vld [vmem:[#allocation4 + $0x1c0] sm:$0xff]
      %v180 = vld [vmem:[#allocation4 + $0x1c8] sm:$0xff]
      %v181 = vld [vmem:[#allocation4 + $0x1d0] sm:$0xff]
      %v182 = vld [vmem:[#allocation4 + $0x1d8] sm:$0xff]
      %v183 = vld [vmem:[#allocation4 + $0x1e0] sm:$0xff]
      %v184 = vld [vmem:[#allocation4 + $0x1e8] sm:$0xff]
      %v185 = vld [vmem:[#allocation4 + $0x1f0] sm:$0xff]
      %v186 = vld [vmem:[#allocation4 + $0x1f8] sm:$0xff]
      %v187 = vld [vmem:[#allocation4 + $0x200] sm:$0xff]
      %v188 = vld [vmem:[#allocation4 + $0x208] sm:$0xff]
      %v189 = vld [vmem:[#allocation4 + $0x210] sm:$0xff]
      %v190 = vld [vmem:[#allocation4 + $0x218] sm:$0xff]
      %v191 = vld [vmem:[#allocation4 + $0x220] sm:$0xff]
      %v192 = vld [vmem:[#allocation4 + $0x228] sm:$0xff]
      %v193 = vld [vmem:[#allocation4 + $0x230] sm:$0xff]
      %v194 = vld [vmem:[#allocation4 + $0x238] sm:$0xff]
      %v195 = vld [vmem:[#allocation4 + $0x240] sm:$0xff]
      %v196 = vld [vmem:[#allocation4 + $0x248] sm:$0xff]
      %v197 = vld [vmem:[#allocation4 + $0x250] sm:$0xff]
      %v198 = vld [vmem:[#allocation4 + $0x258] sm:$0xff]
      %v199 = vld [vmem:[#allocation4 + $0x260] sm:$0xff]
      %v200 = vld [vmem:[#allocation4 + $0x268] sm:$0xff]
      %v201 = vld [vmem:[#allocation4 + $0x270] sm:$0xff]
      %v202 = vld [vmem:[#allocation4 + $0x278] sm:$0xff]
      %v203 = vld [vmem:[#allocation4 + $0x280] sm:$0xff]
      %v204 = vld [vmem:[#allocation4 + $0x288] sm:$0xff]
      %v205 = vld [vmem:[#allocation4 + $0x290] sm:$0xff]
      %v206 = vld [vmem:[#allocation4 + $0x298] sm:$0xff]
      %v207 = vld [vmem:[#allocation4 + $0x2a0] sm:$0xff]
      %v208 = vld [vmem:[#allocation4 + $0x2a8] sm:$0xff]
      %v209 = vld [vmem:[#allocation4 + $0x2b0] sm:$0xff]
      %v210 = vld [vmem:[#allocation4 + $0x2b8] sm:$0xff]
      %v211 = vld [vmem:[#allocation4 + $0x2c0] sm:$0xff]
      %v212 = vld [vmem:[#allocation4 + $0x2c8] sm:$0xff]
      %v213 = vld [vmem:[#allocation4 + $0x2d0] sm:$0xff]
      %v214 = vld [vmem:[#allocation4 + $0x2d8] sm:$0xff]
      %v215 = vld [vmem:[#allocation4 + $0x2e0] sm:$0xff]
      %v216 = vld [vmem:[#allocation4 + $0x2e8] sm:$0xff]
      %v217 = vld [vmem:[#allocation4 + $0x2f0] sm:$0xff]
      %v218 = vld [vmem:[#allocation4 + $0x2f8] sm:$0xff]
      %v219 = vld [vmem:[#allocation7] sm:$0x3f]
      %v221 = vperm.slane %v219, 0
      %v222 = vperm.slane %v219, 1
      %v223 = vperm.slane %v219, 2
      %v224 = vperm.slane %v219, 3
      %v225 = vperm.slane %v219, 4
      %v226 = vperm.slane %v219, 5
      %233 = vmatpush.msra.mxu0 %v213
      %234 = vmatpush.msra.mxu0 %v207
      %235 = vmatpush.msra.mxu0 %v201
      %236 = vmatpush.msra.mxu0 %v195
      %237 = vmatpush.msra.mxu0 %v189
      %238 = vmatpush.msra.mxu0 %v183
      %239 = vmatpush.msra.mxu0 %v177
      %240 = vmatpush.msra.mxu0 %v171
      %241 = vmatpush.msra.mxu0 %v165
      %242 = vmatpush.msra.mxu0 %v159
      %243 = vmatpush.msra.mxu0 %v153
      %244 = vmatpush.msra.mxu0 %v147
      %245 = vmatpush.msra.mxu0 %v141
      %246 = vmatpush.msra.mxu0 %v135
      %247 = vmatpush.msra.mxu0 %v129
      %248 = vmatpush.msra.mxu0 %v123
      %249 = vmatmul.f32.gmra.mxu0 %v107
      %v250 = vpop.f32.mrf.mxu0
      %v251 = vadd.f32 %v221, %v250
      %252 = vmatmul.f32.gmra.mxu0 %v108
      %v253 = vpop.f32.mrf.mxu0
      %v254 = vadd.f32 %v221, %v253
      %255 = vmatmul.f32.gmra.mxu0 %v109
      %v256 = vpop.f32.mrf.mxu0
      %v257 = vadd.f32 %v221, %v256
      %258 = vmatmul.f32.gmra.mxu0 %v110
      %v259 = vpop.f32.mrf.mxu0
      %v260 = vadd.f32 %v221, %v259
      %261 = vmatmul.f32.gmra.mxu0 %v111
      %v262 = vpop.f32.mrf.mxu0
      %v263 = vadd.f32 %v221, %v262
      %264 = vmatmul.f32.gmra.mxu0 %v112
      %v265 = vpop.f32.mrf.mxu0
      %v266 = vadd.f32 %v221, %v265
      %267 = vmatmul.f32.gmra.mxu0 %v113
      %v268 = vpop.f32.mrf.mxu0
      %v269 = vadd.f32 %v221, %v268
      %270 = vmatmul.f32.gmra.mxu0 %v114
      %v271 = vpop.f32.mrf.mxu0
      %v272 = vadd.f32 %v221, %v271
      %273 = vmatmul.f32.gmra.mxu0 %v115
      %v274 = vpop.f32.mrf.mxu0
      %v275 = vadd.f32 %v221, %v274
      %276 = vmatmul.f32.gmra.mxu0 %v116
      %v277 = vpop.f32.mrf.mxu0
      %v278 = vadd.f32 %v221, %v277
      %279 = vmatmul.f32.gmra.mxu0 %v117
      %v280 = vpop.f32.mrf.mxu0
      %v281 = vadd.f32 %v221, %v280
      %282 = vmatmul.f32.gmra.mxu0 %v118
      %v283 = vpop.f32.mrf.mxu0
      %v284 = vadd.f32 %v221, %v283
      %285 = vmatmul.f32.gmra.mxu0 %v119
      %v286 = vpop.f32.mrf.mxu0
      %v287 = vadd.f32 %v221, %v286
      %288 = vmatmul.f32.gmra.mxu0 %v120
      %v289 = vpop.f32.mrf.mxu0
      %v290 = vadd.f32 %v221, %v289
      %291 = vmatmul.f32.gmra.mxu0 %v121
      %v292 = vpop.f32.mrf.mxu0
      %v293 = vadd.f32 %v221, %v292
      %294 = vmatmul.f32.gmra.mxu0 %v122
      %v295 = vpop.f32.mrf.mxu0
      %v296 = vadd.f32 %v221, %v295
      %297 = vdwg.mxu0
      %298 = vmatpush.msra.mxu0 %v214
      %299 = vmatpush.msra.mxu0 %v208
      %300 = vmatpush.msra.mxu0 %v202
      %301 = vmatpush.msra.mxu0 %v196
      %302 = vmatpush.msra.mxu0 %v190
      %303 = vmatpush.msra.mxu0 %v184
      %304 = vmatpush.msra.mxu0 %v178
      %305 = vmatpush.msra.mxu0 %v172
      %306 = vmatpush.msra.mxu0 %v166
      %307 = vmatpush.msra.mxu0 %v160
      %308 = vmatpush.msra.mxu0 %v154
      %309 = vmatpush.msra.mxu0 %v148
      %310 = vmatpush.msra.mxu0 %v142
      %311 = vmatpush.msra.mxu0 %v136
      %312 = vmatpush.msra.mxu0 %v130
      %313 = vmatpush.msra.mxu0 %v124
      %314 = vmatmul.f32.gmra.mxu0 %v107
      %v315 = vpop.f32.mrf.mxu0
      %v316 = vadd.f32 %v222, %v315
      %317 = vmatmul.f32.gmra.mxu0 %v108
      %v318 = vpop.f32.mrf.mxu0
      %v319 = vadd.f32 %v222, %v318
      %320 = vmatmul.f32.gmra.mxu0 %v109
      %v321 = vpop.f32.mrf.mxu0
      %v322 = vadd.f32 %v222, %v321
      %323 = vmatmul.f32.gmra.mxu0 %v110
      %v324 = vpop.f32.mrf.mxu0
      %v325 = vadd.f32 %v222, %v324
      %326 = vmatmul.f32.gmra.mxu0 %v111
      %v327 = vpop.f32.mrf.mxu0
      %v328 = vadd.f32 %v222, %v327
      %329 = vmatmul.f32.gmra.mxu0 %v112
      %v330 = vpop.f32.mrf.mxu0
      %v331 = vadd.f32 %v222, %v330
      %332 = vmatmul.f32.gmra.mxu0 %v113
      %v333 = vpop.f32.mrf.mxu0
      %v334 = vadd.f32 %v222, %v333
      %335 = vmatmul.f32.gmra.mxu0 %v114
      %v336 = vpop.f32.mrf.mxu0
      %v337 = vadd.f32 %v222, %v336
      %338 = vmatmul.f32.gmra.mxu0 %v115
      %v339 = vpop.f32.mrf.mxu0
      %v340 = vadd.f32 %v222, %v339
      %341 = vmatmul.f32.gmra.mxu0 %v116
      %v342 = vpop.f32.mrf.mxu0
      %v343 = vadd.f32 %v222, %v342
      %344 = vmatmul.f32.gmra.mxu0 %v117
      %v345 = vpop.f32.mrf.mxu0
      %v346 = vadd.f32 %v222, %v345
      %347 = vmatmul.f32.gmra.mxu0 %v118
      %v348 = vpop.f32.mrf.mxu0
      %v349 = vadd.f32 %v222, %v348
      %350 = vmatmul.f32.gmra.mxu0 %v119
      %v351 = vpop.f32.mrf.mxu0
      %v352 = vadd.f32 %v222, %v351
      %353 = vmatmul.f32.gmra.mxu0 %v120
      %v354 = vpop.f32.mrf.mxu0
      %v355 = vadd.f32 %v222, %v354
      %356 = vmatmul.f32.gmra.mxu0 %v121
      %v357 = vpop.f32.mrf.mxu0
      %v358 = vadd.f32 %v222, %v357
      %359 = vmatmul.f32.gmra.mxu0 %v122
      %v360 = vpop.f32.mrf.mxu0
      %v361 = vadd.f32 %v222, %v360
      %362 = vdwg.mxu0
      %363 = vmatpush.msra.mxu0 %v215
      %364 = vmatpush.msra.mxu0 %v209
      %365 = vmatpush.msra.mxu0 %v203
      %366 = vmatpush.msra.mxu0 %v197
      %367 = vmatpush.msra.mxu0 %v191
      %368 = vmatpush.msra.mxu0 %v185
      %369 = vmatpush.msra.mxu0 %v179
      %370 = vmatpush.msra.mxu0 %v173
      %371 = vmatpush.msra.mxu0 %v167
      %372 = vmatpush.msra.mxu0 %v161
      %373 = vmatpush.msra.mxu0 %v155
      %374 = vmatpush.msra.mxu0 %v149
      %375 = vmatpush.msra.mxu0 %v143
      %376 = vmatpush.msra.mxu0 %v137
      %377 = vmatpush.msra.mxu0 %v131
      %378 = vmatpush.msra.mxu0 %v125
      %379 = vmatmul.f32.gmra.mxu0 %v107
      %v380 = vpop.f32.mrf.mxu0
      %v381 = vadd.f32 %v223, %v380
      %382 = vmatmul.f32.gmra.mxu0 %v108
      %v383 = vpop.f32.mrf.mxu0
      %v384 = vadd.f32 %v223, %v383
      %385 = vmatmul.f32.gmra.mxu0 %v109
      %v386 = vpop.f32.mrf.mxu0
      %v387 = vadd.f32 %v223, %v386
      %388 = vmatmul.f32.gmra.mxu0 %v110
      %v389 = vpop.f32.mrf.mxu0
      %v390 = vadd.f32 %v223, %v389
      %391 = vmatmul.f32.gmra.mxu0 %v111
      %v392 = vpop.f32.mrf.mxu0
      %v393 = vadd.f32 %v223, %v392
      %394 = vmatmul.f32.gmra.mxu0 %v112
      %v395 = vpop.f32.mrf.mxu0
      %v396 = vadd.f32 %v223, %v395
      %397 = vmatmul.f32.gmra.mxu0 %v113
      %v398 = vpop.f32.mrf.mxu0
      %v399 = vadd.f32 %v223, %v398
      %400 = vmatmul.f32.gmra.mxu0 %v114
      %v401 = vpop.f32.mrf.mxu0
      %v402 = vadd.f32 %v223, %v401
      %403 = vmatmul.f32.gmra.mxu0 %v115
      %v404 = vpop.f32.mrf.mxu0
      %v405 = vadd.f32 %v223, %v404
      %406 = vmatmul.f32.gmra.mxu0 %v116
      %v407 = vpop.f32.mrf.mxu0
      %v408 = vadd.f32 %v223, %v407
      %409 = vmatmul.f32.gmra.mxu0 %v117
      %v410 = vpop.f32.mrf.mxu0
      %v411 = vadd.f32 %v223, %v410
      %412 = vmatmul.f32.gmra.mxu0 %v118
      %v413 = vpop.f32.mrf.mxu0
      %v414 = vadd.f32 %v223, %v413
      %415 = vmatmul.f32.gmra.mxu0 %v119
      %v416 = vpop.f32.mrf.mxu0
      %v417 = vadd.f32 %v223, %v416
      %418 = vmatmul.f32.gmra.mxu0 %v120
      %v419 = vpop.f32.mrf.mxu0
      %v420 = vadd.f32 %v223, %v419
      %421 = vmatmul.f32.gmra.mxu0 %v121
      %v422 = vpop.f32.mrf.mxu0
      %v423 = vadd.f32 %v223, %v422
      %424 = vmatmul.f32.gmra.mxu0 %v122
      %v425 = vpop.f32.mrf.mxu0
      %v426 = vadd.f32 %v223, %v425
      %427 = vdwg.mxu0
      %428 = vmatpush.msra.mxu0 %v216
      %429 = vmatpush.msra.mxu0 %v210
      %430 = vmatpush.msra.mxu0 %v204
      %431 = vmatpush.msra.mxu0 %v198
      %432 = vmatpush.msra.mxu0 %v192
      %433 = vmatpush.msra.mxu0 %v186
      %434 = vmatpush.msra.mxu0 %v180
      %435 = vmatpush.msra.mxu0 %v174
      %436 = vmatpush.msra.mxu0 %v168
      %437 = vmatpush.msra.mxu0 %v162
      %438 = vmatpush.msra.mxu0 %v156
      %439 = vmatpush.msra.mxu0 %v150
      %440 = vmatpush.msra.mxu0 %v144
      %441 = vmatpush.msra.mxu0 %v138
      %442 = vmatpush.msra.mxu0 %v132
      %443 = vmatpush.msra.mxu0 %v126
      %444 = vmatmul.f32.gmra.mxu0 %v107
      %v445 = vpop.f32.mrf.mxu0
      %v446 = vadd.f32 %v224, %v445
      %447 = vmatmul.f32.gmra.mxu0 %v108
      %v448 = vpop.f32.mrf.mxu0
      %v449 = vadd.f32 %v224, %v448
      %450 = vmatmul.f32.gmra.mxu0 %v109
      %v451 = vpop.f32.mrf.mxu0
      %v452 = vadd.f32 %v224, %v451
      %453 = vmatmul.f32.gmra.mxu0 %v110
      %v454 = vpop.f32.mrf.mxu0
      %v455 = vadd.f32 %v224, %v454
      %456 = vmatmul.f32.gmra.mxu0 %v111
      %v457 = vpop.f32.mrf.mxu0
      %v458 = vadd.f32 %v224, %v457
      %459 = vmatmul.f32.gmra.mxu0 %v112
      %v460 = vpop.f32.mrf.mxu0
      %v461 = vadd.f32 %v224, %v460
      %462 = vmatmul.f32.gmra.mxu0 %v113
      %v463 = vpop.f32.mrf.mxu0
      %v464 = vadd.f32 %v224, %v463
      %465 = vmatmul.f32.gmra.mxu0 %v114
      %v466 = vpop.f32.mrf.mxu0
      %v467 = vadd.f32 %v224, %v466
      %468 = vmatmul.f32.gmra.mxu0 %v115
      %v469 = vpop.f32.mrf.mxu0
      %v470 = vadd.f32 %v224, %v469
      %471 = vmatmul.f32.gmra.mxu0 %v116
      %v472 = vpop.f32.mrf.mxu0
      %v473 = vadd.f32 %v224, %v472
      %474 = vmatmul.f32.gmra.mxu0 %v117
      %v475 = vpop.f32.mrf.mxu0
      %v476 = vadd.f32 %v224, %v475
      %477 = vmatmul.f32.gmra.mxu0 %v118
      %v478 = vpop.f32.mrf.mxu0
      %v479 = vadd.f32 %v224, %v478
      %480 = vmatmul.f32.gmra.mxu0 %v119
      %v481 = vpop.f32.mrf.mxu0
      %v482 = vadd.f32 %v224, %v481
      %483 = vmatmul.f32.gmra.mxu0 %v120
      %v484 = vpop.f32.mrf.mxu0
      %v485 = vadd.f32 %v224, %v484
      %486 = vmatmul.f32.gmra.mxu0 %v121
      %v487 = vpop.f32.mrf.mxu0
      %v488 = vadd.f32 %v224, %v487
      %489 = vmatmul.f32.gmra.mxu0 %v122
      %v490 = vpop.f32.mrf.mxu0
      %v491 = vadd.f32 %v224, %v490
      %492 = vdwg.mxu0
      %493 = vmatpush.msra.mxu0 %v217
      %494 = vmatpush.msra.mxu0 %v211
      %495 = vmatpush.msra.mxu0 %v205
      %496 = vmatpush.msra.mxu0 %v199
      %497 = vmatpush.msra.mxu0 %v193
      %498 = vmatpush.msra.mxu0 %v187
      %499 = vmatpush.msra.mxu0 %v181
      %500 = vmatpush.msra.mxu0 %v175
      %501 = vmatpush.msra.mxu0 %v169
      %502 = vmatpush.msra.mxu0 %v163
      %503 = vmatpush.msra.mxu0 %v157
      %504 = vmatpush.msra.mxu0 %v151
      %505 = vmatpush.msra.mxu0 %v145
      %506 = vmatpush.msra.mxu0 %v139
      %507 = vmatpush.msra.mxu0 %v133
      %508 = vmatpush.msra.mxu0 %v127
      %509 = vmatmul.f32.gmra.mxu0 %v107
      %v510 = vpop.f32.mrf.mxu0
      %v511 = vadd.f32 %v225, %v510
      %512 = vmatmul.f32.gmra.mxu0 %v108
      %v513 = vpop.f32.mrf.mxu0
      %v514 = vadd.f32 %v225, %v513
      %515 = vmatmul.f32.gmra.mxu0 %v109
      %v516 = vpop.f32.mrf.mxu0
      %v517 = vadd.f32 %v225, %v516
      %518 = vmatmul.f32.gmra.mxu0 %v110
      %v519 = vpop.f32.mrf.mxu0
      %v520 = vadd.f32 %v225, %v519
      %521 = vmatmul.f32.gmra.mxu0 %v111
      %v522 = vpop.f32.mrf.mxu0
      %v523 = vadd.f32 %v225, %v522
      %524 = vmatmul.f32.gmra.mxu0 %v112
      %v525 = vpop.f32.mrf.mxu0
      %v526 = vadd.f32 %v225, %v525
      %527 = vmatmul.f32.gmra.mxu0 %v113
      %v528 = vpop.f32.mrf.mxu0
      %v529 = vadd.f32 %v225, %v528
      %530 = vmatmul.f32.gmra.mxu0 %v114
      %v531 = vpop.f32.mrf.mxu0
      %v532 = vadd.f32 %v225, %v531
      %533 = vmatmul.f32.gmra.mxu0 %v115
      %v534 = vpop.f32.mrf.mxu0
      %v535 = vadd.f32 %v225, %v534
      %536 = vmatmul.f32.gmra.mxu0 %v116
      %v537 = vpop.f32.mrf.mxu0
      %v538 = vadd.f32 %v225, %v537
      %539 = vmatmul.f32.gmra.mxu0 %v117
      %v540 = vpop.f32.mrf.mxu0
      %v541 = vadd.f32 %v225, %v540
      %542 = vmatmul.f32.gmra.mxu0 %v118
      %v543 = vpop.f32.mrf.mxu0
      %v544 = vadd.f32 %v225, %v543
      %545 = vmatmul.f32.gmra.mxu0 %v119
      %v546 = vpop.f32.mrf.mxu0
      %v547 = vadd.f32 %v225, %v546
      %548 = vmatmul.f32.gmra.mxu0 %v120
      %v549 = vpop.f32.mrf.mxu0
      %v550 = vadd.f32 %v225, %v549
      %551 = vmatmul.f32.gmra.mxu0 %v121
      %v552 = vpop.f32.mrf.mxu0
      %v553 = vadd.f32 %v225, %v552
      %554 = vmatmul.f32.gmra.mxu0 %v122
      %v555 = vpop.f32.mrf.mxu0
      %v556 = vadd.f32 %v225, %v555
      %557 = vdwg.mxu0
      %558 = vmatpush.msra.mxu0 %v218
      %559 = vmatpush.msra.mxu0 %v212
      %560 = vmatpush.msra.mxu0 %v206
      %561 = vmatpush.msra.mxu0 %v200
      %562 = vmatpush.msra.mxu0 %v194
      %563 = vmatpush.msra.mxu0 %v188
      %564 = vmatpush.msra.mxu0 %v182
      %565 = vmatpush.msra.mxu0 %v176
      %566 = vmatpush.msra.mxu0 %v170
      %567 = vmatpush.msra.mxu0 %v164
      %568 = vmatpush.msra.mxu0 %v158
      %569 = vmatpush.msra.mxu0 %v152
      %570 = vmatpush.msra.mxu0 %v146
      %571 = vmatpush.msra.mxu0 %v140
      %572 = vmatpush.msra.mxu0 %v134
      %573 = vmatpush.msra.mxu0 %v128
      %574 = vmatmul.f32.gmra.mxu0 %v107
      %v575 = vpop.f32.mrf.mxu0
      %v576 = vadd.f32 %v226, %v575
      %577 = vmatmul.f32.gmra.mxu0 %v108
      %v578 = vpop.f32.mrf.mxu0
      %v579 = vadd.f32 %v226, %v578
      %580 = vmatmul.f32.gmra.mxu0 %v109
      %v581 = vpop.f32.mrf.mxu0
      %v582 = vadd.f32 %v226, %v581
      %583 = vmatmul.f32.gmra.mxu0 %v110
      %v584 = vpop.f32.mrf.mxu0
      %v585 = vadd.f32 %v226, %v584
      %586 = vmatmul.f32.gmra.mxu0 %v111
      %v587 = vpop.f32.mrf.mxu0
      %v588 = vadd.f32 %v226, %v587
      %589 = vmatmul.f32.gmra.mxu0 %v112
      %v590 = vpop.f32.mrf.mxu0
      %v591 = vadd.f32 %v226, %v590
      %592 = vmatmul.f32.gmra.mxu0 %v113
      %v593 = vpop.f32.mrf.mxu0
      %v594 = vadd.f32 %v226, %v593
      %595 = vmatmul.f32.gmra.mxu0 %v114
      %v596 = vpop.f32.mrf.mxu0
      %v597 = vadd.f32 %v226, %v596
      %598 = vmatmul.f32.gmra.mxu0 %v115
      %v599 = vpop.f32.mrf.mxu0
      %v600 = vadd.f32 %v226, %v599
      %601 = vmatmul.f32.gmra.mxu0 %v116
      %v602 = vpop.f32.mrf.mxu0
      %v603 = vadd.f32 %v226, %v602
      %604 = vmatmul.f32.gmra.mxu0 %v117
      %v605 = vpop.f32.mrf.mxu0
      %v606 = vadd.f32 %v226, %v605
      %607 = vmatmul.f32.gmra.mxu0 %v118
      %v608 = vpop.f32.mrf.mxu0
      %v609 = vadd.f32 %v226, %v608
      %610 = vmatmul.f32.gmra.mxu0 %v119
      %v611 = vpop.f32.mrf.mxu0
      %v612 = vadd.f32 %v226, %v611
      %613 = vmatmul.f32.gmra.mxu0 %v120
      %v614 = vpop.f32.mrf.mxu0
      %v615 = vadd.f32 %v226, %v614
      %616 = vmatmul.f32.gmra.mxu0 %v121
      %v617 = vpop.f32.mrf.mxu0
      %v618 = vadd.f32 %v226, %v617
      %619 = vmatmul.f32.gmra.mxu0 %v122
      %v620 = vpop.f32.mrf.mxu0
      %v621 = vadd.f32 %v226, %v620
      %622 = vdwg.mxu0
      %v623 = vadd.f32 %v251, %v446
      %v624 = vadd.f32 %v254, %v449
      %v625 = vadd.f32 %v257, %v452
      %v626 = vadd.f32 %v260, %v455
      %v627 = vadd.f32 %v263, %v458
      %v628 = vadd.f32 %v266, %v461
      %v629 = vadd.f32 %v269, %v464
      %v630 = vadd.f32 %v272, %v467
      %v631 = vadd.f32 %v275, %v470
      %v632 = vadd.f32 %v278, %v473
      %v633 = vadd.f32 %v281, %v476
      %v634 = vadd.f32 %v284, %v479
      %v635 = vadd.f32 %v287, %v482
      %v636 = vadd.f32 %v290, %v485
      %v637 = vadd.f32 %v293, %v488
      %v638 = vadd.f32 %v296, %v491
      %v639 = vxor.u32 %v623, 2147483648
      %v640 = vxor.u32 %v624, 2147483648
      %v641 = vxor.u32 %v625, 2147483648
      %v642 = vxor.u32 %v626, 2147483648
      %v643 = vxor.u32 %v627, 2147483648
      %v644 = vxor.u32 %v628, 2147483648
      %v645 = vxor.u32 %v629, 2147483648
      %v646 = vxor.u32 %v630, 2147483648
      %v647 = vxor.u32 %v631, 2147483648
      %v648 = vxor.u32 %v632, 2147483648
      %v649 = vxor.u32 %v633, 2147483648
      %v650 = vxor.u32 %v634, 2147483648
      %v651 = vxor.u32 %v635, 2147483648
      %v652 = vxor.u32 %v636, 2147483648
      %v653 = vxor.u32 %v637, 2147483648
      %v654 = vxor.u32 %v638, 2147483648
      %v655 = vmul.f32 %v639, 1.442695
      %v656 = vpow.pop %v655
      %v657 = vmul.f32 %v640, 1.442695
      %v658 = vpow.pop %v657
      %v659 = vmul.f32 %v641, 1.442695
      %v660 = vpow.pop %v659
      %v661 = vmul.f32 %v642, 1.442695
      %v662 = vpow.pop %v661
      %v663 = vmul.f32 %v643, 1.442695
      %v664 = vpow.pop %v663
      %v665 = vmul.f32 %v644, 1.442695
      %v666 = vpow.pop %v665
      %v667 = vmul.f32 %v645, 1.442695
      %v668 = vpow.pop %v667
      %v669 = vmul.f32 %v646, 1.442695
      %v670 = vpow.pop %v669
      %v671 = vmul.f32 %v647, 1.442695
      %v672 = vpow.pop %v671
      %v673 = vmul.f32 %v648, 1.442695
      %v674 = vpow.pop %v673
      %v675 = vmul.f32 %v649, 1.442695
      %v676 = vpow.pop %v675
      %v677 = vmul.f32 %v650, 1.442695
      %v678 = vpow.pop %v677
      %v679 = vmul.f32 %v651, 1.442695
      %v680 = vpow.pop %v679
      %v681 = vmul.f32 %v652, 1.442695
      %v682 = vpow.pop %v681
      %v683 = vmul.f32 %v653, 1.442695
      %v684 = vpow.pop %v683
      %v685 = vmul.f32 %v654, 1.442695
      %v686 = vpow.pop %v685
      %v687 = vadd.f32 %v656, 1.0
      %v688 = vadd.f32 %v658, 1.0
      %v689 = vadd.f32 %v660, 1.0
      %v690 = vadd.f32 %v662, 1.0
      %v691 = vadd.f32 %v664, 1.0
      %v692 = vadd.f32 %v666, 1.0
      %v693 = vadd.f32 %v668, 1.0
      %v694 = vadd.f32 %v670, 1.0
      %v695 = vadd.f32 %v672, 1.0
      %v696 = vadd.f32 %v674, 1.0
      %v697 = vadd.f32 %v676, 1.0
      %v698 = vadd.f32 %v678, 1.0
      %v699 = vadd.f32 %v680, 1.0
      %v700 = vadd.f32 %v682, 1.0
      %v701 = vadd.f32 %v684, 1.0
      %v702 = vadd.f32 %v686, 1.0
      %v703 = vrcp.pop %v687
      %v704 = vmul.f32 %v687, %v703
      %v705 = vsub.f32 1.0, %v704
      %v706 = vmul.f32 %v703, %v705
      %v707 = vadd.f32 %v703, %v706
      %vm708 = vweird.f32 %v687
      %vm709 = vweird.f32 %v703
      %vm710 = vmor %vm708, %vm709
      %v711 = vsel %vm710, %v703, %v707
      %v712 = vand.u32 2147483647, %v687
      %vm713 = vcmp.eq.f32.partialorder %v712, 8.507059e+37
      %v714 = vand.u32 %v687, 2147483648
      %v715 = vor.u32 1.1754944e-38, %v714
      %v716 = vsel %vm713, %v715, %v711
      %v717 = vmul.f32 1.0, %v716
      %v718 = vrcp.pop %v688
      %v719 = vmul.f32 %v688, %v718
      %v720 = vsub.f32 1.0, %v719
      %v721 = vmul.f32 %v718, %v720
      %v722 = vadd.f32 %v718, %v721
      %vm723 = vweird.f32 %v688
      %vm724 = vweird.f32 %v718
      %vm725 = vmor %vm723, %vm724
      %v726 = vsel %vm725, %v718, %v722
      %v727 = vand.u32 2147483647, %v688
      %vm728 = vcmp.eq.f32.partialorder %v727, 8.507059e+37
      %v729 = vand.u32 %v688, 2147483648
      %v730 = vor.u32 1.1754944e-38, %v729
      %v731 = vsel %vm728, %v730, %v726
      %v732 = vmul.f32 1.0, %v731
      %v733 = vrcp.pop %v689
      %v734 = vmul.f32 %v689, %v733
      %v735 = vsub.f32 1.0, %v734
      %v736 = vmul.f32 %v733, %v735
      %v737 = vadd.f32 %v733, %v736
      %vm738 = vweird.f32 %v689
      %vm739 = vweird.f32 %v733
      %vm740 = vmor %vm738, %vm739
      %v741 = vsel %vm740, %v733, %v737
      %v742 = vand.u32 2147483647, %v689
      %vm743 = vcmp.eq.f32.partialorder %v742, 8.507059e+37
      %v744 = vand.u32 %v689, 2147483648
      %v745 = vor.u32 1.1754944e-38, %v744
      %v746 = vsel %vm743, %v745, %v741
      %v747 = vmul.f32 1.0, %v746
      %v748 = vrcp.pop %v690
      %v749 = vmul.f32 %v690, %v748
      %v750 = vsub.f32 1.0, %v749
      %v751 = vmul.f32 %v748, %v750
      %v752 = vadd.f32 %v748, %v751
      %vm753 = vweird.f32 %v690
      %vm754 = vweird.f32 %v748
      %vm755 = vmor %vm753, %vm754
      %v756 = vsel %vm755, %v748, %v752
      %v757 = vand.u32 2147483647, %v690
      %vm758 = vcmp.eq.f32.partialorder %v757, 8.507059e+37
      %v759 = vand.u32 %v690, 2147483648
      %v760 = vor.u32 1.1754944e-38, %v759
      %v761 = vsel %vm758, %v760, %v756
      %v762 = vmul.f32 1.0, %v761
      %v763 = vrcp.pop %v691
      %v764 = vmul.f32 %v691, %v763
      %v765 = vsub.f32 1.0, %v764
      %v766 = vmul.f32 %v763, %v765
      %v767 = vadd.f32 %v763, %v766
      %vm768 = vweird.f32 %v691
      %vm769 = vweird.f32 %v763
      %vm770 = vmor %vm768, %vm769
      %v771 = vsel %vm770, %v763, %v767
      %v772 = vand.u32 2147483647, %v691
      %vm773 = vcmp.eq.f32.partialorder %v772, 8.507059e+37
      %v774 = vand.u32 %v691, 2147483648
      %v775 = vor.u32 1.1754944e-38, %v774
      %v776 = vsel %vm773, %v775, %v771
      %v777 = vmul.f32 1.0, %v776
      %v778 = vrcp.pop %v692
      %v779 = vmul.f32 %v692, %v778
      %v780 = vsub.f32 1.0, %v779
      %v781 = vmul.f32 %v778, %v780
      %v782 = vadd.f32 %v778, %v781
      %vm783 = vweird.f32 %v692
      %vm784 = vweird.f32 %v778
      %vm785 = vmor %vm783, %vm784
      %v786 = vsel %vm785, %v778, %v782
      %v787 = vand.u32 2147483647, %v692
      %vm788 = vcmp.eq.f32.partialorder %v787, 8.507059e+37
      %v789 = vand.u32 %v692, 2147483648
      %v790 = vor.u32 1.1754944e-38, %v789
      %v791 = vsel %vm788, %v790, %v786
      %v792 = vmul.f32 1.0, %v791
      %v793 = vrcp.pop %v693
      %v794 = vmul.f32 %v693, %v793
      %v795 = vsub.f32 1.0, %v794
      %v796 = vmul.f32 %v793, %v795
      %v797 = vadd.f32 %v793, %v796
      %vm798 = vweird.f32 %v693
      %vm799 = vweird.f32 %v793
      %vm800 = vmor %vm798, %vm799
      %v801 = vsel %vm800, %v793, %v797
      %v802 = vand.u32 2147483647, %v693
      %vm803 = vcmp.eq.f32.partialorder %v802, 8.507059e+37
      %v804 = vand.u32 %v693, 2147483648
      %v805 = vor.u32 1.1754944e-38, %v804
      %v806 = vsel %vm803, %v805, %v801
      %v807 = vmul.f32 1.0, %v806
      %v808 = vrcp.pop %v694
      %v809 = vmul.f32 %v694, %v808
      %v810 = vsub.f32 1.0, %v809
      %v811 = vmul.f32 %v808, %v810
      %v812 = vadd.f32 %v808, %v811
      %vm813 = vweird.f32 %v694
      %vm814 = vweird.f32 %v808
      %vm815 = vmor %vm813, %vm814
      %v816 = vsel %vm815, %v808, %v812
      %v817 = vand.u32 2147483647, %v694
      %vm818 = vcmp.eq.f32.partialorder %v817, 8.507059e+37
      %v819 = vand.u32 %v694, 2147483648
      %v820 = vor.u32 1.1754944e-38, %v819
      %v821 = vsel %vm818, %v820, %v816
      %v822 = vmul.f32 1.0, %v821
      %v823 = vrcp.pop %v695
      %v824 = vmul.f32 %v695, %v823
      %v825 = vsub.f32 1.0, %v824
      %v826 = vmul.f32 %v823, %v825
      %v827 = vadd.f32 %v823, %v826
      %vm828 = vweird.f32 %v695
      %vm829 = vweird.f32 %v823
      %vm830 = vmor %vm828, %vm829
      %v831 = vsel %vm830, %v823, %v827
      %v832 = vand.u32 2147483647, %v695
      %vm833 = vcmp.eq.f32.partialorder %v832, 8.507059e+37
      %v834 = vand.u32 %v695, 2147483648
      %v835 = vor.u32 1.1754944e-38, %v834
      %v836 = vsel %vm833, %v835, %v831
      %v837 = vmul.f32 1.0, %v836
      %v838 = vrcp.pop %v696
      %v839 = vmul.f32 %v696, %v838
      %v840 = vsub.f32 1.0, %v839
      %v841 = vmul.f32 %v838, %v840
      %v842 = vadd.f32 %v838, %v841
      %vm843 = vweird.f32 %v696
      %vm844 = vweird.f32 %v838
      %vm845 = vmor %vm843, %vm844
      %v846 = vsel %vm845, %v838, %v842
      %v847 = vand.u32 2147483647, %v696
      %vm848 = vcmp.eq.f32.partialorder %v847, 8.507059e+37
      %v849 = vand.u32 %v696, 2147483648
      %v850 = vor.u32 1.1754944e-38, %v849
      %v851 = vsel %vm848, %v850, %v846
      %v852 = vmul.f32 1.0, %v851
      %v853 = vrcp.pop %v697
      %v854 = vmul.f32 %v697, %v853
      %v855 = vsub.f32 1.0, %v854
      %v856 = vmul.f32 %v853, %v855
      %v857 = vadd.f32 %v853, %v856
      %vm858 = vweird.f32 %v697
      %vm859 = vweird.f32 %v853
      %vm860 = vmor %vm858, %vm859
      %v861 = vsel %vm860, %v853, %v857
      %v862 = vand.u32 2147483647, %v697
      %vm863 = vcmp.eq.f32.partialorder %v862, 8.507059e+37
      %v864 = vand.u32 %v697, 2147483648
      %v865 = vor.u32 1.1754944e-38, %v864
      %v866 = vsel %vm863, %v865, %v861
      %v867 = vmul.f32 1.0, %v866
      %v868 = vrcp.pop %v698
      %v869 = vmul.f32 %v698, %v868
      %v870 = vsub.f32 1.0, %v869
      %v871 = vmul.f32 %v868, %v870
      %v872 = vadd.f32 %v868, %v871
      %vm873 = vweird.f32 %v698
      %vm874 = vweird.f32 %v868
      %vm875 = vmor %vm873, %vm874
      %v876 = vsel %vm875, %v868, %v872
      %v877 = vand.u32 2147483647, %v698
      %vm878 = vcmp.eq.f32.partialorder %v877, 8.507059e+37
      %v879 = vand.u32 %v698, 2147483648
      %v880 = vor.u32 1.1754944e-38, %v879
      %v881 = vsel %vm878, %v880, %v876
      %v882 = vmul.f32 1.0, %v881
      %v883 = vrcp.pop %v699
      %v884 = vmul.f32 %v699, %v883
      %v885 = vsub.f32 1.0, %v884
      %v886 = vmul.f32 %v883, %v885
      %v887 = vadd.f32 %v883, %v886
      %vm888 = vweird.f32 %v699
      %vm889 = vweird.f32 %v883
      %vm890 = vmor %vm888, %vm889
      %v891 = vsel %vm890, %v883, %v887
      %v892 = vand.u32 2147483647, %v699
      %vm893 = vcmp.eq.f32.partialorder %v892, 8.507059e+37
      %v894 = vand.u32 %v699, 2147483648
      %v895 = vor.u32 1.1754944e-38, %v894
      %v896 = vsel %vm893, %v895, %v891
      %v897 = vmul.f32 1.0, %v896
      %v898 = vrcp.pop %v700
      %v899 = vmul.f32 %v700, %v898
      %v900 = vsub.f32 1.0, %v899
      %v901 = vmul.f32 %v898, %v900
      %v902 = vadd.f32 %v898, %v901
      %vm903 = vweird.f32 %v700
      %vm904 = vweird.f32 %v898
      %vm905 = vmor %vm903, %vm904
      %v906 = vsel %vm905, %v898, %v902
      %v907 = vand.u32 2147483647, %v700
      %vm908 = vcmp.eq.f32.partialorder %v907, 8.507059e+37
      %v909 = vand.u32 %v700, 2147483648
      %v910 = vor.u32 1.1754944e-38, %v909
      %v911 = vsel %vm908, %v910, %v906
      %v912 = vmul.f32 1.0, %v911
      %v913 = vrcp.pop %v701
      %v914 = vmul.f32 %v701, %v913
      %v915 = vsub.f32 1.0, %v914
      %v916 = vmul.f32 %v913, %v915
      %v917 = vadd.f32 %v913, %v916
      %vm918 = vweird.f32 %v701
      %vm919 = vweird.f32 %v913
      %vm920 = vmor %vm918, %vm919
      %v921 = vsel %vm920, %v913, %v917
      %v922 = vand.u32 2147483647, %v701
      %vm923 = vcmp.eq.f32.partialorder %v922, 8.507059e+37
      %v924 = vand.u32 %v701, 2147483648
      %v925 = vor.u32 1.1754944e-38, %v924
      %v926 = vsel %vm923, %v925, %v921
      %v927 = vmul.f32 1.0, %v926
      %v928 = vrcp.pop %v702
      %v929 = vmul.f32 %v702, %v928
      %v930 = vsub.f32 1.0, %v929
      %v931 = vmul.f32 %v928, %v930
      %v932 = vadd.f32 %v928, %v931
      %vm933 = vweird.f32 %v702
      %vm934 = vweird.f32 %v928
      %vm935 = vmor %vm933, %vm934
      %v936 = vsel %vm935, %v928, %v932
      %v937 = vand.u32 2147483647, %v702
      %vm938 = vcmp.eq.f32.partialorder %v937, 8.507059e+37
      %v939 = vand.u32 %v702, 2147483648
      %v940 = vor.u32 1.1754944e-38, %v939
      %v941 = vsel %vm938, %v940, %v936
      %v942 = vmul.f32 1.0, %v941
      %v943 = vadd.f32 %v316, %v511
      %v944 = vadd.f32 %v319, %v514
      %v945 = vadd.f32 %v322, %v517
      %v946 = vadd.f32 %v325, %v520
      %v947 = vadd.f32 %v328, %v523
      %v948 = vadd.f32 %v331, %v526
      %v949 = vadd.f32 %v334, %v529
      %v950 = vadd.f32 %v337, %v532
      %v951 = vadd.f32 %v340, %v535
      %v952 = vadd.f32 %v343, %v538
      %v953 = vadd.f32 %v346, %v541
      %v954 = vadd.f32 %v349, %v544
      %v955 = vadd.f32 %v352, %v547
      %v956 = vadd.f32 %v355, %v550
      %v957 = vadd.f32 %v358, %v553
      %v958 = vadd.f32 %v361, %v556
      %v959 = vxor.u32 %v943, 2147483648
      %v960 = vxor.u32 %v944, 2147483648
      %v961 = vxor.u32 %v945, 2147483648
      %v962 = vxor.u32 %v946, 2147483648
      %v963 = vxor.u32 %v947, 2147483648
      %v964 = vxor.u32 %v948, 2147483648
      %v965 = vxor.u32 %v949, 2147483648
      %v966 = vxor.u32 %v950, 2147483648
      %v967 = vxor.u32 %v951, 2147483648
      %v968 = vxor.u32 %v952, 2147483648
      %v969 = vxor.u32 %v953, 2147483648
      %v970 = vxor.u32 %v954, 2147483648
      %v971 = vxor.u32 %v955, 2147483648
      %v972 = vxor.u32 %v956, 2147483648
      %v973 = vxor.u32 %v957, 2147483648
      %v974 = vxor.u32 %v958, 2147483648
      %v975 = vmul.f32 %v959, 1.442695
      %v976 = vpow.pop %v975
      %v977 = vmul.f32 %v960, 1.442695
      %v978 = vpow.pop %v977
      %v979 = vmul.f32 %v961, 1.442695
      %v980 = vpow.pop %v979
      %v981 = vmul.f32 %v962, 1.442695
      %v982 = vpow.pop %v981
      %v983 = vmul.f32 %v963, 1.442695
      %v984 = vpow.pop %v983
      %v985 = vmul.f32 %v964, 1.442695
      %v986 = vpow.pop %v985
      %v987 = vmul.f32 %v965, 1.442695
      %v988 = vpow.pop %v987
      %v989 = vmul.f32 %v966, 1.442695
      %v990 = vpow.pop %v989
      %v991 = vmul.f32 %v967, 1.442695
      %v992 = vpow.pop %v991
      %v993 = vmul.f32 %v968, 1.442695
      %v994 = vpow.pop %v993
      %v995 = vmul.f32 %v969, 1.442695
      %v996 = vpow.pop %v995
      %v997 = vmul.f32 %v970, 1.442695
      %v998 = vpow.pop %v997
      %v999 = vmul.f32 %v971, 1.442695
      %v1000 = vpow.pop %v999
      %v1001 = vmul.f32 %v972, 1.442695
      %v1002 = vpow.pop %v1001
      %v1003 = vmul.f32 %v973, 1.442695
      %v1004 = vpow.pop %v1003
      %v1005 = vmul.f32 %v974, 1.442695
      %v1006 = vpow.pop %v1005
      %v1007 = vadd.f32 %v976, 1.0
      %v1008 = vadd.f32 %v978, 1.0
      %v1009 = vadd.f32 %v980, 1.0
      %v1010 = vadd.f32 %v982, 1.0
      %v1011 = vadd.f32 %v984, 1.0
      %v1012 = vadd.f32 %v986, 1.0
      %v1013 = vadd.f32 %v988, 1.0
      %v1014 = vadd.f32 %v990, 1.0
      %v1015 = vadd.f32 %v992, 1.0
      %v1016 = vadd.f32 %v994, 1.0
      %v1017 = vadd.f32 %v996, 1.0
      %v1018 = vadd.f32 %v998, 1.0
      %v1019 = vadd.f32 %v1000, 1.0
      %v1020 = vadd.f32 %v1002, 1.0
      %v1021 = vadd.f32 %v1004, 1.0
      %v1022 = vadd.f32 %v1006, 1.0
      %v1023 = vrcp.pop %v1007
      %v1024 = vmul.f32 %v1007, %v1023
      %v1025 = vsub.f32 1.0, %v1024
      %v1026 = vmul.f32 %v1023, %v1025
      %v1027 = vadd.f32 %v1023, %v1026
      %vm1028 = vweird.f32 %v1007
      %vm1029 = vweird.f32 %v1023
      %vm1030 = vmor %vm1028, %vm1029
      %v1031 = vsel %vm1030, %v1023, %v1027
      %v1032 = vand.u32 2147483647, %v1007
      %vm1033 = vcmp.eq.f32.partialorder %v1032, 8.507059e+37
      %v1034 = vand.u32 %v1007, 2147483648
      %v1035 = vor.u32 1.1754944e-38, %v1034
      %v1036 = vsel %vm1033, %v1035, %v1031
      %v1037 = vmul.f32 1.0, %v1036
      %v1038 = vrcp.pop %v1008
      %v1039 = vmul.f32 %v1008, %v1038
      %v1040 = vsub.f32 1.0, %v1039
      %v1041 = vmul.f32 %v1038, %v1040
      %v1042 = vadd.f32 %v1038, %v1041
      %vm1043 = vweird.f32 %v1008
      %vm1044 = vweird.f32 %v1038
      %vm1045 = vmor %vm1043, %vm1044
      %v1046 = vsel %vm1045, %v1038, %v1042
      %v1047 = vand.u32 2147483647, %v1008
      %vm1048 = vcmp.eq.f32.partialorder %v1047, 8.507059e+37
      %v1049 = vand.u32 %v1008, 2147483648
      %v1050 = vor.u32 1.1754944e-38, %v1049
      %v1051 = vsel %vm1048, %v1050, %v1046
      %v1052 = vmul.f32 1.0, %v1051
      %v1053 = vrcp.pop %v1009
      %v1054 = vmul.f32 %v1009, %v1053
      %v1055 = vsub.f32 1.0, %v1054
      %v1056 = vmul.f32 %v1053, %v1055
      %v1057 = vadd.f32 %v1053, %v1056
      %vm1058 = vweird.f32 %v1009
      %vm1059 = vweird.f32 %v1053
      %vm1060 = vmor %vm1058, %vm1059
      %v1061 = vsel %vm1060, %v1053, %v1057
      %v1062 = vand.u32 2147483647, %v1009
      %vm1063 = vcmp.eq.f32.partialorder %v1062, 8.507059e+37
      %v1064 = vand.u32 %v1009, 2147483648
      %v1065 = vor.u32 1.1754944e-38, %v1064
      %v1066 = vsel %vm1063, %v1065, %v1061
      %v1067 = vmul.f32 1.0, %v1066
      %v1068 = vrcp.pop %v1010
      %v1069 = vmul.f32 %v1010, %v1068
      %v1070 = vsub.f32 1.0, %v1069
      %v1071 = vmul.f32 %v1068, %v1070
      %v1072 = vadd.f32 %v1068, %v1071
      %vm1073 = vweird.f32 %v1010
      %vm1074 = vweird.f32 %v1068
      %vm1075 = vmor %vm1073, %vm1074
      %v1076 = vsel %vm1075, %v1068, %v1072
      %v1077 = vand.u32 2147483647, %v1010
      %vm1078 = vcmp.eq.f32.partialorder %v1077, 8.507059e+37
      %v1079 = vand.u32 %v1010, 2147483648
      %v1080 = vor.u32 1.1754944e-38, %v1079
      %v1081 = vsel %vm1078, %v1080, %v1076
      %v1082 = vmul.f32 1.0, %v1081
      %v1083 = vrcp.pop %v1011
      %v1084 = vmul.f32 %v1011, %v1083
      %v1085 = vsub.f32 1.0, %v1084
      %v1086 = vmul.f32 %v1083, %v1085
      %v1087 = vadd.f32 %v1083, %v1086
      %vm1088 = vweird.f32 %v1011
      %vm1089 = vweird.f32 %v1083
      %vm1090 = vmor %vm1088, %vm1089
      %v1091 = vsel %vm1090, %v1083, %v1087
      %v1092 = vand.u32 2147483647, %v1011
      %vm1093 = vcmp.eq.f32.partialorder %v1092, 8.507059e+37
      %v1094 = vand.u32 %v1011, 2147483648
      %v1095 = vor.u32 1.1754944e-38, %v1094
      %v1096 = vsel %vm1093, %v1095, %v1091
      %v1097 = vmul.f32 1.0, %v1096
      %v1098 = vrcp.pop %v1012
      %v1099 = vmul.f32 %v1012, %v1098
      %v1100 = vsub.f32 1.0, %v1099
      %v1101 = vmul.f32 %v1098, %v1100
      %v1102 = vadd.f32 %v1098, %v1101
      %vm1103 = vweird.f32 %v1012
      %vm1104 = vweird.f32 %v1098
      %vm1105 = vmor %vm1103, %vm1104
      %v1106 = vsel %vm1105, %v1098, %v1102
      %v1107 = vand.u32 2147483647, %v1012
      %vm1108 = vcmp.eq.f32.partialorder %v1107, 8.507059e+37
      %v1109 = vand.u32 %v1012, 2147483648
      %v1110 = vor.u32 1.1754944e-38, %v1109
      %v1111 = vsel %vm1108, %v1110, %v1106
      %v1112 = vmul.f32 1.0, %v1111
      %v1113 = vrcp.pop %v1013
      %v1114 = vmul.f32 %v1013, %v1113
      %v1115 = vsub.f32 1.0, %v1114
      %v1116 = vmul.f32 %v1113, %v1115
      %v1117 = vadd.f32 %v1113, %v1116
      %vm1118 = vweird.f32 %v1013
      %vm1119 = vweird.f32 %v1113
      %vm1120 = vmor %vm1118, %vm1119
      %v1121 = vsel %vm1120, %v1113, %v1117
      %v1122 = vand.u32 2147483647, %v1013
      %vm1123 = vcmp.eq.f32.partialorder %v1122, 8.507059e+37
      %v1124 = vand.u32 %v1013, 2147483648
      %v1125 = vor.u32 1.1754944e-38, %v1124
      %v1126 = vsel %vm1123, %v1125, %v1121
      %v1127 = vmul.f32 1.0, %v1126
      %v1128 = vrcp.pop %v1014
      %v1129 = vmul.f32 %v1014, %v1128
      %v1130 = vsub.f32 1.0, %v1129
      %v1131 = vmul.f32 %v1128, %v1130
      %v1132 = vadd.f32 %v1128, %v1131
      %vm1133 = vweird.f32 %v1014
      %vm1134 = vweird.f32 %v1128
      %vm1135 = vmor %vm1133, %vm1134
      %v1136 = vsel %vm1135, %v1128, %v1132
      %v1137 = vand.u32 2147483647, %v1014
      %vm1138 = vcmp.eq.f32.partialorder %v1137, 8.507059e+37
      %v1139 = vand.u32 %v1014, 2147483648
      %v1140 = vor.u32 1.1754944e-38, %v1139
      %v1141 = vsel %vm1138, %v1140, %v1136
      %v1142 = vmul.f32 1.0, %v1141
      %v1143 = vrcp.pop %v1015
      %v1144 = vmul.f32 %v1015, %v1143
      %v1145 = vsub.f32 1.0, %v1144
      %v1146 = vmul.f32 %v1143, %v1145
      %v1147 = vadd.f32 %v1143, %v1146
      %vm1148 = vweird.f32 %v1015
      %vm1149 = vweird.f32 %v1143
      %vm1150 = vmor %vm1148, %vm1149
      %v1151 = vsel %vm1150, %v1143, %v1147
      %v1152 = vand.u32 2147483647, %v1015
      %vm1153 = vcmp.eq.f32.partialorder %v1152, 8.507059e+37
      %v1154 = vand.u32 %v1015, 2147483648
      %v1155 = vor.u32 1.1754944e-38, %v1154
      %v1156 = vsel %vm1153, %v1155, %v1151
      %v1157 = vmul.f32 1.0, %v1156
      %v1158 = vrcp.pop %v1016
      %v1159 = vmul.f32 %v1016, %v1158
      %v1160 = vsub.f32 1.0, %v1159
      %v1161 = vmul.f32 %v1158, %v1160
      %v1162 = vadd.f32 %v1158, %v1161
      %vm1163 = vweird.f32 %v1016
      %vm1164 = vweird.f32 %v1158
      %vm1165 = vmor %vm1163, %vm1164
      %v1166 = vsel %vm1165, %v1158, %v1162
      %v1167 = vand.u32 2147483647, %v1016
      %vm1168 = vcmp.eq.f32.partialorder %v1167, 8.507059e+37
      %v1169 = vand.u32 %v1016, 2147483648
      %v1170 = vor.u32 1.1754944e-38, %v1169
      %v1171 = vsel %vm1168, %v1170, %v1166
      %v1172 = vmul.f32 1.0, %v1171
      %v1173 = vrcp.pop %v1017
      %v1174 = vmul.f32 %v1017, %v1173
      %v1175 = vsub.f32 1.0, %v1174
      %v1176 = vmul.f32 %v1173, %v1175
      %v1177 = vadd.f32 %v1173, %v1176
      %vm1178 = vweird.f32 %v1017
      %vm1179 = vweird.f32 %v1173
      %vm1180 = vmor %vm1178, %vm1179
      %v1181 = vsel %vm1180, %v1173, %v1177
      %v1182 = vand.u32 2147483647, %v1017
      %vm1183 = vcmp.eq.f32.partialorder %v1182, 8.507059e+37
      %v1184 = vand.u32 %v1017, 2147483648
      %v1185 = vor.u32 1.1754944e-38, %v1184
      %v1186 = vsel %vm1183, %v1185, %v1181
      %v1187 = vmul.f32 1.0, %v1186
      %v1188 = vrcp.pop %v1018
      %v1189 = vmul.f32 %v1018, %v1188
      %v1190 = vsub.f32 1.0, %v1189
      %v1191 = vmul.f32 %v1188, %v1190
      %v1192 = vadd.f32 %v1188, %v1191
      %vm1193 = vweird.f32 %v1018
      %vm1194 = vweird.f32 %v1188
      %vm1195 = vmor %vm1193, %vm1194
      %v1196 = vsel %vm1195, %v1188, %v1192
      %v1197 = vand.u32 2147483647, %v1018
      %vm1198 = vcmp.eq.f32.partialorder %v1197, 8.507059e+37
      %v1199 = vand.u32 %v1018, 2147483648
      %v1200 = vor.u32 1.1754944e-38, %v1199
      %v1201 = vsel %vm1198, %v1200, %v1196
      %v1202 = vmul.f32 1.0, %v1201
      %v1203 = vrcp.pop %v1019
      %v1204 = vmul.f32 %v1019, %v1203
      %v1205 = vsub.f32 1.0, %v1204
      %v1206 = vmul.f32 %v1203, %v1205
      %v1207 = vadd.f32 %v1203, %v1206
      %vm1208 = vweird.f32 %v1019
      %vm1209 = vweird.f32 %v1203
      %vm1210 = vmor %vm1208, %vm1209
      %v1211 = vsel %vm1210, %v1203, %v1207
      %v1212 = vand.u32 2147483647, %v1019
      %vm1213 = vcmp.eq.f32.partialorder %v1212, 8.507059e+37
      %v1214 = vand.u32 %v1019, 2147483648
      %v1215 = vor.u32 1.1754944e-38, %v1214
      %v1216 = vsel %vm1213, %v1215, %v1211
      %v1217 = vmul.f32 1.0, %v1216
      %v1218 = vrcp.pop %v1020
      %v1219 = vmul.f32 %v1020, %v1218
      %v1220 = vsub.f32 1.0, %v1219
      %v1221 = vmul.f32 %v1218, %v1220
      %v1222 = vadd.f32 %v1218, %v1221
      %vm1223 = vweird.f32 %v1020
      %vm1224 = vweird.f32 %v1218
      %vm1225 = vmor %vm1223, %vm1224
      %v1226 = vsel %vm1225, %v1218, %v1222
      %v1227 = vand.u32 2147483647, %v1020
      %vm1228 = vcmp.eq.f32.partialorder %v1227, 8.507059e+37
      %v1229 = vand.u32 %v1020, 2147483648
      %v1230 = vor.u32 1.1754944e-38, %v1229
      %v1231 = vsel %vm1228, %v1230, %v1226
      %v1232 = vmul.f32 1.0, %v1231
      %v1233 = vrcp.pop %v1021
      %v1234 = vmul.f32 %v1021, %v1233
      %v1235 = vsub.f32 1.0, %v1234
      %v1236 = vmul.f32 %v1233, %v1235
      %v1237 = vadd.f32 %v1233, %v1236
      %vm1238 = vweird.f32 %v1021
      %vm1239 = vweird.f32 %v1233
      %vm1240 = vmor %vm1238, %vm1239
      %v1241 = vsel %vm1240, %v1233, %v1237
      %v1242 = vand.u32 2147483647, %v1021
      %vm1243 = vcmp.eq.f32.partialorder %v1242, 8.507059e+37
      %v1244 = vand.u32 %v1021, 2147483648
      %v1245 = vor.u32 1.1754944e-38, %v1244
      %v1246 = vsel %vm1243, %v1245, %v1241
      %v1247 = vmul.f32 1.0, %v1246
      %v1248 = vrcp.pop %v1022
      %v1249 = vmul.f32 %v1022, %v1248
      %v1250 = vsub.f32 1.0, %v1249
      %v1251 = vmul.f32 %v1248, %v1250
      %v1252 = vadd.f32 %v1248, %v1251
      %vm1253 = vweird.f32 %v1022
      %vm1254 = vweird.f32 %v1248
      %vm1255 = vmor %vm1253, %vm1254
      %v1256 = vsel %vm1255, %v1248, %v1252
      %v1257 = vand.u32 2147483647, %v1022
      %vm1258 = vcmp.eq.f32.partialorder %v1257, 8.507059e+37
      %v1259 = vand.u32 %v1022, 2147483648
      %v1260 = vor.u32 1.1754944e-38, %v1259
      %v1261 = vsel %vm1258, %v1260, %v1256
      %v1262 = vmul.f32 1.0, %v1261
      %v1263 = vmul.f32 %v717, %v576
      %v1264 = vmul.f32 %v732, %v579
      %v1265 = vmul.f32 %v747, %v582
      %v1266 = vmul.f32 %v762, %v585
      %v1267 = vmul.f32 %v777, %v588
      %v1268 = vmul.f32 %v792, %v591
      %v1269 = vmul.f32 %v807, %v594
      %v1270 = vmul.f32 %v822, %v597
      %v1271 = vmul.f32 %v837, %v600
      %v1272 = vmul.f32 %v852, %v603
      %v1273 = vmul.f32 %v867, %v606
      %v1274 = vmul.f32 %v882, %v609
      %v1275 = vmul.f32 %v897, %v612
      %v1276 = vmul.f32 %v912, %v615
      %v1277 = vmul.f32 %v927, %v618
      %v1278 = vmul.f32 %v942, %v621
      %v1279 = vadd.f32 %v381, %v1263
      %v1280 = vadd.f32 %v384, %v1264
      %v1281 = vadd.f32 %v387, %v1265
      %v1282 = vadd.f32 %v390, %v1266
      %v1283 = vadd.f32 %v393, %v1267
      %v1284 = vadd.f32 %v396, %v1268
      %v1285 = vadd.f32 %v399, %v1269
      %v1286 = vadd.f32 %v402, %v1270
      %v1287 = vadd.f32 %v405, %v1271
      %v1288 = vadd.f32 %v408, %v1272
      %v1289 = vadd.f32 %v411, %v1273
      %v1290 = vadd.f32 %v414, %v1274
      %v1291 = vadd.f32 %v417, %v1275
      %v1292 = vadd.f32 %v420, %v1276
      %v1293 = vadd.f32 %v423, %v1277
      %v1294 = vadd.f32 %v426, %v1278
      %v1295 = vtanh.pop %v1279
      %v1296 = vtanh.pop %v1280
      %v1297 = vtanh.pop %v1281
      %v1298 = vtanh.pop %v1282
      %v1299 = vtanh.pop %v1283
      %v1300 = vtanh.pop %v1284
      %v1301 = vtanh.pop %v1285
      %v1302 = vtanh.pop %v1286
      %v1303 = vtanh.pop %v1287
      %v1304 = vtanh.pop %v1288
      %v1305 = vtanh.pop %v1289
      %v1306 = vtanh.pop %v1290
      %v1307 = vtanh.pop %v1291
      %v1308 = vtanh.pop %v1292
      %v1309 = vtanh.pop %v1293
      %v1310 = vtanh.pop %v1294
      %v1311 = vsub.f32 1.0, %v1037
      %v1312 = vsub.f32 1.0, %v1052
      %v1313 = vsub.f32 1.0, %v1067
      %v1314 = vsub.f32 1.0, %v1082
      %v1315 = vsub.f32 1.0, %v1097
      %v1316 = vsub.f32 1.0, %v1112
      %v1317 = vsub.f32 1.0, %v1127
      %v1318 = vsub.f32 1.0, %v1142
      %v1319 = vsub.f32 1.0, %v1157
      %v1320 = vsub.f32 1.0, %v1172
      %v1321 = vsub.f32 1.0, %v1187
      %v1322 = vsub.f32 1.0, %v1202
      %v1323 = vsub.f32 1.0, %v1217
      %v1324 = vsub.f32 1.0, %v1232
      %v1325 = vsub.f32 1.0, %v1247
      %v1326 = vsub.f32 1.0, %v1262
      %v1327 = vmul.f32 %v1311, %v1295
      %v1328 = vmul.f32 %v1312, %v1296
      %v1329 = vmul.f32 %v1313, %v1297
      %v1330 = vmul.f32 %v1314, %v1298
      %v1331 = vmul.f32 %v1315, %v1299
      %v1332 = vmul.f32 %v1316, %v1300
      %v1333 = vmul.f32 %v1317, %v1301
      %v1334 = vmul.f32 %v1318, %v1302
      %v1335 = vmul.f32 %v1319, %v1303
      %v1336 = vmul.f32 %v1320, %v1304
      %v1337 = vmul.f32 %v1321, %v1305
      %v1338 = vmul.f32 %v1322, %v1306
      %v1339 = vmul.f32 %v1323, %v1307
      %v1340 = vmul.f32 %v1324, %v1308
      %v1341 = vmul.f32 %v1325, %v1309
      %v1342 = vmul.f32 %v1326, %v1310
      %v1343 = vmul.f32 %v1037, %v107
      %v1344 = vmul.f32 %v1052, %v108
      %v1345 = vmul.f32 %v1067, %v109
      %v1346 = vmul.f32 %v1082, %v110
      %v1347 = vmul.f32 %v1097, %v111
      %v1348 = vmul.f32 %v1112, %v112
      %v1349 = vmul.f32 %v1127, %v113
      %v1350 = vmul.f32 %v1142, %v114
      %v1351 = vmul.f32 %v1157, %v115
      %v1352 = vmul.f32 %v1172, %v116
      %v1353 = vmul.f32 %v1187, %v117
      %v1354 = vmul.f32 %v1202, %v118
      %v1355 = vmul.f32 %v1217, %v119
      %v1356 = vmul.f32 %v1232, %v120
      %v1357 = vmul.f32 %v1247, %v121
      %v1358 = vmul.f32 %v1262, %v122
      %v1359 = vadd.f32 %v1327, %v1343
      %v1360 = vadd.f32 %v1328, %v1344
      %v1361 = vadd.f32 %v1329, %v1345
      %v1362 = vadd.f32 %v1330, %v1346
      %v1363 = vadd.f32 %v1331, %v1347
      %v1364 = vadd.f32 %v1332, %v1348
      %v1365 = vadd.f32 %v1333, %v1349
      %v1366 = vadd.f32 %v1334, %v1350
      %v1367 = vadd.f32 %v1335, %v1351
      %v1368 = vadd.f32 %v1336, %v1352
      %v1369 = vadd.f32 %v1337, %v1353
      %v1370 = vadd.f32 %v1338, %v1354
      %v1371 = vadd.f32 %v1339, %v1355
      %v1372 = vadd.f32 %v1340, %v1356
      %v1373 = vadd.f32 %v1341, %v1357
      %v1374 = vadd.f32 %v1342, %v1358
      %v1375 = vpack.c.bf16 %v1359, %v1359
      %v1376 = vpack.c.bf16 %v1360, %v1360
      %v1377 = vpack.c.bf16 %v1361, %v1361
      %v1378 = vpack.c.bf16 %v1362, %v1362
      %v1379 = vpack.c.bf16 %v1363, %v1363
      %v1380 = vpack.c.bf16 %v1364, %v1364
      %v1381 = vpack.c.bf16 %v1365, %v1365
      %v1382 = vpack.c.bf16 %v1366, %v1366
      %v1383 = vpack.c.bf16 %v1367, %v1367
      %v1384 = vpack.c.bf16 %v1368, %v1368
      %v1385 = vpack.c.bf16 %v1369, %v1369
      %v1386 = vpack.c.bf16 %v1370, %v1370
      %v1387 = vpack.c.bf16 %v1371, %v1371
      %v1388 = vpack.c.bf16 %v1372, %v1372
      %v1389 = vpack.c.bf16 %v1373, %v1373
      %v1390 = vpack.c.bf16 %v1374, %v1374
      %1391 = vst [vmem:[#allocation2] sm:$0xf] %v1375
      %1392 = vst [vmem:[#allocation2 + $0x4] sm:$0xf] %v1376
      %1393 = vst [vmem:[#allocation2 + $0x8] sm:$0xf] %v1377
      %1394 = vst [vmem:[#allocation2 + $0xc] sm:$0xf] %v1378
      %1395 = vst [vmem:[#allocation2 + $0x10] sm:$0xf] %v1379
      %1396 = vst [vmem:[#allocation2 + $0x14] sm:$0xf] %v1380
      %1397 = vst [vmem:[#allocation2 + $0x18] sm:$0xf] %v1381
      %1398 = vst [vmem:[#allocation2 + $0x1c] sm:$0xf] %v1382
      %1399 = vst [vmem:[#allocation2 + $0x20] sm:$0xf] %v1383
      %1400 = vst [vmem:[#allocation2 + $0x24] sm:$0xf] %v1384
      %1401 = vst [vmem:[#allocation2 + $0x28] sm:$0xf] %v1385
      %1402 = vst [vmem:[#allocation2 + $0x2c] sm:$0xf] %v1386
      %1403 = vst [vmem:[#allocation2 + $0x30] sm:$0xf] %v1387
      %1404 = vst [vmem:[#allocation2 + $0x34] sm:$0xf] %v1388
      %1405 = vst [vmem:[#allocation2 + $0x38] sm:$0xf] %v1389
      %1406 = vst [vmem:[#allocation2 + $0x3c] sm:$0xf] %v1390
      %1407 = vst [vmem:[#allocation3] sm:$0xff] 0.0
      %1408 = vst [vmem:[#allocation3 + $0x8] sm:$0xff] 0.0
      %1409 = vst [vmem:[#allocation3 + $0x10] sm:$0xff] 0.0
      %1410 = vst [vmem:[#allocation3 + $0x18] sm:$0xff] 0.0
      %1411 = vst [vmem:[#allocation3 + $0x20] sm:$0xff] 0.0
      %1412 = vst [vmem:[#allocation3 + $0x28] sm:$0xff] 0.0
      %1413 = vst [vmem:[#allocation3 + $0x30] sm:$0xff] 0.0
      %1414 = vst [vmem:[#allocation3 + $0x38] sm:$0xff] 0.0
      %1415 = vst [vmem:[#allocation3 + $0x40] sm:$0xff] 0.0
      %1416 = vst [vmem:[#allocation3 + $0x48] sm:$0xff] 0.0
      %1417 = vst [vmem:[#allocation3 + $0x50] sm:$0xff] 0.0
      %1418 = vst [vmem:[#allocation3 + $0x58] sm:$0xff] 0.0
      %1419 = vst [vmem:[#allocation3 + $0x60] sm:$0xff] 0.0
      %1420 = vst [vmem:[#allocation3 + $0x68] sm:$0xff] 0.0
      %1421 = vst [vmem:[#allocation3 + $0x70] sm:$0xff] 0.0
      %1422 = vst [vmem:[#allocation3 + $0x78] sm:$0xff] 0.0
    $region53: #{recurrent_gcn_forward.3} parent=1 // pred_fallthru
      _
    %v1423 = vld [vmem:[#allocation3] sm:$0xff]
    %v1424 = vld [vmem:[#allocation3 + $0x8] sm:$0xff]
    %v1425 = vld [vmem:[#allocation3 + $0x10] sm:$0xff]
    %v1426 = vld [vmem:[#allocation3 + $0x18] sm:$0xff]
    %v1427 = vld [vmem:[#allocation3 + $0x20] sm:$0xff]
    %v1428 = vld [vmem:[#allocation3 + $0x28] sm:$0xff]
    %v1429 = vld [vmem:[#allocation3 + $0x30] sm:$0xff]
    %v1430 = vld [vmem:[#allocation3 + $0x38] sm:$0xff]
    %v1431 = vld [vmem:[#allocation3 + $0x40] sm:$0xff]
    %v1432 = vld [vmem:[#allocation3 + $0x48] sm:$0xff]
    %v1433 = vld [vmem:[#allocation3 + $0x50] sm:$0xff]
    %v1434 = vld [vmem:[#allocation3 + $0x58] sm:$0xff]
    %v1435 = vld [vmem:[#allocation3 + $0x60] sm:$0xff]
    %v1436 = vld [vmem:[#allocation3 + $0x68] sm:$0xff]
    %v1437 = vld [vmem:[#allocation3 + $0x70] sm:$0xff]
    %v1438 = vld [vmem:[#allocation3 + $0x78] sm:$0xff]
    %v1439 = vld [vmem:[#allocation10] sm:$0xf]
    %v1440 = vld [vmem:[#allocation10 + $0x4] sm:$0xf]
    %v1441 = vld [vmem:[#allocation10 + $0x8] sm:$0xf]
    %v1442 = vld [vmem:[#allocation10 + $0xc] sm:$0xf]
    %v1443 = vld [vmem:[#allocation10 + $0x10] sm:$0xf]
    %v1444 = vld [vmem:[#allocation10 + $0x14] sm:$0xf]
    %v1445 = vld [vmem:[#allocation10 + $0x18] sm:$0xf]
    %v1446 = vld [vmem:[#allocation10 + $0x1c] sm:$0xf]
    %v1447 = vld [vmem:[#allocation10 + $0x20] sm:$0xf]
    %v1448 = vld [vmem:[#allocation10 + $0x24] sm:$0xf]
    %v1449 = vld [vmem:[#allocation10 + $0x28] sm:$0xf]
    %v1450 = vld [vmem:[#allocation10 + $0x2c] sm:$0xf]
    %v1451 = vld [vmem:[#allocation10 + $0x30] sm:$0xf]
    %v1452 = vld [vmem:[#allocation10 + $0x34] sm:$0xf]
    %v1453 = vld [vmem:[#allocation10 + $0x38] sm:$0xf]
    %v1454 = vld [vmem:[#allocation10 + $0x3c] sm:$0xf]
    %v1455 = vld [vmem:[%s4] sm:$0xf]
    %v1456 = vld [vmem:[%s4 + $0x4] sm:$0xf]
    %v1457 = vld [vmem:[%s4 + $0x8] sm:$0xf]
    %v1458 = vld [vmem:[%s4 + $0xc] sm:$0xf]
    %v1459 = vld [vmem:[%s4 + $0x10] sm:$0xf]
    %v1460 = vld [vmem:[%s4 + $0x14] sm:$0xf]
    %v1461 = vld [vmem:[%s4 + $0x18] sm:$0xf]
    %v1462 = vld [vmem:[%s4 + $0x1c] sm:$0xf]
    %v1463 = vld [vmem:[%s4 + $0x20] sm:$0xf]
    %v1464 = vld [vmem:[%s4 + $0x24] sm:$0xf]
    %v1465 = vld [vmem:[%s4 + $0x28] sm:$0xf]
    %v1466 = vld [vmem:[%s4 + $0x2c] sm:$0xf]
    %v1467 = vld [vmem:[%s4 + $0x30] sm:$0xf]
    %v1468 = vld [vmem:[%s4 + $0x34] sm:$0xf]
    %v1469 = vld [vmem:[%s4 + $0x38] sm:$0xf]
    %v1470 = vld [vmem:[%s4 + $0x3c] sm:$0xf]
    %v1487 = vunpack.c.l.b16 %v1439
    %v1488 = vunpack.c.l.b16 %v1440
    %v1489 = vunpack.c.l.b16 %v1441
    %v1490 = vunpack.c.l.b16 %v1442
    %v1491 = vunpack.c.l.b16 %v1443
    %v1492 = vunpack.c.l.b16 %v1444
    %v1493 = vunpack.c.l.b16 %v1445
    %v1494 = vunpack.c.l.b16 %v1446
    %v1495 = vunpack.c.l.b16 %v1447
    %v1496 = vunpack.c.l.b16 %v1448
    %v1497 = vunpack.c.l.b16 %v1449
    %v1498 = vunpack.c.l.b16 %v1450
    %v1499 = vunpack.c.l.b16 %v1451
    %v1500 = vunpack.c.l.b16 %v1452
    %v1501 = vunpack.c.l.b16 %v1453
    %v1502 = vunpack.c.l.b16 %v1454
    %v1503 = vpack.c.b16 %v1488, %v1487
    %v1504 = vpack.c.b16 %v1490, %v1489
    %v1505 = vpack.c.b16 %v1492, %v1491
    %v1506 = vpack.c.b16 %v1494, %v1493
    %v1507 = vpack.c.b16 %v1496, %v1495
    %v1508 = vpack.c.b16 %v1498, %v1497
    %v1509 = vpack.c.b16 %v1500, %v1499
    %v1510 = vpack.c.b16 %v1502, %v1501
    %v1535 = vunpack.c.l.b16 %v1455
    %v1536 = vunpack.c.l.b16 %v1456
    %v1537 = vunpack.c.l.b16 %v1457
    %v1538 = vunpack.c.l.b16 %v1458
    %v1539 = vunpack.c.l.b16 %v1459
    %v1540 = vunpack.c.l.b16 %v1460
    %v1541 = vunpack.c.l.b16 %v1461
    %v1542 = vunpack.c.l.b16 %v1462
    %v1543 = vunpack.c.l.b16 %v1463
    %v1544 = vunpack.c.l.b16 %v1464
    %v1545 = vunpack.c.l.b16 %v1465
    %v1546 = vunpack.c.l.b16 %v1466
    %v1547 = vunpack.c.l.b16 %v1467
    %v1548 = vunpack.c.l.b16 %v1468
    %v1549 = vunpack.c.l.b16 %v1469
    %v1550 = vunpack.c.l.b16 %v1470
    %v1551 = vpack.c.b16 %v1536, %v1535
    %v1552 = vpack.c.b16 %v1538, %v1537
    %v1553 = vpack.c.b16 %v1540, %v1539
    %v1554 = vpack.c.b16 %v1542, %v1541
    %v1555 = vpack.c.b16 %v1544, %v1543
    %v1556 = vpack.c.b16 %v1546, %v1545
    %v1557 = vpack.c.b16 %v1548, %v1547
    %v1558 = vpack.c.b16 %v1550, %v1549
    %1567 = vmatpush.bf16.msra.mxu0 %v1558
    %1568 = vmatpush.bf16.msra.mxu0 %v1557
    %1569 = vmatpush.bf16.msra.mxu0 %v1556
    %1570 = vmatpush.bf16.msra.mxu0 %v1555
    %1571 = vmatpush.bf16.msra.mxu0 %v1554
    %1572 = vmatpush.bf16.msra.mxu0 %v1553
    %1573 = vmatpush.bf16.msra.mxu0 %v1552
    %1574 = vmatpush.bf16.msra.mxu0 %v1551
    %1575 = vmatmul.bf16.gmra.mxu0 %v1503
    %v1576 = vpop.f32.mrf.mxu0
    %v1577 = vadd.f32 0.0, %v1576
    %v1578 = vpop.f32.mrf.mxu0
    %v1579 = vadd.f32 0.0, %v1578
    %1580 = vmatmul.bf16.gmra.mxu0 %v1504
    %v1581 = vpop.f32.mrf.mxu0
    %v1582 = vadd.f32 0.0, %v1581
    %v1583 = vpop.f32.mrf.mxu0
    %v1584 = vadd.f32 0.0, %v1583
    %1585 = vmatmul.bf16.gmra.mxu0 %v1505
    %v1586 = vpop.f32.mrf.mxu0
    %v1587 = vadd.f32 0.0, %v1586
    %v1588 = vpop.f32.mrf.mxu0
    %v1589 = vadd.f32 0.0, %v1588
    %1590 = vmatmul.bf16.gmra.mxu0 %v1506
    %v1591 = vpop.f32.mrf.mxu0
    %v1592 = vadd.f32 0.0, %v1591
    %v1593 = vpop.f32.mrf.mxu0
    %v1594 = vadd.f32 0.0, %v1593
    %1595 = vmatmul.bf16.gmra.mxu0 %v1507
    %v1596 = vpop.f32.mrf.mxu0
    %v1597 = vadd.f32 0.0, %v1596
    %v1598 = vpop.f32.mrf.mxu0
    %v1599 = vadd.f32 0.0, %v1598
    %1600 = vmatmul.bf16.gmra.mxu0 %v1508
    %v1601 = vpop.f32.mrf.mxu0
    %v1602 = vadd.f32 0.0, %v1601
    %v1603 = vpop.f32.mrf.mxu0
    %v1604 = vadd.f32 0.0, %v1603
    %1605 = vmatmul.bf16.gmra.mxu0 %v1509
    %v1606 = vpop.f32.mrf.mxu0
    %v1607 = vadd.f32 0.0, %v1606
    %v1608 = vpop.f32.mrf.mxu0
    %v1609 = vadd.f32 0.0, %v1608
    %1610 = vmatmul.bf16.gmra.mxu0 %v1510
    %v1611 = vpop.f32.mrf.mxu0
    %v1612 = vadd.f32 0.0, %v1611
    %v1613 = vpop.f32.mrf.mxu0
    %v1614 = vadd.f32 0.0, %v1613
    %1615 = vdwg.mxu0
    %v1616 = vadd.f32 %v1423, %v1577
    %v1617 = vadd.f32 %v1424, %v1579
    %v1618 = vadd.f32 %v1425, %v1582
    %v1619 = vadd.f32 %v1426, %v1584
    %v1620 = vadd.f32 %v1427, %v1587
    %v1621 = vadd.f32 %v1428, %v1589
    %v1622 = vadd.f32 %v1429, %v1592
    %v1623 = vadd.f32 %v1430, %v1594
    %v1624 = vadd.f32 %v1431, %v1597
    %v1625 = vadd.f32 %v1432, %v1599
    %v1626 = vadd.f32 %v1433, %v1602
    %v1627 = vadd.f32 %v1434, %v1604
    %v1628 = vadd.f32 %v1435, %v1607
    %v1629 = vadd.f32 %v1436, %v1609
    %v1630 = vadd.f32 %v1437, %v1612
    %v1631 = vadd.f32 %v1438, %v1614
    %1632 = vst [vmem:[#allocation3] sm:$0xff] %v1616
    %1633 = vst [vmem:[#allocation3 + $0x8] sm:$0xff] %v1617
    %1634 = vst [vmem:[#allocation3 + $0x10] sm:$0xff] %v1618
    %1635 = vst [vmem:[#allocation3 + $0x18] sm:$0xff] %v1619
    %1636 = vst [vmem:[#allocation3 + $0x20] sm:$0xff] %v1620
    %1637 = vst [vmem:[#allocation3 + $0x28] sm:$0xff] %v1621
    %1638 = vst [vmem:[#allocation3 + $0x30] sm:$0xff] %v1622
    %1639 = vst [vmem:[#allocation3 + $0x38] sm:$0xff] %v1623
    %1640 = vst [vmem:[#allocation3 + $0x40] sm:$0xff] %v1624
    %1641 = vst [vmem:[#allocation3 + $0x48] sm:$0xff] %v1625
    %1642 = vst [vmem:[#allocation3 + $0x50] sm:$0xff] %v1626
    %1643 = vst [vmem:[#allocation3 + $0x58] sm:$0xff] %v1627
    %1644 = vst [vmem:[#allocation3 + $0x60] sm:$0xff] %v1628
    %1645 = vst [vmem:[#allocation3 + $0x68] sm:$0xff] %v1629
    %1646 = vst [vmem:[#allocation3 + $0x70] sm:$0xff] %v1630
    %1647 = vst [vmem:[#allocation3 + $0x78] sm:$0xff] %v1631
    // Predicated region
    $region54: #{recurrent_gcn_forward.3} parent=1 // pred_check
      %p1648 = pneg %p103
    $region55: #{recurrent_gcn_forward.3} parent=1 // pred_check_branch
      %1650 = sbr.rel (%p1648) target = $region57
    $region56: #{recurrent_gcn_forward.3} parent=1 // pred_region
      %v1651 = vld [vmem:[#allocation3] sm:$0xff]
      %v1652 = vld [vmem:[#allocation3 + $0x8] sm:$0xff]
      %v1653 = vld [vmem:[#allocation3 + $0x10] sm:$0xff]
      %v1654 = vld [vmem:[#allocation3 + $0x18] sm:$0xff]
      %v1655 = vld [vmem:[#allocation3 + $0x20] sm:$0xff]
      %v1656 = vld [vmem:[#allocation3 + $0x28] sm:$0xff]
      %v1657 = vld [vmem:[#allocation3 + $0x30] sm:$0xff]
      %v1658 = vld [vmem:[#allocation3 + $0x38] sm:$0xff]
      %v1659 = vld [vmem:[#allocation3 + $0x40] sm:$0xff]
      %v1660 = vld [vmem:[#allocation3 + $0x48] sm:$0xff]
      %v1661 = vld [vmem:[#allocation3 + $0x50] sm:$0xff]
      %v1662 = vld [vmem:[#allocation3 + $0x58] sm:$0xff]
      %v1663 = vld [vmem:[#allocation3 + $0x60] sm:$0xff]
      %v1664 = vld [vmem:[#allocation3 + $0x68] sm:$0xff]
      %v1665 = vld [vmem:[#allocation3 + $0x70] sm:$0xff]
      %v1666 = vld [vmem:[#allocation3 + $0x78] sm:$0xff]
      %v1667 = vpack.c.bf16 %v1652, %v1651
      %v1668 = vpack.c.bf16 %v1654, %v1653
      %v1669 = vpack.c.bf16 %v1656, %v1655
      %v1670 = vpack.c.bf16 %v1658, %v1657
      %v1671 = vpack.c.bf16 %v1660, %v1659
      %v1672 = vpack.c.bf16 %v1662, %v1661
      %v1673 = vpack.c.bf16 %v1664, %v1663
      %v1674 = vpack.c.bf16 %v1666, %v1665
      %v1675 = vld [vmem:[#allocation2] sm:$0xf]
      %v1676 = vld [vmem:[#allocation2 + $0x4] sm:$0xf]
      %v1677 = vld [vmem:[#allocation2 + $0x8] sm:$0xf]
      %v1678 = vld [vmem:[#allocation2 + $0xc] sm:$0xf]
      %v1679 = vld [vmem:[#allocation2 + $0x10] sm:$0xf]
      %v1680 = vld [vmem:[#allocation2 + $0x14] sm:$0xf]
      %v1681 = vld [vmem:[#allocation2 + $0x18] sm:$0xf]
      %v1682 = vld [vmem:[#allocation2 + $0x1c] sm:$0xf]
      %v1683 = vld [vmem:[#allocation2 + $0x20] sm:$0xf]
      %v1684 = vld [vmem:[#allocation2 + $0x24] sm:$0xf]
      %v1685 = vld [vmem:[#allocation2 + $0x28] sm:$0xf]
      %v1686 = vld [vmem:[#allocation2 + $0x2c] sm:$0xf]
      %v1687 = vld [vmem:[#allocation2 + $0x30] sm:$0xf]
      %v1688 = vld [vmem:[#allocation2 + $0x34] sm:$0xf]
      %v1689 = vld [vmem:[#allocation2 + $0x38] sm:$0xf]
      %v1690 = vld [vmem:[#allocation2 + $0x3c] sm:$0xf]
      %v1707 = vunpack.c.l.b16 %v1675
      %v1708 = vunpack.c.l.b16 %v1676
      %v1709 = vunpack.c.l.b16 %v1677
      %v1710 = vunpack.c.l.b16 %v1678
      %v1711 = vunpack.c.l.b16 %v1679
      %v1712 = vunpack.c.l.b16 %v1680
      %v1713 = vunpack.c.l.b16 %v1681
      %v1714 = vunpack.c.l.b16 %v1682
      %v1715 = vunpack.c.l.b16 %v1683
      %v1716 = vunpack.c.l.b16 %v1684
      %v1717 = vunpack.c.l.b16 %v1685
      %v1718 = vunpack.c.l.b16 %v1686
      %v1719 = vunpack.c.l.b16 %v1687
      %v1720 = vunpack.c.l.b16 %v1688
      %v1721 = vunpack.c.l.b16 %v1689
      %v1722 = vunpack.c.l.b16 %v1690
      %v1723 = vpack.c.b16 %v1708, %v1707
      %v1724 = vpack.c.b16 %v1710, %v1709
      %v1725 = vpack.c.b16 %v1712, %v1711
      %v1726 = vpack.c.b16 %v1714, %v1713
      %v1727 = vpack.c.b16 %v1716, %v1715
      %v1728 = vpack.c.b16 %v1718, %v1717
      %v1729 = vpack.c.b16 %v1720, %v1719
      %v1730 = vpack.c.b16 %v1722, %v1721
      %1739 = vmatpush.bf16.msra.mxu0 %v1730
      %1740 = vmatpush.bf16.msra.mxu0 %v1729
      %1741 = vmatpush.bf16.msra.mxu0 %v1728
      %1742 = vmatpush.bf16.msra.mxu0 %v1727
      %1743 = vmatpush.bf16.msra.mxu0 %v1726
      %1744 = vmatpush.bf16.msra.mxu0 %v1725
      %1745 = vmatpush.bf16.msra.mxu0 %v1724
      %1746 = vmatpush.bf16.msra.mxu0 %v1723
      %1747 = vmatmul.bf16.gmra.mxu0 %v1667
      %v1748 = vpop.f32.mrf.mxu0
      %v1749 = vadd.f32 0.0, %v1748
      %v1750 = vpop.f32.mrf.mxu0
      %v1751 = vadd.f32 0.0, %v1750
      %1752 = vmatmul.bf16.gmra.mxu0 %v1668
      %v1753 = vpop.f32.mrf.mxu0
      %v1754 = vadd.f32 0.0, %v1753
      %v1755 = vpop.f32.mrf.mxu0
      %v1756 = vadd.f32 0.0, %v1755
      %1757 = vmatmul.bf16.gmra.mxu0 %v1669
      %v1758 = vpop.f32.mrf.mxu0
      %v1759 = vadd.f32 0.0, %v1758
      %v1760 = vpop.f32.mrf.mxu0
      %v1761 = vadd.f32 0.0, %v1760
      %1762 = vmatmul.bf16.gmra.mxu0 %v1670
      %v1763 = vpop.f32.mrf.mxu0
      %v1764 = vadd.f32 0.0, %v1763
      %v1765 = vpop.f32.mrf.mxu0
      %v1766 = vadd.f32 0.0, %v1765
      %1767 = vmatmul.bf16.gmra.mxu0 %v1671
      %v1768 = vpop.f32.mrf.mxu0
      %v1769 = vadd.f32 0.0, %v1768
      %v1770 = vpop.f32.mrf.mxu0
      %v1771 = vadd.f32 0.0, %v1770
      %1772 = vmatmul.bf16.gmra.mxu0 %v1672
      %v1773 = vpop.f32.mrf.mxu0
      %v1774 = vadd.f32 0.0, %v1773
      %v1775 = vpop.f32.mrf.mxu0
      %v1776 = vadd.f32 0.0, %v1775
      %1777 = vmatmul.bf16.gmra.mxu0 %v1673
      %v1778 = vpop.f32.mrf.mxu0
      %v1779 = vadd.f32 0.0, %v1778
      %v1780 = vpop.f32.mrf.mxu0
      %v1781 = vadd.f32 0.0, %v1780
      %1782 = vmatmul.bf16.gmra.mxu0 %v1674
      %v1783 = vpop.f32.mrf.mxu0
      %v1784 = vadd.f32 0.0, %v1783
      %v1785 = vpop.f32.mrf.mxu0
      %v1786 = vadd.f32 0.0, %v1785
      %1787 = vdwg.mxu0
      %v1788 = vmax.f32 %v1749, 0.0
      %v1789 = vmax.f32 %v1751, 0.0
      %v1790 = vmax.f32 %v1754, 0.0
      %v1791 = vmax.f32 %v1756, 0.0
      %v1792 = vmax.f32 %v1759, 0.0
      %v1793 = vmax.f32 %v1761, 0.0
      %v1794 = vmax.f32 %v1764, 0.0
      %v1795 = vmax.f32 %v1766, 0.0
      %v1796 = vmax.f32 %v1769, 0.0
      %v1797 = vmax.f32 %v1771, 0.0
      %v1798 = vmax.f32 %v1774, 0.0
      %v1799 = vmax.f32 %v1776, 0.0
      %v1800 = vmax.f32 %v1779, 0.0
      %v1801 = vmax.f32 %v1781, 0.0
      %v1802 = vmax.f32 %v1784, 0.0
      %v1803 = vmax.f32 %v1786, 0.0
      %v1804 = vpack.c.bf16 %v1789, %v1788
      %v1805 = vpack.c.bf16 %v1791, %v1790
      %v1806 = vpack.c.bf16 %v1793, %v1792
      %v1807 = vpack.c.bf16 %v1795, %v1794
      %v1808 = vpack.c.bf16 %v1797, %v1796
      %v1809 = vpack.c.bf16 %v1799, %v1798
      %v1810 = vpack.c.bf16 %v1801, %v1800
      %v1811 = vpack.c.bf16 %v1803, %v1802
      %v1812 = vld [vmem:[#allocation12] sm:$0xf]
      %v1813 = vld [vmem:[#allocation12 + $0x4] sm:$0xf]
      %v1814 = vld [vmem:[#allocation12 + $0x8] sm:$0xf]
      %v1815 = vld [vmem:[#allocation12 + $0xc] sm:$0xf]
      %v1816 = vld [vmem:[#allocation12 + $0x10] sm:$0xf]
      %v1817 = vld [vmem:[#allocation12 + $0x14] sm:$0xf]
      %v1818 = vld [vmem:[#allocation12 + $0x18] sm:$0xf]
      %v1819 = vld [vmem:[#allocation12 + $0x1c] sm:$0xf]
      %v1820 = vld [vmem:[#allocation12 + $0x20] sm:$0xf]
      %v1821 = vld [vmem:[#allocation12 + $0x24] sm:$0xf]
      %v1822 = vld [vmem:[#allocation12 + $0x28] sm:$0xf]
      %v1823 = vld [vmem:[#allocation12 + $0x2c] sm:$0xf]
      %v1824 = vld [vmem:[#allocation12 + $0x30] sm:$0xf]
      %v1825 = vld [vmem:[#allocation12 + $0x34] sm:$0xf]
      %v1826 = vld [vmem:[#allocation12 + $0x38] sm:$0xf]
      %v1827 = vld [vmem:[#allocation12 + $0x3c] sm:$0xf]
      %v1828 = vld [vmem:[%s6] sm:$0x1]
      %v1830 = vperm.slane %v1828, 0
      %v1848 = vunpack.c.l.b16 %v1812
      %v1849 = vunpack.c.l.b16 %v1813
      %v1850 = vunpack.c.l.b16 %v1814
      %v1851 = vunpack.c.l.b16 %v1815
      %v1852 = vunpack.c.l.b16 %v1816
      %v1853 = vunpack.c.l.b16 %v1817
      %v1854 = vunpack.c.l.b16 %v1818
      %v1855 = vunpack.c.l.b16 %v1819
      %v1856 = vunpack.c.l.b16 %v1820
      %v1857 = vunpack.c.l.b16 %v1821
      %v1858 = vunpack.c.l.b16 %v1822
      %v1859 = vunpack.c.l.b16 %v1823
      %v1860 = vunpack.c.l.b16 %v1824
      %v1861 = vunpack.c.l.b16 %v1825
      %v1862 = vunpack.c.l.b16 %v1826
      %v1863 = vunpack.c.l.b16 %v1827
      %v1864 = vpack.c.b16 %v1849, %v1848
      %v1865 = vpack.c.b16 %v1851, %v1850
      %v1866 = vpack.c.b16 %v1853, %v1852
      %v1867 = vpack.c.b16 %v1855, %v1854
      %v1868 = vpack.c.b16 %v1857, %v1856
      %v1869 = vpack.c.b16 %v1859, %v1858
      %v1870 = vpack.c.b16 %v1861, %v1860
      %v1871 = vpack.c.b16 %v1863, %v1862
      %1880 = vmatpush.bf16.msra.mxu0 %v1871
      %1881 = vmatpush.bf16.msra.mxu0 %v1870
      %1882 = vmatpush.bf16.msra.mxu0 %v1869
      %1883 = vmatpush.bf16.msra.mxu0 %v1868
      %1884 = vmatpush.bf16.msra.mxu0 %v1867
      %1885 = vmatpush.bf16.msra.mxu0 %v1866
      %1886 = vmatpush.bf16.msra.mxu0 %v1865
      %1887 = vmatpush.bf16.msra.mxu0 %v1864
      %1888 = vmatmul.bf16.gmra.mxu0 %v1804
      %v1889 = vpop.f32.mrf.mxu0
      %v1890 = vadd.f32 %v1830, %v1889
      %v1891 = vpop.f32.mrf.mxu0
      %v1892 = vadd.f32 %v1830, %v1891
      %1893 = vmatmul.bf16.gmra.mxu0 %v1805
      %v1894 = vpop.f32.mrf.mxu0
      %v1895 = vadd.f32 %v1830, %v1894
      %v1896 = vpop.f32.mrf.mxu0
      %v1897 = vadd.f32 %v1830, %v1896
      %1898 = vmatmul.bf16.gmra.mxu0 %v1806
      %v1899 = vpop.f32.mrf.mxu0
      %v1900 = vadd.f32 %v1830, %v1899
      %v1901 = vpop.f32.mrf.mxu0
      %v1902 = vadd.f32 %v1830, %v1901
      %1903 = vmatmul.bf16.gmra.mxu0 %v1807
      %v1904 = vpop.f32.mrf.mxu0
      %v1905 = vadd.f32 %v1830, %v1904
      %v1906 = vpop.f32.mrf.mxu0
      %v1907 = vadd.f32 %v1830, %v1906
      %1908 = vmatmul.bf16.gmra.mxu0 %v1808
      %v1909 = vpop.f32.mrf.mxu0
      %v1910 = vadd.f32 %v1830, %v1909
      %v1911 = vpop.f32.mrf.mxu0
      %v1912 = vadd.f32 %v1830, %v1911
      %1913 = vmatmul.bf16.gmra.mxu0 %v1809
      %v1914 = vpop.f32.mrf.mxu0
      %v1915 = vadd.f32 %v1830, %v1914
      %v1916 = vpop.f32.mrf.mxu0
      %v1917 = vadd.f32 %v1830, %v1916
      %1918 = vmatmul.bf16.gmra.mxu0 %v1810
      %v1919 = vpop.f32.mrf.mxu0
      %v1920 = vadd.f32 %v1830, %v1919
      %v1921 = vpop.f32.mrf.mxu0
      %v1922 = vadd.f32 %v1830, %v1921
      %1923 = vmatmul.bf16.gmra.mxu0 %v1811
      %v1924 = vpop.f32.mrf.mxu0
      %v1925 = vadd.f32 %v1830, %v1924
      %v1926 = vpop.f32.mrf.mxu0
      %v1927 = vadd.f32 %v1830, %v1926
      %1928 = vdwg.mxu0
      %v1929 = vlaneseq
      %v1930 = vand.u32 %v1929, 127
      %vm1931 = vcmp.lt.s32.totalorder %v1930, 8
      %v1932 = vsel %vm1931, %v1890, -1e+30
      %v1933 = vsel %vm1931, %v1892, -1e+30
      %v1934 = vsel %vm1931, %v1895, -1e+30
      %v1935 = vsel %vm1931, %v1897, -1e+30
      %v1936 = vsel %vm1931, %v1900, -1e+30
      %v1937 = vsel %vm1931, %v1902, -1e+30
      %v1938 = vsel %vm1931, %v1905, -1e+30
      %v1939 = vsel %vm1931, %v1907, -1e+30
      %v1940 = vsel %vm1931, %v1910, -1e+30
      %v1941 = vsel %vm1931, %v1912, -1e+30
      %v1942 = vsel %vm1931, %v1915, -1e+30
      %v1943 = vsel %vm1931, %v1917, -1e+30
      %v1944 = vsel %vm1931, %v1920, -1e+30
      %v1945 = vsel %vm1931, %v1922, -1e+30
      %v1946 = vsel %vm1931, %v1925, -1e+30
      %v1947 = vsel %vm1931, %v1927, -1e+30
      %1948 = vmax.xlane.f32.xlu0 %v1932
      %v1949 = vpop.xlane.xlu0 %1948
      %1950 = vmax.xlane.f32.xlu0 %v1933
      %v1951 = vpop.xlane.xlu0 %1950
      %1952 = vmax.xlane.f32.xlu0 %v1934
      %v1953 = vpop.xlane.xlu0 %1952
      %1954 = vmax.xlane.f32.xlu0 %v1935
      %v1955 = vpop.xlane.xlu0 %1954
      %1956 = vmax.xlane.f32.xlu0 %v1936
      %v1957 = vpop.xlane.xlu0 %1956
      %1958 = vmax.xlane.f32.xlu0 %v1937
      %v1959 = vpop.xlane.xlu0 %1958
      %1960 = vmax.xlane.f32.xlu0 %v1938
      %v1961 = vpop.xlane.xlu0 %1960
      %1962 = vmax.xlane.f32.xlu0 %v1939
      %v1963 = vpop.xlane.xlu0 %1962
      %1964 = vmax.xlane.f32.xlu0 %v1940
      %v1965 = vpop.xlane.xlu0 %1964
      %1966 = vmax.xlane.f32.xlu0 %v1941
      %v1967 = vpop.xlane.xlu0 %1966
      %1968 = vmax.xlane.f32.xlu0 %v1942
      %v1969 = vpop.xlane.xlu0 %1968
      %1970 = vmax.xlane.f32.xlu0 %v1943
      %v1971 = vpop.xlane.xlu0 %1970
      %1972 = vmax.xlane.f32.xlu0 %v1944
      %v1973 = vpop.xlane.xlu0 %1972
      %1974 = vmax.xlane.f32.xlu0 %v1945
      %v1975 = vpop.xlane.xlu0 %1974
      %1976 = vmax.xlane.f32.xlu0 %v1946
      %v1977 = vpop.xlane.xlu0 %1976
      %1978 = vmax.xlane.f32.xlu0 %v1947
      %v1979 = vpop.xlane.xlu0 %1978
      %v1980 = vsub.f32 %v1932, %v1949
      %v1981 = vsub.f32 %v1933, %v1951
      %v1982 = vsub.f32 %v1934, %v1953
      %v1983 = vsub.f32 %v1935, %v1955
      %v1984 = vsub.f32 %v1936, %v1957
      %v1985 = vsub.f32 %v1937, %v1959
      %v1986 = vsub.f32 %v1938, %v1961
      %v1987 = vsub.f32 %v1939, %v1963
      %v1988 = vsub.f32 %v1940, %v1965
      %v1989 = vsub.f32 %v1941, %v1967
      %v1990 = vsub.f32 %v1942, %v1969
      %v1991 = vsub.f32 %v1943, %v1971
      %v1992 = vsub.f32 %v1944, %v1973
      %v1993 = vsub.f32 %v1945, %v1975
      %v1994 = vsub.f32 %v1946, %v1977
      %v1995 = vsub.f32 %v1947, %v1979
      %v1996 = vmul.f32 %v1980, 1.442695
      %v1997 = vpow.pop %v1996
      %v1998 = vmul.f32 %v1981, 1.442695
      %v1999 = vpow.pop %v1998
      %v2000 = vmul.f32 %v1982, 1.442695
      %v2001 = vpow.pop %v2000
      %v2002 = vmul.f32 %v1983, 1.442695
      %v2003 = vpow.pop %v2002
      %v2004 = vmul.f32 %v1984, 1.442695
      %v2005 = vpow.pop %v2004
      %v2006 = vmul.f32 %v1985, 1.442695
      %v2007 = vpow.pop %v2006
      %v2008 = vmul.f32 %v1986, 1.442695
      %v2009 = vpow.pop %v2008
      %v2010 = vmul.f32 %v1987, 1.442695
      %v2011 = vpow.pop %v2010
      %v2012 = vmul.f32 %v1988, 1.442695
      %v2013 = vpow.pop %v2012
      %v2014 = vmul.f32 %v1989, 1.442695
      %v2015 = vpow.pop %v2014
      %v2016 = vmul.f32 %v1990, 1.442695
      %v2017 = vpow.pop %v2016
      %v2018 = vmul.f32 %v1991, 1.442695
      %v2019 = vpow.pop %v2018
      %v2020 = vmul.f32 %v1992, 1.442695
      %v2021 = vpow.pop %v2020
      %v2022 = vmul.f32 %v1993, 1.442695
      %v2023 = vpow.pop %v2022
      %v2024 = vmul.f32 %v1994, 1.442695
      %v2025 = vpow.pop %v2024
      %v2026 = vmul.f32 %v1995, 1.442695
      %v2027 = vpow.pop %v2026
      %2028 = vadd.xlane.f32.xlu0 %v1997
      %v2029 = vpop.xlane.xlu0 %2028
      %2030 = vadd.xlane.f32.xlu0 %v1999
      %v2031 = vpop.xlane.xlu0 %2030
      %2032 = vadd.xlane.f32.xlu0 %v2001
      %v2033 = vpop.xlane.xlu0 %2032
      %2034 = vadd.xlane.f32.xlu0 %v2003
      %v2035 = vpop.xlane.xlu0 %2034
      %2036 = vadd.xlane.f32.xlu0 %v2005
      %v2037 = vpop.xlane.xlu0 %2036
      %2038 = vadd.xlane.f32.xlu0 %v2007
      %v2039 = vpop.xlane.xlu0 %2038
      %2040 = vadd.xlane.f32.xlu0 %v2009
      %v2041 = vpop.xlane.xlu0 %2040
      %2042 = vadd.xlane.f32.xlu0 %v2011
      %v2043 = vpop.xlane.xlu0 %2042
      %2044 = vadd.xlane.f32.xlu0 %v2013
      %v2045 = vpop.xlane.xlu0 %2044
      %2046 = vadd.xlane.f32.xlu0 %v2015
      %v2047 = vpop.xlane.xlu0 %2046
      %2048 = vadd.xlane.f32.xlu0 %v2017
      %v2049 = vpop.xlane.xlu0 %2048
      %2050 = vadd.xlane.f32.xlu0 %v2019
      %v2051 = vpop.xlane.xlu0 %2050
      %2052 = vadd.xlane.f32.xlu0 %v2021
      %v2053 = vpop.xlane.xlu0 %2052
      %2054 = vadd.xlane.f32.xlu0 %v2023
      %v2055 = vpop.xlane.xlu0 %2054
      %2056 = vadd.xlane.f32.xlu0 %v2025
      %v2057 = vpop.xlane.xlu0 %2056
      %2058 = vadd.xlane.f32.xlu0 %v2027
      %v2059 = vpop.xlane.xlu0 %2058
      %v2060 = vlog2.pop %v2029
      %v2061 = vmul.f32 %v2060, 0.6931472
      %v2062 = vlog2.pop %v2031
      %v2063 = vmul.f32 %v2062, 0.6931472
      %v2064 = vlog2.pop %v2033
      %v2065 = vmul.f32 %v2064, 0.6931472
      %v2066 = vlog2.pop %v2035
      %v2067 = vmul.f32 %v2066, 0.6931472
      %v2068 = vlog2.pop %v2037
      %v2069 = vmul.f32 %v2068, 0.6931472
      %v2070 = vlog2.pop %v2039
      %v2071 = vmul.f32 %v2070, 0.6931472
      %v2072 = vlog2.pop %v2041
      %v2073 = vmul.f32 %v2072, 0.6931472
      %v2074 = vlog2.pop %v2043
      %v2075 = vmul.f32 %v2074, 0.6931472
      %v2076 = vlog2.pop %v2045
      %v2077 = vmul.f32 %v2076, 0.6931472
      %v2078 = vlog2.pop %v2047
      %v2079 = vmul.f32 %v2078, 0.6931472
      %v2080 = vlog2.pop %v2049
      %v2081 = vmul.f32 %v2080, 0.6931472
      %v2082 = vlog2.pop %v2051
      %v2083 = vmul.f32 %v2082, 0.6931472
      %v2084 = vlog2.pop %v2053
      %v2085 = vmul.f32 %v2084, 0.6931472
      %v2086 = vlog2.pop %v2055
      %v2087 = vmul.f32 %v2086, 0.6931472
      %v2088 = vlog2.pop %v2057
      %v2089 = vmul.f32 %v2088, 0.6931472
      %v2090 = vlog2.pop %v2059
      %v2091 = vmul.f32 %v2090, 0.6931472
      %v2092 = vsub.f32 %v1980, %v2061
      %v2093 = vsub.f32 %v1981, %v2063
      %v2094 = vsub.f32 %v1982, %v2065
      %v2095 = vsub.f32 %v1983, %v2067
      %v2096 = vsub.f32 %v1984, %v2069
      %v2097 = vsub.f32 %v1985, %v2071
      %v2098 = vsub.f32 %v1986, %v2073
      %v2099 = vsub.f32 %v1987, %v2075
      %v2100 = vsub.f32 %v1988, %v2077
      %v2101 = vsub.f32 %v1989, %v2079
      %v2102 = vsub.f32 %v1990, %v2081
      %v2103 = vsub.f32 %v1991, %v2083
      %v2104 = vsub.f32 %v1992, %v2085
      %v2105 = vsub.f32 %v1993, %v2087
      %v2106 = vsub.f32 %v1994, %v2089
      %v2107 = vsub.f32 %v1995, %v2091
      %2108 = vst [vmem:[#allocation13] sm:$0xff] %v2092
      %2109 = vst [vmem:[#allocation13 + $0x8] sm:$0xff] %v2093
      %2110 = vst [vmem:[#allocation13 + $0x10] sm:$0xff] %v2094
      %2111 = vst [vmem:[#allocation13 + $0x18] sm:$0xff] %v2095
      %2112 = vst [vmem:[#allocation13 + $0x20] sm:$0xff] %v2096
      %2113 = vst [vmem:[#allocation13 + $0x28] sm:$0xff] %v2097
      %2114 = vst [vmem:[#allocation13 + $0x30] sm:$0xff] %v2098
      %2115 = vst [vmem:[#allocation13 + $0x38] sm:$0xff] %v2099
      %2116 = vst [vmem:[#allocation13 + $0x40] sm:$0xff] %v2100
      %2117 = vst [vmem:[#allocation13 + $0x48] sm:$0xff] %v2101
      %2118 = vst [vmem:[#allocation13 + $0x50] sm:$0xff] %v2102
      %2119 = vst [vmem:[#allocation13 + $0x58] sm:$0xff] %v2103
      %2120 = vst [vmem:[#allocation13 + $0x60] sm:$0xff] %v2104
      %2121 = vst [vmem:[#allocation13 + $0x68] sm:$0xff] %v2105
      %2122 = vst [vmem:[#allocation13 + $0x70] sm:$0xff] %v2106
      %2123 = vst [vmem:[#allocation13 + $0x78] sm:$0xff] %v2107
    $region57: #{recurrent_gcn_forward.3} parent=1 // pred_fallthru
      _
    // Predicated region
    $region58: #{recurrent_gcn_forward.3} parent=1 // pred_check
      _
    $region59: #{recurrent_gcn_forward.3} parent=1 // pred_check_branch
      %2125 = sbr.rel (0) target = $region61
    $region60: #{recurrent_gcn_forward.3} parent=1 // pred_region
      %2127 = vsyncadd [#allocation6], 0
      %s2128 = sshll.u32 [#allocation13], 4
      %s2129 = int_to_ptr.vmem [resolvable:$true] %s2128
      %s2130 = sshll.u32 %s7, 4
      %s2131 = int_to_ptr.hbm [resolvable:$true] %s2130
      %2136 = dma.vmem_to_hbm [thread:$0]  %s2129, 2048, %s2131, [#allocation6], 128, 128, 8
    $region61: #{recurrent_gcn_forward.3} parent=1 // pred_fallthru
      _
    // Predicated region
    $region62: #{recurrent_gcn_forward.3} parent=1 // pred_check
      _
    $region63: #{recurrent_gcn_forward.3} parent=1 // pred_check_branch
      %2138 = sbr.rel (0) target = $region65
    $region64: #{recurrent_gcn_forward.3} parent=1 // pred_region
      %2140 = dma.done [#allocation6], 2048
    $region65: #{recurrent_gcn_forward.3} parent=1 // pred_fallthru
      _
    %2141 = vsyncpa [#allocation5], 1
    %2142 = vsyncpa [#allocation8], 1
    %2143 = vsyncpa [#allocation11], 1
    %2144 = vsyncpa [#allocation6], 1

// kernel: recurrent_gcn_forward.2
$region0: #{recurrent_gcn_forward.2}
  #allocation0 [shape = 'u32[]', space=smem, size = 0x4, offset = 0x4, fixed_abs, tag = 'smem constant byte address 0x4 - core index']
  #allocation1 [shape = 'u32[72,128]{1,0:T(1,128)}', space=vmem, size = 0x9000, scoped, tag = 'internal scratch']
  #allocation2 [shape = 'bf16[128,128]{1,0:T(8,128)(2,1)}', space=vmem, size = 0x8000, scoped, tag = 'scratch operand']
  #allocation3 [shape = 'f32[128,128]{1,0:T(8,128)}', space=vmem, size = 0x10000, scoped, tag = 'scratch operand']
  %s0 = inlined_call_operand.hbm [shape: f32[128,768], index: 0, kind: input, shape index: {}]
  %s1 = inlined_call_operand.hbm [shape: f32[1,768], index: 1, kind: input, shape index: {}]
  %s2 = inlined_call_operand.hbm [shape: f32[128,128], index: 2, kind: input, shape index: {}]
  %s3 = inlined_call_operand.hbm [shape: bf16[128,128], index: 3, kind: input, shape index: {}]
  %s4 = inlined_call_operand.hbm [shape: bf16[128,128], index: 4, kind: input, shape index: {}]
  %s5 = inlined_call_operand.vmem [shape: bf16[128,128], index: 5, kind: output, shape index: {}]
  %s6 = sld [smem:[#allocation0]]
  $region58: #{recurrent_gcn_forward.2} parent=0
    _
  %s8 = ssub.s32 1, %s6
  %s9 = scalar_select 0, %s8, %s6
  $region1: #{recurrent_gcn_forward.2} parent=0
    #allocation4 [shape = 'u8[393216]{0}', space=vmem, size = 0x60000, scoped, tag = 'input window, operand 0, single buffered']
    #allocation5 [shape = 's32[1]{0}', space=sflag, size = 0x4, scoped, tag = 'scoped memory for recurrent_gcn_forward.2']
    #allocation6 [shape = 'u8[3072]{0}', space=vmem, size = 0xc00, scoped, tag = 'input window, operand 1, single buffered']
    #allocation7 [shape = 's32[1]{0}', space=sflag, size = 0x4, scoped, tag = 'scoped memory for recurrent_gcn_forward.2']
    #allocation8 [shape = 'u8[65536]{0}', space=vmem, size = 0x10000, scoped, tag = 'input window, operand 2, single buffered']
    #allocation9 [shape = 'u8[32768]{0}', space=vmem, size = 0x8000, scoped, tag = 'input window, operand 3, single buffered']
    #allocation10 [shape = 's32[1]{0}', space=sflag, size = 0x4, scoped, tag = 'scoped memory for recurrent_gcn_forward.2']
    #allocation11 [shape = 'u8[32768]{0}', space=vmem, size = 0x8000, scoped, tag = 'input window, operand 4, single buffered']
    %10 = vsyncpa [#allocation5], 0
    %11 = vsyncpa [#allocation7], 0
    %12 = vsyncpa [#allocation10], 0
    // Predicated region
    $region2: #{recurrent_gcn_forward.2} parent=1 // pred_check
      _
    $region3: #{recurrent_gcn_forward.2} parent=1 // pred_check_branch
      %14 = sbr.rel (0) target = $region5
    $region4: #{recurrent_gcn_forward.2} parent=1 // pred_region
      %16 = vsyncadd [#allocation5], 0
      %s17 = sshll.u32 %s0, 4
      %s18 = int_to_ptr.hbm [resolvable:$true] %s17
      %s19 = sshll.u32 [#allocation4], 4
      %s20 = int_to_ptr.vmem [resolvable:$true] %s19
      %25 = dma.hbm_to_vmem [thread:$0]  %s18, 12288, %s20, [#allocation5], 768, 768, 48
    $region5: #{recurrent_gcn_forward.2} parent=1 // pred_fallthru
      _
    // Predicated region
    $region6: #{recurrent_gcn_forward.2} parent=1 // pred_check
      _
    $region7: #{recurrent_gcn_forward.2} parent=1 // pred_check_branch
      %27 = sbr.rel (0) target = $region9
    $region8: #{recurrent_gcn_forward.2} parent=1 // pred_region
      %29 = vsyncadd [#allocation7], 0
      %s31 = sshll.u32 %s1, 4
      %s32 = int_to_ptr.hbm [resolvable:$true] %s31
      %s33 = sshll.u32 [#allocation6], 4
      %s34 = int_to_ptr.vmem [resolvable:$true] %s33
      %36 = dma.hbm_to_vmem [thread:$0]  %s32, 96, %s34, [#allocation7]
    $region9: #{recurrent_gcn_forward.2} parent=1 // pred_fallthru
      _
    // Predicated region
    $region10: #{recurrent_gcn_forward.2} parent=1 // pred_check
      _
    $region11: #{recurrent_gcn_forward.2} parent=1 // pred_check_branch
      %38 = sbr.rel (0) target = $region13
    $region12: #{recurrent_gcn_forward.2} parent=1 // pred_region
      %40 = vsyncadd [#allocation7], 0
      %s41 = sshll.u32 %s2, 4
      %s42 = int_to_ptr.hbm [resolvable:$true] %s41
      %s43 = sshll.u32 [#allocation8], 4
      %s44 = int_to_ptr.vmem [resolvable:$true] %s43
      %49 = dma.hbm_to_vmem [thread:$0]  %s42, 2048, %s44, [#allocation7], 128, 128, 8
    $region13: #{recurrent_gcn_forward.2} parent=1 // pred_fallthru
      _
    // Predicated region
    $region14: #{recurrent_gcn_forward.2} parent=1 // pred_check
      _
    $region15: #{recurrent_gcn_forward.2} parent=1 // pred_check_branch
      %51 = sbr.rel (0) target = $region17
    $region16: #{recurrent_gcn_forward.2} parent=1 // pred_region
      %53 = vsyncadd [#allocation10], 0
      %s54 = sshll.u32 %s3, 4
      %s55 = int_to_ptr.hbm [resolvable:$true] %s54
      %s56 = sshll.u32 [#allocation9], 4
      %s57 = int_to_ptr.vmem [resolvable:$true] %s56
      %62 = dma.hbm_to_vmem [thread:$0]  %s55, 1024, %s57, [#allocation10], 64, 64, 4
    $region17: #{recurrent_gcn_forward.2} parent=1 // pred_fallthru
      _
    // Predicated region
    $region18: #{recurrent_gcn_forward.2} parent=1 // pred_check
      _
    $region19: #{recurrent_gcn_forward.2} parent=1 // pred_check_branch
      %64 = sbr.rel (0) target = $region21
    $region20: #{recurrent_gcn_forward.2} parent=1 // pred_region
      %66 = vsyncadd [#allocation10], 0
      %s67 = sshll.u32 %s4, 4
      %s68 = int_to_ptr.hbm [resolvable:$true] %s67
      %s69 = sshll.u32 [#allocation11], 4
      %s70 = int_to_ptr.vmem [resolvable:$true] %s69
      %75 = dma.hbm_to_vmem [thread:$0]  %s68, 1024, %s70, [#allocation10], 64, 64, 4
    $region21: #{recurrent_gcn_forward.2} parent=1 // pred_fallthru
      _
    // Predicated region
    $region22: #{recurrent_gcn_forward.2} parent=1 // pred_check
      _
    $region23: #{recurrent_gcn_forward.2} parent=1 // pred_check_branch
      %77 = sbr.rel (0) target = $region25
    $region24: #{recurrent_gcn_forward.2} parent=1 // pred_region
      %79 = dma.done [#allocation5], 12288
    $region25: #{recurrent_gcn_forward.2} parent=1 // pred_fallthru
      _
    // Predicated region
    $region26: #{recurrent_gcn_forward.2} parent=1 // pred_check
      _
    $region27: #{recurrent_gcn_forward.2} parent=1 // pred_check_branch
      %81 = sbr.rel (0) target = $region29
    $region28: #{recurrent_gcn_forward.2} parent=1 // pred_region
      %83 = dma.done [#allocation7], 96
    $region29: #{recurrent_gcn_forward.2} parent=1 // pred_fallthru
      _
    // Predicated region
    $region30: #{recurrent_gcn_forward.2} parent=1 // pred_check
      _
    $region31: #{recurrent_gcn_forward.2} parent=1 // pred_check_branch
      %85 = sbr.rel (0) target = $region33
    $region32: #{recurrent_gcn_forward.2} parent=1 // pred_region
      %87 = dma.done [#allocation7], 2048
    $region33: #{recurrent_gcn_forward.2} parent=1 // pred_fallthru
      _
    // Predicated region
    $region34: #{recurrent_gcn_forward.2} parent=1 // pred_check
      _
    $region35: #{recurrent_gcn_forward.2} parent=1 // pred_check_branch
      %89 = sbr.rel (0) target = $region37
    $region36: #{recurrent_gcn_forward.2} parent=1 // pred_region
      %91 = dma.done [#allocation10], 1024
    $region37: #{recurrent_gcn_forward.2} parent=1 // pred_fallthru
      _
    // Predicated region
    $region38: #{recurrent_gcn_forward.2} parent=1 // pred_check
      _
    $region39: #{recurrent_gcn_forward.2} parent=1 // pred_check_branch
      %93 = sbr.rel (0) target = $region41
    $region40: #{recurrent_gcn_forward.2} parent=1 // pred_region
      %95 = dma.done [#allocation10], 1024
    $region41: #{recurrent_gcn_forward.2} parent=1 // pred_fallthru
      _
    %p96 = scmp.eq.s32.totalorder 0, 0
    // Predicated region
    $region42: #{recurrent_gcn_forward.2} parent=1 // pred_check
      %p97 = pneg %p96
    $region43: #{recurrent_gcn_forward.2} parent=1 // pred_check_branch
      %99 = sbr.rel (%p97) target = $region45
    $region44: #{recurrent_gcn_forward.2} parent=1 // pred_region
      %v100 = vld [vmem:[#allocation8] sm:$0xff]
      %v101 = vld [vmem:[#allocation8 + $0x8] sm:$0xff]
      %v102 = vld [vmem:[#allocation8 + $0x10] sm:$0xff]
      %v103 = vld [vmem:[#allocation8 + $0x18] sm:$0xff]
      %v104 = vld [vmem:[#allocation8 + $0x20] sm:$0xff]
      %v105 = vld [vmem:[#allocation8 + $0x28] sm:$0xff]
      %v106 = vld [vmem:[#allocation8 + $0x30] sm:$0xff]
      %v107 = vld [vmem:[#allocation8 + $0x38] sm:$0xff]
      %v108 = vld [vmem:[#allocation8 + $0x40] sm:$0xff]
      %v109 = vld [vmem:[#allocation8 + $0x48] sm:$0xff]
      %v110 = vld [vmem:[#allocation8 + $0x50] sm:$0xff]
      %v111 = vld [vmem:[#allocation8 + $0x58] sm:$0xff]
      %v112 = vld [vmem:[#allocation8 + $0x60] sm:$0xff]
      %v113 = vld [vmem:[#allocation8 + $0x68] sm:$0xff]
      %v114 = vld [vmem:[#allocation8 + $0x70] sm:$0xff]
      %v115 = vld [vmem:[#allocation8 + $0x78] sm:$0xff]
      %v116 = vld [vmem:[#allocation4] sm:$0xff]
      %v117 = vld [vmem:[#allocation4 + $0x8] sm:$0xff]
      %v118 = vld [vmem:[#allocation4 + $0x10] sm:$0xff]
      %v119 = vld [vmem:[#allocation4 + $0x18] sm:$0xff]
      %v120 = vld [vmem:[#allocation4 + $0x20] sm:$0xff]
      %v121 = vld [vmem:[#allocation4 + $0x28] sm:$0xff]
      %v122 = vld [vmem:[#allocation4 + $0x30] sm:$0xff]
      %v123 = vld [vmem:[#allocation4 + $0x38] sm:$0xff]
      %v124 = vld [vmem:[#allocation4 + $0x40] sm:$0xff]
      %v125 = vld [vmem:[#allocation4 + $0x48] sm:$0xff]
      %v126 = vld [vmem:[#allocation4 + $0x50] sm:$0xff]
      %v127 = vld [vmem:[#allocation4 + $0x58] sm:$0xff]
      %v128 = vld [vmem:[#allocation4 + $0x60] sm:$0xff]
      %v129 = vld [vmem:[#allocation4 + $0x68] sm:$0xff]
      %v130 = vld [vmem:[#allocation4 + $0x70] sm:$0xff]
      %v131 = vld [vmem:[#allocation4 + $0x78] sm:$0xff]
      %v132 = vld [vmem:[#allocation4 + $0x80] sm:$0xff]
      %v133 = vld [vmem:[#allocation4 + $0x88] sm:$0xff]
      %v134 = vld [vmem:[#allocation4 + $0x90] sm:$0xff]
      %v135 = vld [vmem:[#allocation4 + $0x98] sm:$0xff]
      %v136 = vld [vmem:[#allocation4 + $0xa0] sm:$0xff]
      %v137 = vld [vmem:[#allocation4 + $0xa8] sm:$0xff]
      %v138 = vld [vmem:[#allocation4 + $0xb0] sm:$0xff]
      %v139 = vld [vmem:[#allocation4 + $0xb8] sm:$0xff]
      %v140 = vld [vmem:[#allocation4 + $0xc0] sm:$0xff]
      %v141 = vld [vmem:[#allocation4 + $0xc8] sm:$0xff]
      %v142 = vld [vmem:[#allocation4 + $0xd0] sm:$0xff]
      %v143 = vld [vmem:[#allocation4 + $0xd8] sm:$0xff]
      %v144 = vld [vmem:[#allocation4 + $0xe0] sm:$0xff]
      %v145 = vld [vmem:[#allocation4 + $0xe8] sm:$0xff]
      %v146 = vld [vmem:[#allocation4 + $0xf0] sm:$0xff]
      %v147 = vld [vmem:[#allocation4 + $0xf8] sm:$0xff]
      %v148 = vld [vmem:[#allocation4 + $0x100] sm:$0xff]
      %v149 = vld [vmem:[#allocation4 + $0x108] sm:$0xff]
      %v150 = vld [vmem:[#allocation4 + $0x110] sm:$0xff]
      %v151 = vld [vmem:[#allocation4 + $0x118] sm:$0xff]
      %v152 = vld [vmem:[#allocation4 + $0x120] sm:$0xff]
      %v153 = vld [vmem:[#allocation4 + $0x128] sm:$0xff]
      %v154 = vld [vmem:[#allocation4 + $0x130] sm:$0xff]
      %v155 = vld [vmem:[#allocation4 + $0x138] sm:$0xff]
      %v156 = vld [vmem:[#allocation4 + $0x140] sm:$0xff]
      %v157 = vld [vmem:[#allocation4 + $0x148] sm:$0xff]
      %v158 = vld [vmem:[#allocation4 + $0x150] sm:$0xff]
      %v159 = vld [vmem:[#allocation4 + $0x158] sm:$0xff]
      %v160 = vld [vmem:[#allocation4 + $0x160] sm:$0xff]
      %v161 = vld [vmem:[#allocation4 + $0x168] sm:$0xff]
      %v162 = vld [vmem:[#allocation4 + $0x170] sm:$0xff]
      %v163 = vld [vmem:[#allocation4 + $0x178] sm:$0xff]
      %v164 = vld [vmem:[#allocation4 + $0x180] sm:$0xff]
      %v165 = vld [vmem:[#allocation4 + $0x188] sm:$0xff]
      %v166 = vld [vmem:[#allocation4 + $0x190] sm:$0xff]
      %v167 = vld [vmem:[#allocation4 + $0x198] sm:$0xff]
      %v168 = vld [vmem:[#allocation4 + $0x1a0] sm:$0xff]
      %v169 = vld [vmem:[#allocation4 + $0x1a8] sm:$0xff]
      %v170 = vld [vmem:[#allocation4 + $0x1b0] sm:$0xff]
      %v171 = vld [vmem:[#allocation4 + $0x1b8] sm:$0xff]
      %v172 = vld [vmem:[#allocation4 + $0x1c0] sm:$0xff]
      %v173 = vld [vmem:[#allocation4 + $0x1c8] sm:$0xff]
      %v174 = vld [vmem:[#allocation4 + $0x1d0] sm:$0xff]
      %v175 = vld [vmem:[#allocation4 + $0x1d8] sm:$0xff]
      %v176 = vld [vmem:[#allocation4 + $0x1e0] sm:$0xff]
      %v177 = vld [vmem:[#allocation4 + $0x1e8] sm:$0xff]
      %v178 = vld [vmem:[#allocation4 + $0x1f0] sm:$0xff]
      %v179 = vld [vmem:[#allocation4 + $0x1f8] sm:$0xff]
      %v180 = vld [vmem:[#allocation4 + $0x200] sm:$0xff]
      %v181 = vld [vmem:[#allocation4 + $0x208] sm:$0xff]
      %v182 = vld [vmem:[#allocation4 + $0x210] sm:$0xff]
      %v183 = vld [vmem:[#allocation4 + $0x218] sm:$0xff]
      %v184 = vld [vmem:[#allocation4 + $0x220] sm:$0xff]
      %v185 = vld [vmem:[#allocation4 + $0x228] sm:$0xff]
      %v186 = vld [vmem:[#allocation4 + $0x230] sm:$0xff]
      %v187 = vld [vmem:[#allocation4 + $0x238] sm:$0xff]
      %v188 = vld [vmem:[#allocation4 + $0x240] sm:$0xff]
      %v189 = vld [vmem:[#allocation4 + $0x248] sm:$0xff]
      %v190 = vld [vmem:[#allocation4 + $0x250] sm:$0xff]
      %v191 = vld [vmem:[#allocation4 + $0x258] sm:$0xff]
      %v192 = vld [vmem:[#allocation4 + $0x260] sm:$0xff]
      %v193 = vld [vmem:[#allocation4 + $0x268] sm:$0xff]
      %v194 = vld [vmem:[#allocation4 + $0x270] sm:$0xff]
      %v195 = vld [vmem:[#allocation4 + $0x278] sm:$0xff]
      %v196 = vld [vmem:[#allocation4 + $0x280] sm:$0xff]
      %v197 = vld [vmem:[#allocation4 + $0x288] sm:$0xff]
      %v198 = vld [vmem:[#allocation4 + $0x290] sm:$0xff]
      %v199 = vld [vmem:[#allocation4 + $0x298] sm:$0xff]
      %v200 = vld [vmem:[#allocation4 + $0x2a0] sm:$0xff]
      %v201 = vld [vmem:[#allocation4 + $0x2a8] sm:$0xff]
      %v202 = vld [vmem:[#allocation4 + $0x2b0] sm:$0xff]
      %v203 = vld [vmem:[#allocation4 + $0x2b8] sm:$0xff]
      %v204 = vld [vmem:[#allocation4 + $0x2c0] sm:$0xff]
      %v205 = vld [vmem:[#allocation4 + $0x2c8] sm:$0xff]
      %v206 = vld [vmem:[#allocation4 + $0x2d0] sm:$0xff]
      %v207 = vld [vmem:[#allocation4 + $0x2d8] sm:$0xff]
      %v208 = vld [vmem:[#allocation4 + $0x2e0] sm:$0xff]
      %v209 = vld [vmem:[#allocation4 + $0x2e8] sm:$0xff]
      %v210 = vld [vmem:[#allocation4 + $0x2f0] sm:$0xff]
      %v211 = vld [vmem:[#allocation4 + $0x2f8] sm:$0xff]
      %v212 = vld [vmem:[#allocation6] sm:$0x3f]
      %v214 = vperm.slane %v212, 0
      %v215 = vperm.slane %v212, 1
      %v216 = vperm.slane %v212, 2
      %v217 = vperm.slane %v212, 3
      %v218 = vperm.slane %v212, 4
      %v219 = vperm.slane %v212, 5
      %226 = vmatpush.msra.mxu0 %v206
      %227 = vmatpush.msra.mxu0 %v200
      %228 = vmatpush.msra.mxu0 %v194
      %229 = vmatpush.msra.mxu0 %v188
      %230 = vmatpush.msra.mxu0 %v182
      %231 = vmatpush.msra.mxu0 %v176
      %232 = vmatpush.msra.mxu0 %v170
      %233 = vmatpush.msra.mxu0 %v164
      %234 = vmatpush.msra.mxu0 %v158
      %235 = vmatpush.msra.mxu0 %v152
      %236 = vmatpush.msra.mxu0 %v146
      %237 = vmatpush.msra.mxu0 %v140
      %238 = vmatpush.msra.mxu0 %v134
      %239 = vmatpush.msra.mxu0 %v128
      %240 = vmatpush.msra.mxu0 %v122
      %241 = vmatpush.msra.mxu0 %v116
      %242 = vmatmul.f32.gmra.mxu0 %v100
      %v243 = vpop.f32.mrf.mxu0
      %v244 = vadd.f32 %v214, %v243
      %245 = vmatmul.f32.gmra.mxu0 %v101
      %v246 = vpop.f32.mrf.mxu0
      %v247 = vadd.f32 %v214, %v246
      %248 = vmatmul.f32.gmra.mxu0 %v102
      %v249 = vpop.f32.mrf.mxu0
      %v250 = vadd.f32 %v214, %v249
      %251 = vmatmul.f32.gmra.mxu0 %v103
      %v252 = vpop.f32.mrf.mxu0
      %v253 = vadd.f32 %v214, %v252
      %254 = vmatmul.f32.gmra.mxu0 %v104
      %v255 = vpop.f32.mrf.mxu0
      %v256 = vadd.f32 %v214, %v255
      %257 = vmatmul.f32.gmra.mxu0 %v105
      %v258 = vpop.f32.mrf.mxu0
      %v259 = vadd.f32 %v214, %v258
      %260 = vmatmul.f32.gmra.mxu0 %v106
      %v261 = vpop.f32.mrf.mxu0
      %v262 = vadd.f32 %v214, %v261
      %263 = vmatmul.f32.gmra.mxu0 %v107
      %v264 = vpop.f32.mrf.mxu0
      %v265 = vadd.f32 %v214, %v264
      %266 = vmatmul.f32.gmra.mxu0 %v108
      %v267 = vpop.f32.mrf.mxu0
      %v268 = vadd.f32 %v214, %v267
      %269 = vmatmul.f32.gmra.mxu0 %v109
      %v270 = vpop.f32.mrf.mxu0
      %v271 = vadd.f32 %v214, %v270
      %272 = vmatmul.f32.gmra.mxu0 %v110
      %v273 = vpop.f32.mrf.mxu0
      %v274 = vadd.f32 %v214, %v273
      %275 = vmatmul.f32.gmra.mxu0 %v111
      %v276 = vpop.f32.mrf.mxu0
      %v277 = vadd.f32 %v214, %v276
      %278 = vmatmul.f32.gmra.mxu0 %v112
      %v279 = vpop.f32.mrf.mxu0
      %v280 = vadd.f32 %v214, %v279
      %281 = vmatmul.f32.gmra.mxu0 %v113
      %v282 = vpop.f32.mrf.mxu0
      %v283 = vadd.f32 %v214, %v282
      %284 = vmatmul.f32.gmra.mxu0 %v114
      %v285 = vpop.f32.mrf.mxu0
      %v286 = vadd.f32 %v214, %v285
      %287 = vmatmul.f32.gmra.mxu0 %v115
      %v288 = vpop.f32.mrf.mxu0
      %v289 = vadd.f32 %v214, %v288
      %290 = vdwg.mxu0
      %291 = vmatpush.msra.mxu0 %v207
      %292 = vmatpush.msra.mxu0 %v201
      %293 = vmatpush.msra.mxu0 %v195
      %294 = vmatpush.msra.mxu0 %v189
      %295 = vmatpush.msra.mxu0 %v183
      %296 = vmatpush.msra.mxu0 %v177
      %297 = vmatpush.msra.mxu0 %v171
      %298 = vmatpush.msra.mxu0 %v165
      %299 = vmatpush.msra.mxu0 %v159
      %300 = vmatpush.msra.mxu0 %v153
      %301 = vmatpush.msra.mxu0 %v147
      %302 = vmatpush.msra.mxu0 %v141
      %303 = vmatpush.msra.mxu0 %v135
      %304 = vmatpush.msra.mxu0 %v129
      %305 = vmatpush.msra.mxu0 %v123
      %306 = vmatpush.msra.mxu0 %v117
      %307 = vmatmul.f32.gmra.mxu0 %v100
      %v308 = vpop.f32.mrf.mxu0
      %v309 = vadd.f32 %v215, %v308
      %310 = vmatmul.f32.gmra.mxu0 %v101
      %v311 = vpop.f32.mrf.mxu0
      %v312 = vadd.f32 %v215, %v311
      %313 = vmatmul.f32.gmra.mxu0 %v102
      %v314 = vpop.f32.mrf.mxu0
      %v315 = vadd.f32 %v215, %v314
      %316 = vmatmul.f32.gmra.mxu0 %v103
      %v317 = vpop.f32.mrf.mxu0
      %v318 = vadd.f32 %v215, %v317
      %319 = vmatmul.f32.gmra.mxu0 %v104
      %v320 = vpop.f32.mrf.mxu0
      %v321 = vadd.f32 %v215, %v320
      %322 = vmatmul.f32.gmra.mxu0 %v105
      %v323 = vpop.f32.mrf.mxu0
      %v324 = vadd.f32 %v215, %v323
      %325 = vmatmul.f32.gmra.mxu0 %v106
      %v326 = vpop.f32.mrf.mxu0
      %v327 = vadd.f32 %v215, %v326
      %328 = vmatmul.f32.gmra.mxu0 %v107
      %v329 = vpop.f32.mrf.mxu0
      %v330 = vadd.f32 %v215, %v329
      %331 = vmatmul.f32.gmra.mxu0 %v108
      %v332 = vpop.f32.mrf.mxu0
      %v333 = vadd.f32 %v215, %v332
      %334 = vmatmul.f32.gmra.mxu0 %v109
      %v335 = vpop.f32.mrf.mxu0
      %v336 = vadd.f32 %v215, %v335
      %337 = vmatmul.f32.gmra.mxu0 %v110
      %v338 = vpop.f32.mrf.mxu0
      %v339 = vadd.f32 %v215, %v338
      %340 = vmatmul.f32.gmra.mxu0 %v111
      %v341 = vpop.f32.mrf.mxu0
      %v342 = vadd.f32 %v215, %v341
      %343 = vmatmul.f32.gmra.mxu0 %v112
      %v344 = vpop.f32.mrf.mxu0
      %v345 = vadd.f32 %v215, %v344
      %346 = vmatmul.f32.gmra.mxu0 %v113
      %v347 = vpop.f32.mrf.mxu0
      %v348 = vadd.f32 %v215, %v347
      %349 = vmatmul.f32.gmra.mxu0 %v114
      %v350 = vpop.f32.mrf.mxu0
      %v351 = vadd.f32 %v215, %v350
      %352 = vmatmul.f32.gmra.mxu0 %v115
      %v353 = vpop.f32.mrf.mxu0
      %v354 = vadd.f32 %v215, %v353
      %355 = vdwg.mxu0
      %356 = vmatpush.msra.mxu0 %v208
      %357 = vmatpush.msra.mxu0 %v202
      %358 = vmatpush.msra.mxu0 %v196
      %359 = vmatpush.msra.mxu0 %v190
      %360 = vmatpush.msra.mxu0 %v184
      %361 = vmatpush.msra.mxu0 %v178
      %362 = vmatpush.msra.mxu0 %v172
      %363 = vmatpush.msra.mxu0 %v166
      %364 = vmatpush.msra.mxu0 %v160
      %365 = vmatpush.msra.mxu0 %v154
      %366 = vmatpush.msra.mxu0 %v148
      %367 = vmatpush.msra.mxu0 %v142
      %368 = vmatpush.msra.mxu0 %v136
      %369 = vmatpush.msra.mxu0 %v130
      %370 = vmatpush.msra.mxu0 %v124
      %371 = vmatpush.msra.mxu0 %v118
      %372 = vmatmul.f32.gmra.mxu0 %v100
      %v373 = vpop.f32.mrf.mxu0
      %v374 = vadd.f32 %v216, %v373
      %375 = vmatmul.f32.gmra.mxu0 %v101
      %v376 = vpop.f32.mrf.mxu0
      %v377 = vadd.f32 %v216, %v376
      %378 = vmatmul.f32.gmra.mxu0 %v102
      %v379 = vpop.f32.mrf.mxu0
      %v380 = vadd.f32 %v216, %v379
      %381 = vmatmul.f32.gmra.mxu0 %v103
      %v382 = vpop.f32.mrf.mxu0
      %v383 = vadd.f32 %v216, %v382
      %384 = vmatmul.f32.gmra.mxu0 %v104
      %v385 = vpop.f32.mrf.mxu0
      %v386 = vadd.f32 %v216, %v385
      %387 = vmatmul.f32.gmra.mxu0 %v105
      %v388 = vpop.f32.mrf.mxu0
      %v389 = vadd.f32 %v216, %v388
      %390 = vmatmul.f32.gmra.mxu0 %v106
      %v391 = vpop.f32.mrf.mxu0
      %v392 = vadd.f32 %v216, %v391
      %393 = vmatmul.f32.gmra.mxu0 %v107
      %v394 = vpop.f32.mrf.mxu0
      %v395 = vadd.f32 %v216, %v394
      %396 = vmatmul.f32.gmra.mxu0 %v108
      %v397 = vpop.f32.mrf.mxu0
      %v398 = vadd.f32 %v216, %v397
      %399 = vmatmul.f32.gmra.mxu0 %v109
      %v400 = vpop.f32.mrf.mxu0
      %v401 = vadd.f32 %v216, %v400
      %402 = vmatmul.f32.gmra.mxu0 %v110
      %v403 = vpop.f32.mrf.mxu0
      %v404 = vadd.f32 %v216, %v403
      %405 = vmatmul.f32.gmra.mxu0 %v111
      %v406 = vpop.f32.mrf.mxu0
      %v407 = vadd.f32 %v216, %v406
      %408 = vmatmul.f32.gmra.mxu0 %v112
      %v409 = vpop.f32.mrf.mxu0
      %v410 = vadd.f32 %v216, %v409
      %411 = vmatmul.f32.gmra.mxu0 %v113
      %v412 = vpop.f32.mrf.mxu0
      %v413 = vadd.f32 %v216, %v412
      %414 = vmatmul.f32.gmra.mxu0 %v114
      %v415 = vpop.f32.mrf.mxu0
      %v416 = vadd.f32 %v216, %v415
      %417 = vmatmul.f32.gmra.mxu0 %v115
      %v418 = vpop.f32.mrf.mxu0
      %v419 = vadd.f32 %v216, %v418
      %420 = vdwg.mxu0
      %421 = vmatpush.msra.mxu0 %v209
      %422 = vmatpush.msra.mxu0 %v203
      %423 = vmatpush.msra.mxu0 %v197
      %424 = vmatpush.msra.mxu0 %v191
      %425 = vmatpush.msra.mxu0 %v185
      %426 = vmatpush.msra.mxu0 %v179
      %427 = vmatpush.msra.mxu0 %v173
      %428 = vmatpush.msra.mxu0 %v167
      %429 = vmatpush.msra.mxu0 %v161
      %430 = vmatpush.msra.mxu0 %v155
      %431 = vmatpush.msra.mxu0 %v149
      %432 = vmatpush.msra.mxu0 %v143
      %433 = vmatpush.msra.mxu0 %v137
      %434 = vmatpush.msra.mxu0 %v131
      %435 = vmatpush.msra.mxu0 %v125
      %436 = vmatpush.msra.mxu0 %v119
      %437 = vmatmul.f32.gmra.mxu0 %v100
      %v438 = vpop.f32.mrf.mxu0
      %v439 = vadd.f32 %v217, %v438
      %440 = vmatmul.f32.gmra.mxu0 %v101
      %v441 = vpop.f32.mrf.mxu0
      %v442 = vadd.f32 %v217, %v441
      %443 = vmatmul.f32.gmra.mxu0 %v102
      %v444 = vpop.f32.mrf.mxu0
      %v445 = vadd.f32 %v217, %v444
      %446 = vmatmul.f32.gmra.mxu0 %v103
      %v447 = vpop.f32.mrf.mxu0
      %v448 = vadd.f32 %v217, %v447
      %449 = vmatmul.f32.gmra.mxu0 %v104
      %v450 = vpop.f32.mrf.mxu0
      %v451 = vadd.f32 %v217, %v450
      %452 = vmatmul.f32.gmra.mxu0 %v105
      %v453 = vpop.f32.mrf.mxu0
      %v454 = vadd.f32 %v217, %v453
      %455 = vmatmul.f32.gmra.mxu0 %v106
      %v456 = vpop.f32.mrf.mxu0
      %v457 = vadd.f32 %v217, %v456
      %458 = vmatmul.f32.gmra.mxu0 %v107
      %v459 = vpop.f32.mrf.mxu0
      %v460 = vadd.f32 %v217, %v459
      %461 = vmatmul.f32.gmra.mxu0 %v108
      %v462 = vpop.f32.mrf.mxu0
      %v463 = vadd.f32 %v217, %v462
      %464 = vmatmul.f32.gmra.mxu0 %v109
      %v465 = vpop.f32.mrf.mxu0
      %v466 = vadd.f32 %v217, %v465
      %467 = vmatmul.f32.gmra.mxu0 %v110
      %v468 = vpop.f32.mrf.mxu0
      %v469 = vadd.f32 %v217, %v468
      %470 = vmatmul.f32.gmra.mxu0 %v111
      %v471 = vpop.f32.mrf.mxu0
      %v472 = vadd.f32 %v217, %v471
      %473 = vmatmul.f32.gmra.mxu0 %v112
      %v474 = vpop.f32.mrf.mxu0
      %v475 = vadd.f32 %v217, %v474
      %476 = vmatmul.f32.gmra.mxu0 %v113
      %v477 = vpop.f32.mrf.mxu0
      %v478 = vadd.f32 %v217, %v477
      %479 = vmatmul.f32.gmra.mxu0 %v114
      %v480 = vpop.f32.mrf.mxu0
      %v481 = vadd.f32 %v217, %v480
      %482 = vmatmul.f32.gmra.mxu0 %v115
      %v483 = vpop.f32.mrf.mxu0
      %v484 = vadd.f32 %v217, %v483
      %485 = vdwg.mxu0
      %486 = vmatpush.msra.mxu0 %v210
      %487 = vmatpush.msra.mxu0 %v204
      %488 = vmatpush.msra.mxu0 %v198
      %489 = vmatpush.msra.mxu0 %v192
      %490 = vmatpush.msra.mxu0 %v186
      %491 = vmatpush.msra.mxu0 %v180
      %492 = vmatpush.msra.mxu0 %v174
      %493 = vmatpush.msra.mxu0 %v168
      %494 = vmatpush.msra.mxu0 %v162
      %495 = vmatpush.msra.mxu0 %v156
      %496 = vmatpush.msra.mxu0 %v150
      %497 = vmatpush.msra.mxu0 %v144
      %498 = vmatpush.msra.mxu0 %v138
      %499 = vmatpush.msra.mxu0 %v132
      %500 = vmatpush.msra.mxu0 %v126
      %501 = vmatpush.msra.mxu0 %v120
      %502 = vmatmul.f32.gmra.mxu0 %v100
      %v503 = vpop.f32.mrf.mxu0
      %v504 = vadd.f32 %v218, %v503
      %505 = vmatmul.f32.gmra.mxu0 %v101
      %v506 = vpop.f32.mrf.mxu0
      %v507 = vadd.f32 %v218, %v506
      %508 = vmatmul.f32.gmra.mxu0 %v102
      %v509 = vpop.f32.mrf.mxu0
      %v510 = vadd.f32 %v218, %v509
      %511 = vmatmul.f32.gmra.mxu0 %v103
      %v512 = vpop.f32.mrf.mxu0
      %v513 = vadd.f32 %v218, %v512
      %514 = vmatmul.f32.gmra.mxu0 %v104
      %v515 = vpop.f32.mrf.mxu0
      %v516 = vadd.f32 %v218, %v515
      %517 = vmatmul.f32.gmra.mxu0 %v105
      %v518 = vpop.f32.mrf.mxu0
      %v519 = vadd.f32 %v218, %v518
      %520 = vmatmul.f32.gmra.mxu0 %v106
      %v521 = vpop.f32.mrf.mxu0
      %v522 = vadd.f32 %v218, %v521
      %523 = vmatmul.f32.gmra.mxu0 %v107
      %v524 = vpop.f32.mrf.mxu0
      %v525 = vadd.f32 %v218, %v524
      %526 = vmatmul.f32.gmra.mxu0 %v108
      %v527 = vpop.f32.mrf.mxu0
      %v528 = vadd.f32 %v218, %v527
      %529 = vmatmul.f32.gmra.mxu0 %v109
      %v530 = vpop.f32.mrf.mxu0
      %v531 = vadd.f32 %v218, %v530
      %532 = vmatmul.f32.gmra.mxu0 %v110
      %v533 = vpop.f32.mrf.mxu0
      %v534 = vadd.f32 %v218, %v533
      %535 = vmatmul.f32.gmra.mxu0 %v111
      %v536 = vpop.f32.mrf.mxu0
      %v537 = vadd.f32 %v218, %v536
      %538 = vmatmul.f32.gmra.mxu0 %v112
      %v539 = vpop.f32.mrf.mxu0
      %v540 = vadd.f32 %v218, %v539
      %541 = vmatmul.f32.gmra.mxu0 %v113
      %v542 = vpop.f32.mrf.mxu0
      %v543 = vadd.f32 %v218, %v542
      %544 = vmatmul.f32.gmra.mxu0 %v114
      %v545 = vpop.f32.mrf.mxu0
      %v546 = vadd.f32 %v218, %v545
      %547 = vmatmul.f32.gmra.mxu0 %v115
      %v548 = vpop.f32.mrf.mxu0
      %v549 = vadd.f32 %v218, %v548
      %550 = vdwg.mxu0
      %551 = vmatpush.msra.mxu0 %v211
      %552 = vmatpush.msra.mxu0 %v205
      %553 = vmatpush.msra.mxu0 %v199
      %554 = vmatpush.msra.mxu0 %v193
      %555 = vmatpush.msra.mxu0 %v187
      %556 = vmatpush.msra.mxu0 %v181
      %557 = vmatpush.msra.mxu0 %v175
      %558 = vmatpush.msra.mxu0 %v169
      %559 = vmatpush.msra.mxu0 %v163
      %560 = vmatpush.msra.mxu0 %v157
      %561 = vmatpush.msra.mxu0 %v151
      %562 = vmatpush.msra.mxu0 %v145
      %563 = vmatpush.msra.mxu0 %v139
      %564 = vmatpush.msra.mxu0 %v133
      %565 = vmatpush.msra.mxu0 %v127
      %566 = vmatpush.msra.mxu0 %v121
      %567 = vmatmul.f32.gmra.mxu0 %v100
      %v568 = vpop.f32.mrf.mxu0
      %v569 = vadd.f32 %v219, %v568
      %570 = vmatmul.f32.gmra.mxu0 %v101
      %v571 = vpop.f32.mrf.mxu0
      %v572 = vadd.f32 %v219, %v571
      %573 = vmatmul.f32.gmra.mxu0 %v102
      %v574 = vpop.f32.mrf.mxu0
      %v575 = vadd.f32 %v219, %v574
      %576 = vmatmul.f32.gmra.mxu0 %v103
      %v577 = vpop.f32.mrf.mxu0
      %v578 = vadd.f32 %v219, %v577
      %579 = vmatmul.f32.gmra.mxu0 %v104
      %v580 = vpop.f32.mrf.mxu0
      %v581 = vadd.f32 %v219, %v580
      %582 = vmatmul.f32.gmra.mxu0 %v105
      %v583 = vpop.f32.mrf.mxu0
      %v584 = vadd.f32 %v219, %v583
      %585 = vmatmul.f32.gmra.mxu0 %v106
      %v586 = vpop.f32.mrf.mxu0
      %v587 = vadd.f32 %v219, %v586
      %588 = vmatmul.f32.gmra.mxu0 %v107
      %v589 = vpop.f32.mrf.mxu0
      %v590 = vadd.f32 %v219, %v589
      %591 = vmatmul.f32.gmra.mxu0 %v108
      %v592 = vpop.f32.mrf.mxu0
      %v593 = vadd.f32 %v219, %v592
      %594 = vmatmul.f32.gmra.mxu0 %v109
      %v595 = vpop.f32.mrf.mxu0
      %v596 = vadd.f32 %v219, %v595
      %597 = vmatmul.f32.gmra.mxu0 %v110
      %v598 = vpop.f32.mrf.mxu0
      %v599 = vadd.f32 %v219, %v598
      %600 = vmatmul.f32.gmra.mxu0 %v111
      %v601 = vpop.f32.mrf.mxu0
      %v602 = vadd.f32 %v219, %v601
      %603 = vmatmul.f32.gmra.mxu0 %v112
      %v604 = vpop.f32.mrf.mxu0
      %v605 = vadd.f32 %v219, %v604
      %606 = vmatmul.f32.gmra.mxu0 %v113
      %v607 = vpop.f32.mrf.mxu0
      %v608 = vadd.f32 %v219, %v607
      %609 = vmatmul.f32.gmra.mxu0 %v114
      %v610 = vpop.f32.mrf.mxu0
      %v611 = vadd.f32 %v219, %v610
      %612 = vmatmul.f32.gmra.mxu0 %v115
      %v613 = vpop.f32.mrf.mxu0
      %v614 = vadd.f32 %v219, %v613
      %615 = vdwg.mxu0
      %v616 = vadd.f32 %v244, %v439
      %v617 = vadd.f32 %v247, %v442
      %v618 = vadd.f32 %v250, %v445
      %v619 = vadd.f32 %v253, %v448
      %v620 = vadd.f32 %v256, %v451
      %v621 = vadd.f32 %v259, %v454
      %v622 = vadd.f32 %v262, %v457
      %v623 = vadd.f32 %v265, %v460
      %v624 = vadd.f32 %v268, %v463
      %v625 = vadd.f32 %v271, %v466
      %v626 = vadd.f32 %v274, %v469
      %v627 = vadd.f32 %v277, %v472
      %v628 = vadd.f32 %v280, %v475
      %v629 = vadd.f32 %v283, %v478
      %v630 = vadd.f32 %v286, %v481
      %v631 = vadd.f32 %v289, %v484
      %v632 = vxor.u32 %v616, 2147483648
      %v633 = vxor.u32 %v617, 2147483648
      %v634 = vxor.u32 %v618, 2147483648
      %v635 = vxor.u32 %v619, 2147483648
      %v636 = vxor.u32 %v620, 2147483648
      %v637 = vxor.u32 %v621, 2147483648
      %v638 = vxor.u32 %v622, 2147483648
      %v639 = vxor.u32 %v623, 2147483648
      %v640 = vxor.u32 %v624, 2147483648
      %v641 = vxor.u32 %v625, 2147483648
      %v642 = vxor.u32 %v626, 2147483648
      %v643 = vxor.u32 %v627, 2147483648
      %v644 = vxor.u32 %v628, 2147483648
      %v645 = vxor.u32 %v629, 2147483648
      %v646 = vxor.u32 %v630, 2147483648
      %v647 = vxor.u32 %v631, 2147483648
      %v648 = vmul.f32 %v632, 1.442695
      %v649 = vpow.pop %v648
      %v650 = vmul.f32 %v633, 1.442695
      %v651 = vpow.pop %v650
      %v652 = vmul.f32 %v634, 1.442695
      %v653 = vpow.pop %v652
      %v654 = vmul.f32 %v635, 1.442695
      %v655 = vpow.pop %v654
      %v656 = vmul.f32 %v636, 1.442695
      %v657 = vpow.pop %v656
      %v658 = vmul.f32 %v637, 1.442695
      %v659 = vpow.pop %v658
      %v660 = vmul.f32 %v638, 1.442695
      %v661 = vpow.pop %v660
      %v662 = vmul.f32 %v639, 1.442695
      %v663 = vpow.pop %v662
      %v664 = vmul.f32 %v640, 1.442695
      %v665 = vpow.pop %v664
      %v666 = vmul.f32 %v641, 1.442695
      %v667 = vpow.pop %v666
      %v668 = vmul.f32 %v642, 1.442695
      %v669 = vpow.pop %v668
      %v670 = vmul.f32 %v643, 1.442695
      %v671 = vpow.pop %v670
      %v672 = vmul.f32 %v644, 1.442695
      %v673 = vpow.pop %v672
      %v674 = vmul.f32 %v645, 1.442695
      %v675 = vpow.pop %v674
      %v676 = vmul.f32 %v646, 1.442695
      %v677 = vpow.pop %v676
      %v678 = vmul.f32 %v647, 1.442695
      %v679 = vpow.pop %v678
      %v680 = vadd.f32 %v649, 1.0
      %v681 = vadd.f32 %v651, 1.0
      %v682 = vadd.f32 %v653, 1.0
      %v683 = vadd.f32 %v655, 1.0
      %v684 = vadd.f32 %v657, 1.0
      %v685 = vadd.f32 %v659, 1.0
      %v686 = vadd.f32 %v661, 1.0
      %v687 = vadd.f32 %v663, 1.0
      %v688 = vadd.f32 %v665, 1.0
      %v689 = vadd.f32 %v667, 1.0
      %v690 = vadd.f32 %v669, 1.0
      %v691 = vadd.f32 %v671, 1.0
      %v692 = vadd.f32 %v673, 1.0
      %v693 = vadd.f32 %v675, 1.0
      %v694 = vadd.f32 %v677, 1.0
      %v695 = vadd.f32 %v679, 1.0
      %v696 = vrcp.pop %v680
      %v697 = vmul.f32 %v680, %v696
      %v698 = vsub.f32 1.0, %v697
      %v699 = vmul.f32 %v696, %v698
      %v700 = vadd.f32 %v696, %v699
      %vm701 = vweird.f32 %v680
      %vm702 = vweird.f32 %v696
      %vm703 = vmor %vm701, %vm702
      %v704 = vsel %vm703, %v696, %v700
      %v705 = vand.u32 2147483647, %v680
      %vm706 = vcmp.eq.f32.partialorder %v705, 8.507059e+37
      %v707 = vand.u32 %v680, 2147483648
      %v708 = vor.u32 1.1754944e-38, %v707
      %v709 = vsel %vm706, %v708, %v704
      %v710 = vmul.f32 1.0, %v709
      %v711 = vrcp.pop %v681
      %v712 = vmul.f32 %v681, %v711
      %v713 = vsub.f32 1.0, %v712
      %v714 = vmul.f32 %v711, %v713
      %v715 = vadd.f32 %v711, %v714
      %vm716 = vweird.f32 %v681
      %vm717 = vweird.f32 %v711
      %vm718 = vmor %vm716, %vm717
      %v719 = vsel %vm718, %v711, %v715
      %v720 = vand.u32 2147483647, %v681
      %vm721 = vcmp.eq.f32.partialorder %v720, 8.507059e+37
      %v722 = vand.u32 %v681, 2147483648
      %v723 = vor.u32 1.1754944e-38, %v722
      %v724 = vsel %vm721, %v723, %v719
      %v725 = vmul.f32 1.0, %v724
      %v726 = vrcp.pop %v682
      %v727 = vmul.f32 %v682, %v726
      %v728 = vsub.f32 1.0, %v727
      %v729 = vmul.f32 %v726, %v728
      %v730 = vadd.f32 %v726, %v729
      %vm731 = vweird.f32 %v682
      %vm732 = vweird.f32 %v726
      %vm733 = vmor %vm731, %vm732
      %v734 = vsel %vm733, %v726, %v730
      %v735 = vand.u32 2147483647, %v682
      %vm736 = vcmp.eq.f32.partialorder %v735, 8.507059e+37
      %v737 = vand.u32 %v682, 2147483648
      %v738 = vor.u32 1.1754944e-38, %v737
      %v739 = vsel %vm736, %v738, %v734
      %v740 = vmul.f32 1.0, %v739
      %v741 = vrcp.pop %v683
      %v742 = vmul.f32 %v683, %v741
      %v743 = vsub.f32 1.0, %v742
      %v744 = vmul.f32 %v741, %v743
      %v745 = vadd.f32 %v741, %v744
      %vm746 = vweird.f32 %v683
      %vm747 = vweird.f32 %v741
      %vm748 = vmor %vm746, %vm747
      %v749 = vsel %vm748, %v741, %v745
      %v750 = vand.u32 2147483647, %v683
      %vm751 = vcmp.eq.f32.partialorder %v750, 8.507059e+37
      %v752 = vand.u32 %v683, 2147483648
      %v753 = vor.u32 1.1754944e-38, %v752
      %v754 = vsel %vm751, %v753, %v749
      %v755 = vmul.f32 1.0, %v754
      %v756 = vrcp.pop %v684
      %v757 = vmul.f32 %v684, %v756
      %v758 = vsub.f32 1.0, %v757
      %v759 = vmul.f32 %v756, %v758
      %v760 = vadd.f32 %v756, %v759
      %vm761 = vweird.f32 %v684
      %vm762 = vweird.f32 %v756
      %vm763 = vmor %vm761, %vm762
      %v764 = vsel %vm763, %v756, %v760
      %v765 = vand.u32 2147483647, %v684
      %vm766 = vcmp.eq.f32.partialorder %v765, 8.507059e+37
      %v767 = vand.u32 %v684, 2147483648
      %v768 = vor.u32 1.1754944e-38, %v767
      %v769 = vsel %vm766, %v768, %v764
      %v770 = vmul.f32 1.0, %v769
      %v771 = vrcp.pop %v685
      %v772 = vmul.f32 %v685, %v771
      %v773 = vsub.f32 1.0, %v772
      %v774 = vmul.f32 %v771, %v773
      %v775 = vadd.f32 %v771, %v774
      %vm776 = vweird.f32 %v685
      %vm777 = vweird.f32 %v771
      %vm778 = vmor %vm776, %vm777
      %v779 = vsel %vm778, %v771, %v775
      %v780 = vand.u32 2147483647, %v685
      %vm781 = vcmp.eq.f32.partialorder %v780, 8.507059e+37
      %v782 = vand.u32 %v685, 2147483648
      %v783 = vor.u32 1.1754944e-38, %v782
      %v784 = vsel %vm781, %v783, %v779
      %v785 = vmul.f32 1.0, %v784
      %v786 = vrcp.pop %v686
      %v787 = vmul.f32 %v686, %v786
      %v788 = vsub.f32 1.0, %v787
      %v789 = vmul.f32 %v786, %v788
      %v790 = vadd.f32 %v786, %v789
      %vm791 = vweird.f32 %v686
      %vm792 = vweird.f32 %v786
      %vm793 = vmor %vm791, %vm792
      %v794 = vsel %vm793, %v786, %v790
      %v795 = vand.u32 2147483647, %v686
      %vm796 = vcmp.eq.f32.partialorder %v795, 8.507059e+37
      %v797 = vand.u32 %v686, 2147483648
      %v798 = vor.u32 1.1754944e-38, %v797
      %v799 = vsel %vm796, %v798, %v794
      %v800 = vmul.f32 1.0, %v799
      %v801 = vrcp.pop %v687
      %v802 = vmul.f32 %v687, %v801
      %v803 = vsub.f32 1.0, %v802
      %v804 = vmul.f32 %v801, %v803
      %v805 = vadd.f32 %v801, %v804
      %vm806 = vweird.f32 %v687
      %vm807 = vweird.f32 %v801
      %vm808 = vmor %vm806, %vm807
      %v809 = vsel %vm808, %v801, %v805
      %v810 = vand.u32 2147483647, %v687
      %vm811 = vcmp.eq.f32.partialorder %v810, 8.507059e+37
      %v812 = vand.u32 %v687, 2147483648
      %v813 = vor.u32 1.1754944e-38, %v812
      %v814 = vsel %vm811, %v813, %v809
      %v815 = vmul.f32 1.0, %v814
      %v816 = vrcp.pop %v688
      %v817 = vmul.f32 %v688, %v816
      %v818 = vsub.f32 1.0, %v817
      %v819 = vmul.f32 %v816, %v818
      %v820 = vadd.f32 %v816, %v819
      %vm821 = vweird.f32 %v688
      %vm822 = vweird.f32 %v816
      %vm823 = vmor %vm821, %vm822
      %v824 = vsel %vm823, %v816, %v820
      %v825 = vand.u32 2147483647, %v688
      %vm826 = vcmp.eq.f32.partialorder %v825, 8.507059e+37
      %v827 = vand.u32 %v688, 2147483648
      %v828 = vor.u32 1.1754944e-38, %v827
      %v829 = vsel %vm826, %v828, %v824
      %v830 = vmul.f32 1.0, %v829
      %v831 = vrcp.pop %v689
      %v832 = vmul.f32 %v689, %v831
      %v833 = vsub.f32 1.0, %v832
      %v834 = vmul.f32 %v831, %v833
      %v835 = vadd.f32 %v831, %v834
      %vm836 = vweird.f32 %v689
      %vm837 = vweird.f32 %v831
      %vm838 = vmor %vm836, %vm837
      %v839 = vsel %vm838, %v831, %v835
      %v840 = vand.u32 2147483647, %v689
      %vm841 = vcmp.eq.f32.partialorder %v840, 8.507059e+37
      %v842 = vand.u32 %v689, 2147483648
      %v843 = vor.u32 1.1754944e-38, %v842
      %v844 = vsel %vm841, %v843, %v839
      %v845 = vmul.f32 1.0, %v844
      %v846 = vrcp.pop %v690
      %v847 = vmul.f32 %v690, %v846
      %v848 = vsub.f32 1.0, %v847
      %v849 = vmul.f32 %v846, %v848
      %v850 = vadd.f32 %v846, %v849
      %vm851 = vweird.f32 %v690
      %vm852 = vweird.f32 %v846
      %vm853 = vmor %vm851, %vm852
      %v854 = vsel %vm853, %v846, %v850
      %v855 = vand.u32 2147483647, %v690
      %vm856 = vcmp.eq.f32.partialorder %v855, 8.507059e+37
      %v857 = vand.u32 %v690, 2147483648
      %v858 = vor.u32 1.1754944e-38, %v857
      %v859 = vsel %vm856, %v858, %v854
      %v860 = vmul.f32 1.0, %v859
      %v861 = vrcp.pop %v691
      %v862 = vmul.f32 %v691, %v861
      %v863 = vsub.f32 1.0, %v862
      %v864 = vmul.f32 %v861, %v863
      %v865 = vadd.f32 %v861, %v864
      %vm866 = vweird.f32 %v691
      %vm867 = vweird.f32 %v861
      %vm868 = vmor %vm866, %vm867
      %v869 = vsel %vm868, %v861, %v865
      %v870 = vand.u32 2147483647, %v691
      %vm871 = vcmp.eq.f32.partialorder %v870, 8.507059e+37
      %v872 = vand.u32 %v691, 2147483648
      %v873 = vor.u32 1.1754944e-38, %v872
      %v874 = vsel %vm871, %v873, %v869
      %v875 = vmul.f32 1.0, %v874
      %v876 = vrcp.pop %v692
      %v877 = vmul.f32 %v692, %v876
      %v878 = vsub.f32 1.0, %v877
      %v879 = vmul.f32 %v876, %v878
      %v880 = vadd.f32 %v876, %v879
      %vm881 = vweird.f32 %v692
      %vm882 = vweird.f32 %v876
      %vm883 = vmor %vm881, %vm882
      %v884 = vsel %vm883, %v876, %v880
      %v885 = vand.u32 2147483647, %v692
      %vm886 = vcmp.eq.f32.partialorder %v885, 8.507059e+37
      %v887 = vand.u32 %v692, 2147483648
      %v888 = vor.u32 1.1754944e-38, %v887
      %v889 = vsel %vm886, %v888, %v884
      %v890 = vmul.f32 1.0, %v889
      %v891 = vrcp.pop %v693
      %v892 = vmul.f32 %v693, %v891
      %v893 = vsub.f32 1.0, %v892
      %v894 = vmul.f32 %v891, %v893
      %v895 = vadd.f32 %v891, %v894
      %vm896 = vweird.f32 %v693
      %vm897 = vweird.f32 %v891
      %vm898 = vmor %vm896, %vm897
      %v899 = vsel %vm898, %v891, %v895
      %v900 = vand.u32 2147483647, %v693
      %vm901 = vcmp.eq.f32.partialorder %v900, 8.507059e+37
      %v902 = vand.u32 %v693, 2147483648
      %v903 = vor.u32 1.1754944e-38, %v902
      %v904 = vsel %vm901, %v903, %v899
      %v905 = vmul.f32 1.0, %v904
      %v906 = vrcp.pop %v694
      %v907 = vmul.f32 %v694, %v906
      %v908 = vsub.f32 1.0, %v907
      %v909 = vmul.f32 %v906, %v908
      %v910 = vadd.f32 %v906, %v909
      %vm911 = vweird.f32 %v694
      %vm912 = vweird.f32 %v906
      %vm913 = vmor %vm911, %vm912
      %v914 = vsel %vm913, %v906, %v910
      %v915 = vand.u32 2147483647, %v694
      %vm916 = vcmp.eq.f32.partialorder %v915, 8.507059e+37
      %v917 = vand.u32 %v694, 2147483648
      %v918 = vor.u32 1.1754944e-38, %v917
      %v919 = vsel %vm916, %v918, %v914
      %v920 = vmul.f32 1.0, %v919
      %v921 = vrcp.pop %v695
      %v922 = vmul.f32 %v695, %v921
      %v923 = vsub.f32 1.0, %v922
      %v924 = vmul.f32 %v921, %v923
      %v925 = vadd.f32 %v921, %v924
      %vm926 = vweird.f32 %v695
      %vm927 = vweird.f32 %v921
      %vm928 = vmor %vm926, %vm927
      %v929 = vsel %vm928, %v921, %v925
      %v930 = vand.u32 2147483647, %v695
      %vm931 = vcmp.eq.f32.partialorder %v930, 8.507059e+37
      %v932 = vand.u32 %v695, 2147483648
      %v933 = vor.u32 1.1754944e-38, %v932
      %v934 = vsel %vm931, %v933, %v929
      %v935 = vmul.f32 1.0, %v934
      %v936 = vadd.f32 %v309, %v504
      %v937 = vadd.f32 %v312, %v507
      %v938 = vadd.f32 %v315, %v510
      %v939 = vadd.f32 %v318, %v513
      %v940 = vadd.f32 %v321, %v516
      %v941 = vadd.f32 %v324, %v519
      %v942 = vadd.f32 %v327, %v522
      %v943 = vadd.f32 %v330, %v525
      %v944 = vadd.f32 %v333, %v528
      %v945 = vadd.f32 %v336, %v531
      %v946 = vadd.f32 %v339, %v534
      %v947 = vadd.f32 %v342, %v537
      %v948 = vadd.f32 %v345, %v540
      %v949 = vadd.f32 %v348, %v543
      %v950 = vadd.f32 %v351, %v546
      %v951 = vadd.f32 %v354, %v549
      %v952 = vxor.u32 %v936, 2147483648
      %v953 = vxor.u32 %v937, 2147483648
      %v954 = vxor.u32 %v938, 2147483648
      %v955 = vxor.u32 %v939, 2147483648
      %v956 = vxor.u32 %v940, 2147483648
      %v957 = vxor.u32 %v941, 2147483648
      %v958 = vxor.u32 %v942, 2147483648
      %v959 = vxor.u32 %v943, 2147483648
      %v960 = vxor.u32 %v944, 2147483648
      %v961 = vxor.u32 %v945, 2147483648
      %v962 = vxor.u32 %v946, 2147483648
      %v963 = vxor.u32 %v947, 2147483648
      %v964 = vxor.u32 %v948, 2147483648
      %v965 = vxor.u32 %v949, 2147483648
      %v966 = vxor.u32 %v950, 2147483648
      %v967 = vxor.u32 %v951, 2147483648
      %v968 = vmul.f32 %v952, 1.442695
      %v969 = vpow.pop %v968
      %v970 = vmul.f32 %v953, 1.442695
      %v971 = vpow.pop %v970
      %v972 = vmul.f32 %v954, 1.442695
      %v973 = vpow.pop %v972
      %v974 = vmul.f32 %v955, 1.442695
      %v975 = vpow.pop %v974
      %v976 = vmul.f32 %v956, 1.442695
      %v977 = vpow.pop %v976
      %v978 = vmul.f32 %v957, 1.442695
      %v979 = vpow.pop %v978
      %v980 = vmul.f32 %v958, 1.442695
      %v981 = vpow.pop %v980
      %v982 = vmul.f32 %v959, 1.442695
      %v983 = vpow.pop %v982
      %v984 = vmul.f32 %v960, 1.442695
      %v985 = vpow.pop %v984
      %v986 = vmul.f32 %v961, 1.442695
      %v987 = vpow.pop %v986
      %v988 = vmul.f32 %v962, 1.442695
      %v989 = vpow.pop %v988
      %v990 = vmul.f32 %v963, 1.442695
      %v991 = vpow.pop %v990
      %v992 = vmul.f32 %v964, 1.442695
      %v993 = vpow.pop %v992
      %v994 = vmul.f32 %v965, 1.442695
      %v995 = vpow.pop %v994
      %v996 = vmul.f32 %v966, 1.442695
      %v997 = vpow.pop %v996
      %v998 = vmul.f32 %v967, 1.442695
      %v999 = vpow.pop %v998
      %v1000 = vadd.f32 %v969, 1.0
      %v1001 = vadd.f32 %v971, 1.0
      %v1002 = vadd.f32 %v973, 1.0
      %v1003 = vadd.f32 %v975, 1.0
      %v1004 = vadd.f32 %v977, 1.0
      %v1005 = vadd.f32 %v979, 1.0
      %v1006 = vadd.f32 %v981, 1.0
      %v1007 = vadd.f32 %v983, 1.0
      %v1008 = vadd.f32 %v985, 1.0
      %v1009 = vadd.f32 %v987, 1.0
      %v1010 = vadd.f32 %v989, 1.0
      %v1011 = vadd.f32 %v991, 1.0
      %v1012 = vadd.f32 %v993, 1.0
      %v1013 = vadd.f32 %v995, 1.0
      %v1014 = vadd.f32 %v997, 1.0
      %v1015 = vadd.f32 %v999, 1.0
      %v1016 = vrcp.pop %v1000
      %v1017 = vmul.f32 %v1000, %v1016
      %v1018 = vsub.f32 1.0, %v1017
      %v1019 = vmul.f32 %v1016, %v1018
      %v1020 = vadd.f32 %v1016, %v1019
      %vm1021 = vweird.f32 %v1000
      %vm1022 = vweird.f32 %v1016
      %vm1023 = vmor %vm1021, %vm1022
      %v1024 = vsel %vm1023, %v1016, %v1020
      %v1025 = vand.u32 2147483647, %v1000
      %vm1026 = vcmp.eq.f32.partialorder %v1025, 8.507059e+37
      %v1027 = vand.u32 %v1000, 2147483648
      %v1028 = vor.u32 1.1754944e-38, %v1027
      %v1029 = vsel %vm1026, %v1028, %v1024
      %v1030 = vmul.f32 1.0, %v1029
      %v1031 = vrcp.pop %v1001
      %v1032 = vmul.f32 %v1001, %v1031
      %v1033 = vsub.f32 1.0, %v1032
      %v1034 = vmul.f32 %v1031, %v1033
      %v1035 = vadd.f32 %v1031, %v1034
      %vm1036 = vweird.f32 %v1001
      %vm1037 = vweird.f32 %v1031
      %vm1038 = vmor %vm1036, %vm1037
      %v1039 = vsel %vm1038, %v1031, %v1035
      %v1040 = vand.u32 2147483647, %v1001
      %vm1041 = vcmp.eq.f32.partialorder %v1040, 8.507059e+37
      %v1042 = vand.u32 %v1001, 2147483648
      %v1043 = vor.u32 1.1754944e-38, %v1042
      %v1044 = vsel %vm1041, %v1043, %v1039
      %v1045 = vmul.f32 1.0, %v1044
      %v1046 = vrcp.pop %v1002
      %v1047 = vmul.f32 %v1002, %v1046
      %v1048 = vsub.f32 1.0, %v1047
      %v1049 = vmul.f32 %v1046, %v1048
      %v1050 = vadd.f32 %v1046, %v1049
      %vm1051 = vweird.f32 %v1002
      %vm1052 = vweird.f32 %v1046
      %vm1053 = vmor %vm1051, %vm1052
      %v1054 = vsel %vm1053, %v1046, %v1050
      %v1055 = vand.u32 2147483647, %v1002
      %vm1056 = vcmp.eq.f32.partialorder %v1055, 8.507059e+37
      %v1057 = vand.u32 %v1002, 2147483648
      %v1058 = vor.u32 1.1754944e-38, %v1057
      %v1059 = vsel %vm1056, %v1058, %v1054
      %v1060 = vmul.f32 1.0, %v1059
      %v1061 = vrcp.pop %v1003
      %v1062 = vmul.f32 %v1003, %v1061
      %v1063 = vsub.f32 1.0, %v1062
      %v1064 = vmul.f32 %v1061, %v1063
      %v1065 = vadd.f32 %v1061, %v1064
      %vm1066 = vweird.f32 %v1003
      %vm1067 = vweird.f32 %v1061
      %vm1068 = vmor %vm1066, %vm1067
      %v1069 = vsel %vm1068, %v1061, %v1065
      %v1070 = vand.u32 2147483647, %v1003
      %vm1071 = vcmp.eq.f32.partialorder %v1070, 8.507059e+37
      %v1072 = vand.u32 %v1003, 2147483648
      %v1073 = vor.u32 1.1754944e-38, %v1072
      %v1074 = vsel %vm1071, %v1073, %v1069
      %v1075 = vmul.f32 1.0, %v1074
      %v1076 = vrcp.pop %v1004
      %v1077 = vmul.f32 %v1004, %v1076
      %v1078 = vsub.f32 1.0, %v1077
      %v1079 = vmul.f32 %v1076, %v1078
      %v1080 = vadd.f32 %v1076, %v1079
      %vm1081 = vweird.f32 %v1004
      %vm1082 = vweird.f32 %v1076
      %vm1083 = vmor %vm1081, %vm1082
      %v1084 = vsel %vm1083, %v1076, %v1080
      %v1085 = vand.u32 2147483647, %v1004
      %vm1086 = vcmp.eq.f32.partialorder %v1085, 8.507059e+37
      %v1087 = vand.u32 %v1004, 2147483648
      %v1088 = vor.u32 1.1754944e-38, %v1087
      %v1089 = vsel %vm1086, %v1088, %v1084
      %v1090 = vmul.f32 1.0, %v1089
      %v1091 = vrcp.pop %v1005
      %v1092 = vmul.f32 %v1005, %v1091
      %v1093 = vsub.f32 1.0, %v1092
      %v1094 = vmul.f32 %v1091, %v1093
      %v1095 = vadd.f32 %v1091, %v1094
      %vm1096 = vweird.f32 %v1005
      %vm1097 = vweird.f32 %v1091
      %vm1098 = vmor %vm1096, %vm1097
      %v1099 = vsel %vm1098, %v1091, %v1095
      %v1100 = vand.u32 2147483647, %v1005
      %vm1101 = vcmp.eq.f32.partialorder %v1100, 8.507059e+37
      %v1102 = vand.u32 %v1005, 2147483648
      %v1103 = vor.u32 1.1754944e-38, %v1102
      %v1104 = vsel %vm1101, %v1103, %v1099
      %v1105 = vmul.f32 1.0, %v1104
      %v1106 = vrcp.pop %v1006
      %v1107 = vmul.f32 %v1006, %v1106
      %v1108 = vsub.f32 1.0, %v1107
      %v1109 = vmul.f32 %v1106, %v1108
      %v1110 = vadd.f32 %v1106, %v1109
      %vm1111 = vweird.f32 %v1006
      %vm1112 = vweird.f32 %v1106
      %vm1113 = vmor %vm1111, %vm1112
      %v1114 = vsel %vm1113, %v1106, %v1110
      %v1115 = vand.u32 2147483647, %v1006
      %vm1116 = vcmp.eq.f32.partialorder %v1115, 8.507059e+37
      %v1117 = vand.u32 %v1006, 2147483648
      %v1118 = vor.u32 1.1754944e-38, %v1117
      %v1119 = vsel %vm1116, %v1118, %v1114
      %v1120 = vmul.f32 1.0, %v1119
      %v1121 = vrcp.pop %v1007
      %v1122 = vmul.f32 %v1007, %v1121
      %v1123 = vsub.f32 1.0, %v1122
      %v1124 = vmul.f32 %v1121, %v1123
      %v1125 = vadd.f32 %v1121, %v1124
      %vm1126 = vweird.f32 %v1007
      %vm1127 = vweird.f32 %v1121
      %vm1128 = vmor %vm1126, %vm1127
      %v1129 = vsel %vm1128, %v1121, %v1125
      %v1130 = vand.u32 2147483647, %v1007
      %vm1131 = vcmp.eq.f32.partialorder %v1130, 8.507059e+37
      %v1132 = vand.u32 %v1007, 2147483648
      %v1133 = vor.u32 1.1754944e-38, %v1132
      %v1134 = vsel %vm1131, %v1133, %v1129
      %v1135 = vmul.f32 1.0, %v1134
      %v1136 = vrcp.pop %v1008
      %v1137 = vmul.f32 %v1008, %v1136
      %v1138 = vsub.f32 1.0, %v1137
      %v1139 = vmul.f32 %v1136, %v1138
      %v1140 = vadd.f32 %v1136, %v1139
      %vm1141 = vweird.f32 %v1008
      %vm1142 = vweird.f32 %v1136
      %vm1143 = vmor %vm1141, %vm1142
      %v1144 = vsel %vm1143, %v1136, %v1140
      %v1145 = vand.u32 2147483647, %v1008
      %vm1146 = vcmp.eq.f32.partialorder %v1145, 8.507059e+37
      %v1147 = vand.u32 %v1008, 2147483648
      %v1148 = vor.u32 1.1754944e-38, %v1147
      %v1149 = vsel %vm1146, %v1148, %v1144
      %v1150 = vmul.f32 1.0, %v1149
      %v1151 = vrcp.pop %v1009
      %v1152 = vmul.f32 %v1009, %v1151
      %v1153 = vsub.f32 1.0, %v1152
      %v1154 = vmul.f32 %v1151, %v1153
      %v1155 = vadd.f32 %v1151, %v1154
      %vm1156 = vweird.f32 %v1009
      %vm1157 = vweird.f32 %v1151
      %vm1158 = vmor %vm1156, %vm1157
      %v1159 = vsel %vm1158, %v1151, %v1155
      %v1160 = vand.u32 2147483647, %v1009
      %vm1161 = vcmp.eq.f32.partialorder %v1160, 8.507059e+37
      %v1162 = vand.u32 %v1009, 2147483648
      %v1163 = vor.u32 1.1754944e-38, %v1162
      %v1164 = vsel %vm1161, %v1163, %v1159
      %v1165 = vmul.f32 1.0, %v1164
      %v1166 = vrcp.pop %v1010
      %v1167 = vmul.f32 %v1010, %v1166
      %v1168 = vsub.f32 1.0, %v1167
      %v1169 = vmul.f32 %v1166, %v1168
      %v1170 = vadd.f32 %v1166, %v1169
      %vm1171 = vweird.f32 %v1010
      %vm1172 = vweird.f32 %v1166
      %vm1173 = vmor %vm1171, %vm1172
      %v1174 = vsel %vm1173, %v1166, %v1170
      %v1175 = vand.u32 2147483647, %v1010
      %vm1176 = vcmp.eq.f32.partialorder %v1175, 8.507059e+37
      %v1177 = vand.u32 %v1010, 2147483648
      %v1178 = vor.u32 1.1754944e-38, %v1177
      %v1179 = vsel %vm1176, %v1178, %v1174
      %v1180 = vmul.f32 1.0, %v1179
      %v1181 = vrcp.pop %v1011
      %v1182 = vmul.f32 %v1011, %v1181
      %v1183 = vsub.f32 1.0, %v1182
      %v1184 = vmul.f32 %v1181, %v1183
      %v1185 = vadd.f32 %v1181, %v1184
      %vm1186 = vweird.f32 %v1011
      %vm1187 = vweird.f32 %v1181
      %vm1188 = vmor %vm1186, %vm1187
      %v1189 = vsel %vm1188, %v1181, %v1185
      %v1190 = vand.u32 2147483647, %v1011
      %vm1191 = vcmp.eq.f32.partialorder %v1190, 8.507059e+37
      %v1192 = vand.u32 %v1011, 2147483648
      %v1193 = vor.u32 1.1754944e-38, %v1192
      %v1194 = vsel %vm1191, %v1193, %v1189
      %v1195 = vmul.f32 1.0, %v1194
      %v1196 = vrcp.pop %v1012
      %v1197 = vmul.f32 %v1012, %v1196
      %v1198 = vsub.f32 1.0, %v1197
      %v1199 = vmul.f32 %v1196, %v1198
      %v1200 = vadd.f32 %v1196, %v1199
      %vm1201 = vweird.f32 %v1012
      %vm1202 = vweird.f32 %v1196
      %vm1203 = vmor %vm1201, %vm1202
      %v1204 = vsel %vm1203, %v1196, %v1200
      %v1205 = vand.u32 2147483647, %v1012
      %vm1206 = vcmp.eq.f32.partialorder %v1205, 8.507059e+37
      %v1207 = vand.u32 %v1012, 2147483648
      %v1208 = vor.u32 1.1754944e-38, %v1207
      %v1209 = vsel %vm1206, %v1208, %v1204
      %v1210 = vmul.f32 1.0, %v1209
      %v1211 = vrcp.pop %v1013
      %v1212 = vmul.f32 %v1013, %v1211
      %v1213 = vsub.f32 1.0, %v1212
      %v1214 = vmul.f32 %v1211, %v1213
      %v1215 = vadd.f32 %v1211, %v1214
      %vm1216 = vweird.f32 %v1013
      %vm1217 = vweird.f32 %v1211
      %vm1218 = vmor %vm1216, %vm1217
      %v1219 = vsel %vm1218, %v1211, %v1215
      %v1220 = vand.u32 2147483647, %v1013
      %vm1221 = vcmp.eq.f32.partialorder %v1220, 8.507059e+37
      %v1222 = vand.u32 %v1013, 2147483648
      %v1223 = vor.u32 1.1754944e-38, %v1222
      %v1224 = vsel %vm1221, %v1223, %v1219
      %v1225 = vmul.f32 1.0, %v1224
      %v1226 = vrcp.pop %v1014
      %v1227 = vmul.f32 %v1014, %v1226
      %v1228 = vsub.f32 1.0, %v1227
      %v1229 = vmul.f32 %v1226, %v1228
      %v1230 = vadd.f32 %v1226, %v1229
      %vm1231 = vweird.f32 %v1014
      %vm1232 = vweird.f32 %v1226
      %vm1233 = vmor %vm1231, %vm1232
      %v1234 = vsel %vm1233, %v1226, %v1230
      %v1235 = vand.u32 2147483647, %v1014
      %vm1236 = vcmp.eq.f32.partialorder %v1235, 8.507059e+37
      %v1237 = vand.u32 %v1014, 2147483648
      %v1238 = vor.u32 1.1754944e-38, %v1237
      %v1239 = vsel %vm1236, %v1238, %v1234
      %v1240 = vmul.f32 1.0, %v1239
      %v1241 = vrcp.pop %v1015
      %v1242 = vmul.f32 %v1015, %v1241
      %v1243 = vsub.f32 1.0, %v1242
      %v1244 = vmul.f32 %v1241, %v1243
      %v1245 = vadd.f32 %v1241, %v1244
      %vm1246 = vweird.f32 %v1015
      %vm1247 = vweird.f32 %v1241
      %vm1248 = vmor %vm1246, %vm1247
      %v1249 = vsel %vm1248, %v1241, %v1245
      %v1250 = vand.u32 2147483647, %v1015
      %vm1251 = vcmp.eq.f32.partialorder %v1250, 8.507059e+37
      %v1252 = vand.u32 %v1015, 2147483648
      %v1253 = vor.u32 1.1754944e-38, %v1252
      %v1254 = vsel %vm1251, %v1253, %v1249
      %v1255 = vmul.f32 1.0, %v1254
      %v1256 = vmul.f32 %v710, %v569
      %v1257 = vmul.f32 %v725, %v572
      %v1258 = vmul.f32 %v740, %v575
      %v1259 = vmul.f32 %v755, %v578
      %v1260 = vmul.f32 %v770, %v581
      %v1261 = vmul.f32 %v785, %v584
      %v1262 = vmul.f32 %v800, %v587
      %v1263 = vmul.f32 %v815, %v590
      %v1264 = vmul.f32 %v830, %v593
      %v1265 = vmul.f32 %v845, %v596
      %v1266 = vmul.f32 %v860, %v599
      %v1267 = vmul.f32 %v875, %v602
      %v1268 = vmul.f32 %v890, %v605
      %v1269 = vmul.f32 %v905, %v608
      %v1270 = vmul.f32 %v920, %v611
      %v1271 = vmul.f32 %v935, %v614
      %v1272 = vadd.f32 %v374, %v1256
      %v1273 = vadd.f32 %v377, %v1257
      %v1274 = vadd.f32 %v380, %v1258
      %v1275 = vadd.f32 %v383, %v1259
      %v1276 = vadd.f32 %v386, %v1260
      %v1277 = vadd.f32 %v389, %v1261
      %v1278 = vadd.f32 %v392, %v1262
      %v1279 = vadd.f32 %v395, %v1263
      %v1280 = vadd.f32 %v398, %v1264
      %v1281 = vadd.f32 %v401, %v1265
      %v1282 = vadd.f32 %v404, %v1266
      %v1283 = vadd.f32 %v407, %v1267
      %v1284 = vadd.f32 %v410, %v1268
      %v1285 = vadd.f32 %v413, %v1269
      %v1286 = vadd.f32 %v416, %v1270
      %v1287 = vadd.f32 %v419, %v1271
      %v1288 = vtanh.pop %v1272
      %v1289 = vtanh.pop %v1273
      %v1290 = vtanh.pop %v1274
      %v1291 = vtanh.pop %v1275
      %v1292 = vtanh.pop %v1276
      %v1293 = vtanh.pop %v1277
      %v1294 = vtanh.pop %v1278
      %v1295 = vtanh.pop %v1279
      %v1296 = vtanh.pop %v1280
      %v1297 = vtanh.pop %v1281
      %v1298 = vtanh.pop %v1282
      %v1299 = vtanh.pop %v1283
      %v1300 = vtanh.pop %v1284
      %v1301 = vtanh.pop %v1285
      %v1302 = vtanh.pop %v1286
      %v1303 = vtanh.pop %v1287
      %v1304 = vsub.f32 1.0, %v1030
      %v1305 = vsub.f32 1.0, %v1045
      %v1306 = vsub.f32 1.0, %v1060
      %v1307 = vsub.f32 1.0, %v1075
      %v1308 = vsub.f32 1.0, %v1090
      %v1309 = vsub.f32 1.0, %v1105
      %v1310 = vsub.f32 1.0, %v1120
      %v1311 = vsub.f32 1.0, %v1135
      %v1312 = vsub.f32 1.0, %v1150
      %v1313 = vsub.f32 1.0, %v1165
      %v1314 = vsub.f32 1.0, %v1180
      %v1315 = vsub.f32 1.0, %v1195
      %v1316 = vsub.f32 1.0, %v1210
      %v1317 = vsub.f32 1.0, %v1225
      %v1318 = vsub.f32 1.0, %v1240
      %v1319 = vsub.f32 1.0, %v1255
      %v1320 = vmul.f32 %v1304, %v1288
      %v1321 = vmul.f32 %v1305, %v1289
      %v1322 = vmul.f32 %v1306, %v1290
      %v1323 = vmul.f32 %v1307, %v1291
      %v1324 = vmul.f32 %v1308, %v1292
      %v1325 = vmul.f32 %v1309, %v1293
      %v1326 = vmul.f32 %v1310, %v1294
      %v1327 = vmul.f32 %v1311, %v1295
      %v1328 = vmul.f32 %v1312, %v1296
      %v1329 = vmul.f32 %v1313, %v1297
      %v1330 = vmul.f32 %v1314, %v1298
      %v1331 = vmul.f32 %v1315, %v1299
      %v1332 = vmul.f32 %v1316, %v1300
      %v1333 = vmul.f32 %v1317, %v1301
      %v1334 = vmul.f32 %v1318, %v1302
      %v1335 = vmul.f32 %v1319, %v1303
      %v1336 = vmul.f32 %v1030, %v100
      %v1337 = vmul.f32 %v1045, %v101
      %v1338 = vmul.f32 %v1060, %v102
      %v1339 = vmul.f32 %v1075, %v103
      %v1340 = vmul.f32 %v1090, %v104
      %v1341 = vmul.f32 %v1105, %v105
      %v1342 = vmul.f32 %v1120, %v106
      %v1343 = vmul.f32 %v1135, %v107
      %v1344 = vmul.f32 %v1150, %v108
      %v1345 = vmul.f32 %v1165, %v109
      %v1346 = vmul.f32 %v1180, %v110
      %v1347 = vmul.f32 %v1195, %v111
      %v1348 = vmul.f32 %v1210, %v112
      %v1349 = vmul.f32 %v1225, %v113
      %v1350 = vmul.f32 %v1240, %v114
      %v1351 = vmul.f32 %v1255, %v115
      %v1352 = vadd.f32 %v1320, %v1336
      %v1353 = vadd.f32 %v1321, %v1337
      %v1354 = vadd.f32 %v1322, %v1338
      %v1355 = vadd.f32 %v1323, %v1339
      %v1356 = vadd.f32 %v1324, %v1340
      %v1357 = vadd.f32 %v1325, %v1341
      %v1358 = vadd.f32 %v1326, %v1342
      %v1359 = vadd.f32 %v1327, %v1343
      %v1360 = vadd.f32 %v1328, %v1344
      %v1361 = vadd.f32 %v1329, %v1345
      %v1362 = vadd.f32 %v1330, %v1346
      %v1363 = vadd.f32 %v1331, %v1347
      %v1364 = vadd.f32 %v1332, %v1348
      %v1365 = vadd.f32 %v1333, %v1349
      %v1366 = vadd.f32 %v1334, %v1350
      %v1367 = vadd.f32 %v1335, %v1351
      %v1368 = vpack.c.bf16 %v1352, %v1352
      %v1369 = vpack.c.bf16 %v1353, %v1353
      %v1370 = vpack.c.bf16 %v1354, %v1354
      %v1371 = vpack.c.bf16 %v1355, %v1355
      %v1372 = vpack.c.bf16 %v1356, %v1356
      %v1373 = vpack.c.bf16 %v1357, %v1357
      %v1374 = vpack.c.bf16 %v1358, %v1358
      %v1375 = vpack.c.bf16 %v1359, %v1359
      %v1376 = vpack.c.bf16 %v1360, %v1360
      %v1377 = vpack.c.bf16 %v1361, %v1361
      %v1378 = vpack.c.bf16 %v1362, %v1362
      %v1379 = vpack.c.bf16 %v1363, %v1363
      %v1380 = vpack.c.bf16 %v1364, %v1364
      %v1381 = vpack.c.bf16 %v1365, %v1365
      %v1382 = vpack.c.bf16 %v1366, %v1366
      %v1383 = vpack.c.bf16 %v1367, %v1367
      %1384 = vst [vmem:[#allocation2] sm:$0xf] %v1368
      %1385 = vst [vmem:[#allocation2 + $0x4] sm:$0xf] %v1369
      %1386 = vst [vmem:[#allocation2 + $0x8] sm:$0xf] %v1370
      %1387 = vst [vmem:[#allocation2 + $0xc] sm:$0xf] %v1371
      %1388 = vst [vmem:[#allocation2 + $0x10] sm:$0xf] %v1372
      %1389 = vst [vmem:[#allocation2 + $0x14] sm:$0xf] %v1373
      %1390 = vst [vmem:[#allocation2 + $0x18] sm:$0xf] %v1374
      %1391 = vst [vmem:[#allocation2 + $0x1c] sm:$0xf] %v1375
      %1392 = vst [vmem:[#allocation2 + $0x20] sm:$0xf] %v1376
      %1393 = vst [vmem:[#allocation2 + $0x24] sm:$0xf] %v1377
      %1394 = vst [vmem:[#allocation2 + $0x28] sm:$0xf] %v1378
      %1395 = vst [vmem:[#allocation2 + $0x2c] sm:$0xf] %v1379
      %1396 = vst [vmem:[#allocation2 + $0x30] sm:$0xf] %v1380
      %1397 = vst [vmem:[#allocation2 + $0x34] sm:$0xf] %v1381
      %1398 = vst [vmem:[#allocation2 + $0x38] sm:$0xf] %v1382
      %1399 = vst [vmem:[#allocation2 + $0x3c] sm:$0xf] %v1383
      %1400 = vst [vmem:[#allocation3] sm:$0xff] 0.0
      %1401 = vst [vmem:[#allocation3 + $0x8] sm:$0xff] 0.0
      %1402 = vst [vmem:[#allocation3 + $0x10] sm:$0xff] 0.0
      %1403 = vst [vmem:[#allocation3 + $0x18] sm:$0xff] 0.0
      %1404 = vst [vmem:[#allocation3 + $0x20] sm:$0xff] 0.0
      %1405 = vst [vmem:[#allocation3 + $0x28] sm:$0xff] 0.0
      %1406 = vst [vmem:[#allocation3 + $0x30] sm:$0xff] 0.0
      %1407 = vst [vmem:[#allocation3 + $0x38] sm:$0xff] 0.0
      %1408 = vst [vmem:[#allocation3 + $0x40] sm:$0xff] 0.0
      %1409 = vst [vmem:[#allocation3 + $0x48] sm:$0xff] 0.0
      %1410 = vst [vmem:[#allocation3 + $0x50] sm:$0xff] 0.0
      %1411 = vst [vmem:[#allocation3 + $0x58] sm:$0xff] 0.0
      %1412 = vst [vmem:[#allocation3 + $0x60] sm:$0xff] 0.0
      %1413 = vst [vmem:[#allocation3 + $0x68] sm:$0xff] 0.0
      %1414 = vst [vmem:[#allocation3 + $0x70] sm:$0xff] 0.0
      %1415 = vst [vmem:[#allocation3 + $0x78] sm:$0xff] 0.0
    $region45: #{recurrent_gcn_forward.2} parent=1 // pred_fallthru
      _
    %v1416 = vld [vmem:[#allocation3] sm:$0xff]
    %v1417 = vld [vmem:[#allocation3 + $0x8] sm:$0xff]
    %v1418 = vld [vmem:[#allocation3 + $0x10] sm:$0xff]
    %v1419 = vld [vmem:[#allocation3 + $0x18] sm:$0xff]
    %v1420 = vld [vmem:[#allocation3 + $0x20] sm:$0xff]
    %v1421 = vld [vmem:[#allocation3 + $0x28] sm:$0xff]
    %v1422 = vld [vmem:[#allocation3 + $0x30] sm:$0xff]
    %v1423 = vld [vmem:[#allocation3 + $0x38] sm:$0xff]
    %v1424 = vld [vmem:[#allocation3 + $0x40] sm:$0xff]
    %v1425 = vld [vmem:[#allocation3 + $0x48] sm:$0xff]
    %v1426 = vld [vmem:[#allocation3 + $0x50] sm:$0xff]
    %v1427 = vld [vmem:[#allocation3 + $0x58] sm:$0xff]
    %v1428 = vld [vmem:[#allocation3 + $0x60] sm:$0xff]
    %v1429 = vld [vmem:[#allocation3 + $0x68] sm:$0xff]
    %v1430 = vld [vmem:[#allocation3 + $0x70] sm:$0xff]
    %v1431 = vld [vmem:[#allocation3 + $0x78] sm:$0xff]
    %v1432 = vld [vmem:[#allocation9] sm:$0xf]
    %v1433 = vld [vmem:[#allocation9 + $0x4] sm:$0xf]
    %v1434 = vld [vmem:[#allocation9 + $0x8] sm:$0xf]
    %v1435 = vld [vmem:[#allocation9 + $0xc] sm:$0xf]
    %v1436 = vld [vmem:[#allocation9 + $0x10] sm:$0xf]
    %v1437 = vld [vmem:[#allocation9 + $0x14] sm:$0xf]
    %v1438 = vld [vmem:[#allocation9 + $0x18] sm:$0xf]
    %v1439 = vld [vmem:[#allocation9 + $0x1c] sm:$0xf]
    %v1440 = vld [vmem:[#allocation9 + $0x20] sm:$0xf]
    %v1441 = vld [vmem:[#allocation9 + $0x24] sm:$0xf]
    %v1442 = vld [vmem:[#allocation9 + $0x28] sm:$0xf]
    %v1443 = vld [vmem:[#allocation9 + $0x2c] sm:$0xf]
    %v1444 = vld [vmem:[#allocation9 + $0x30] sm:$0xf]
    %v1445 = vld [vmem:[#allocation9 + $0x34] sm:$0xf]
    %v1446 = vld [vmem:[#allocation9 + $0x38] sm:$0xf]
    %v1447 = vld [vmem:[#allocation9 + $0x3c] sm:$0xf]
    %v1448 = vld [vmem:[#allocation11] sm:$0xf]
    %v1449 = vld [vmem:[#allocation11 + $0x4] sm:$0xf]
    %v1450 = vld [vmem:[#allocation11 + $0x8] sm:$0xf]
    %v1451 = vld [vmem:[#allocation11 + $0xc] sm:$0xf]
    %v1452 = vld [vmem:[#allocation11 + $0x10] sm:$0xf]
    %v1453 = vld [vmem:[#allocation11 + $0x14] sm:$0xf]
    %v1454 = vld [vmem:[#allocation11 + $0x18] sm:$0xf]
    %v1455 = vld [vmem:[#allocation11 + $0x1c] sm:$0xf]
    %v1456 = vld [vmem:[#allocation11 + $0x20] sm:$0xf]
    %v1457 = vld [vmem:[#allocation11 + $0x24] sm:$0xf]
    %v1458 = vld [vmem:[#allocation11 + $0x28] sm:$0xf]
    %v1459 = vld [vmem:[#allocation11 + $0x2c] sm:$0xf]
    %v1460 = vld [vmem:[#allocation11 + $0x30] sm:$0xf]
    %v1461 = vld [vmem:[#allocation11 + $0x34] sm:$0xf]
    %v1462 = vld [vmem:[#allocation11 + $0x38] sm:$0xf]
    %v1463 = vld [vmem:[#allocation11 + $0x3c] sm:$0xf]
    %v1480 = vunpack.c.l.b16 %v1432
    %v1481 = vunpack.c.l.b16 %v1433
    %v1482 = vunpack.c.l.b16 %v1434
    %v1483 = vunpack.c.l.b16 %v1435
    %v1484 = vunpack.c.l.b16 %v1436
    %v1485 = vunpack.c.l.b16 %v1437
    %v1486 = vunpack.c.l.b16 %v1438
    %v1487 = vunpack.c.l.b16 %v1439
    %v1488 = vunpack.c.l.b16 %v1440
    %v1489 = vunpack.c.l.b16 %v1441
    %v1490 = vunpack.c.l.b16 %v1442
    %v1491 = vunpack.c.l.b16 %v1443
    %v1492 = vunpack.c.l.b16 %v1444
    %v1493 = vunpack.c.l.b16 %v1445
    %v1494 = vunpack.c.l.b16 %v1446
    %v1495 = vunpack.c.l.b16 %v1447
    %v1496 = vpack.c.b16 %v1481, %v1480
    %v1497 = vpack.c.b16 %v1483, %v1482
    %v1498 = vpack.c.b16 %v1485, %v1484
    %v1499 = vpack.c.b16 %v1487, %v1486
    %v1500 = vpack.c.b16 %v1489, %v1488
    %v1501 = vpack.c.b16 %v1491, %v1490
    %v1502 = vpack.c.b16 %v1493, %v1492
    %v1503 = vpack.c.b16 %v1495, %v1494
    %v1528 = vunpack.c.l.b16 %v1448
    %v1529 = vunpack.c.l.b16 %v1449
    %v1530 = vunpack.c.l.b16 %v1450
    %v1531 = vunpack.c.l.b16 %v1451
    %v1532 = vunpack.c.l.b16 %v1452
    %v1533 = vunpack.c.l.b16 %v1453
    %v1534 = vunpack.c.l.b16 %v1454
    %v1535 = vunpack.c.l.b16 %v1455
    %v1536 = vunpack.c.l.b16 %v1456
    %v1537 = vunpack.c.l.b16 %v1457
    %v1538 = vunpack.c.l.b16 %v1458
    %v1539 = vunpack.c.l.b16 %v1459
    %v1540 = vunpack.c.l.b16 %v1460
    %v1541 = vunpack.c.l.b16 %v1461
    %v1542 = vunpack.c.l.b16 %v1462
    %v1543 = vunpack.c.l.b16 %v1463
    %v1544 = vpack.c.b16 %v1529, %v1528
    %v1545 = vpack.c.b16 %v1531, %v1530
    %v1546 = vpack.c.b16 %v1533, %v1532
    %v1547 = vpack.c.b16 %v1535, %v1534
    %v1548 = vpack.c.b16 %v1537, %v1536
    %v1549 = vpack.c.b16 %v1539, %v1538
    %v1550 = vpack.c.b16 %v1541, %v1540
    %v1551 = vpack.c.b16 %v1543, %v1542
    %1560 = vmatpush.bf16.msra.mxu0 %v1551
    %1561 = vmatpush.bf16.msra.mxu0 %v1550
    %1562 = vmatpush.bf16.msra.mxu0 %v1549
    %1563 = vmatpush.bf16.msra.mxu0 %v1548
    %1564 = vmatpush.bf16.msra.mxu0 %v1547
    %1565 = vmatpush.bf16.msra.mxu0 %v1546
    %1566 = vmatpush.bf16.msra.mxu0 %v1545
    %1567 = vmatpush.bf16.msra.mxu0 %v1544
    %1568 = vmatmul.bf16.gmra.mxu0 %v1496
    %v1569 = vpop.f32.mrf.mxu0
    %v1570 = vadd.f32 0.0, %v1569
    %v1571 = vpop.f32.mrf.mxu0
    %v1572 = vadd.f32 0.0, %v1571
    %1573 = vmatmul.bf16.gmra.mxu0 %v1497
    %v1574 = vpop.f32.mrf.mxu0
    %v1575 = vadd.f32 0.0, %v1574
    %v1576 = vpop.f32.mrf.mxu0
    %v1577 = vadd.f32 0.0, %v1576
    %1578 = vmatmul.bf16.gmra.mxu0 %v1498
    %v1579 = vpop.f32.mrf.mxu0
    %v1580 = vadd.f32 0.0, %v1579
    %v1581 = vpop.f32.mrf.mxu0
    %v1582 = vadd.f32 0.0, %v1581
    %1583 = vmatmul.bf16.gmra.mxu0 %v1499
    %v1584 = vpop.f32.mrf.mxu0
    %v1585 = vadd.f32 0.0, %v1584
    %v1586 = vpop.f32.mrf.mxu0
    %v1587 = vadd.f32 0.0, %v1586
    %1588 = vmatmul.bf16.gmra.mxu0 %v1500
    %v1589 = vpop.f32.mrf.mxu0
    %v1590 = vadd.f32 0.0, %v1589
    %v1591 = vpop.f32.mrf.mxu0
    %v1592 = vadd.f32 0.0, %v1591
    %1593 = vmatmul.bf16.gmra.mxu0 %v1501
    %v1594 = vpop.f32.mrf.mxu0
    %v1595 = vadd.f32 0.0, %v1594
    %v1596 = vpop.f32.mrf.mxu0
    %v1597 = vadd.f32 0.0, %v1596
    %1598 = vmatmul.bf16.gmra.mxu0 %v1502
    %v1599 = vpop.f32.mrf.mxu0
    %v1600 = vadd.f32 0.0, %v1599
    %v1601 = vpop.f32.mrf.mxu0
    %v1602 = vadd.f32 0.0, %v1601
    %1603 = vmatmul.bf16.gmra.mxu0 %v1503
    %v1604 = vpop.f32.mrf.mxu0
    %v1605 = vadd.f32 0.0, %v1604
    %v1606 = vpop.f32.mrf.mxu0
    %v1607 = vadd.f32 0.0, %v1606
    %1608 = vdwg.mxu0
    %v1609 = vadd.f32 %v1416, %v1570
    %v1610 = vadd.f32 %v1417, %v1572
    %v1611 = vadd.f32 %v1418, %v1575
    %v1612 = vadd.f32 %v1419, %v1577
    %v1613 = vadd.f32 %v1420, %v1580
    %v1614 = vadd.f32 %v1421, %v1582
    %v1615 = vadd.f32 %v1422, %v1585
    %v1616 = vadd.f32 %v1423, %v1587
    %v1617 = vadd.f32 %v1424, %v1590
    %v1618 = vadd.f32 %v1425, %v1592
    %v1619 = vadd.f32 %v1426, %v1595
    %v1620 = vadd.f32 %v1427, %v1597
    %v1621 = vadd.f32 %v1428, %v1600
    %v1622 = vadd.f32 %v1429, %v1602
    %v1623 = vadd.f32 %v1430, %v1605
    %v1624 = vadd.f32 %v1431, %v1607
    %1625 = vst [vmem:[#allocation3] sm:$0xff] %v1609
    %1626 = vst [vmem:[#allocation3 + $0x8] sm:$0xff] %v1610
    %1627 = vst [vmem:[#allocation3 + $0x10] sm:$0xff] %v1611
    %1628 = vst [vmem:[#allocation3 + $0x18] sm:$0xff] %v1612
    %1629 = vst [vmem:[#allocation3 + $0x20] sm:$0xff] %v1613
    %1630 = vst [vmem:[#allocation3 + $0x28] sm:$0xff] %v1614
    %1631 = vst [vmem:[#allocation3 + $0x30] sm:$0xff] %v1615
    %1632 = vst [vmem:[#allocation3 + $0x38] sm:$0xff] %v1616
    %1633 = vst [vmem:[#allocation3 + $0x40] sm:$0xff] %v1617
    %1634 = vst [vmem:[#allocation3 + $0x48] sm:$0xff] %v1618
    %1635 = vst [vmem:[#allocation3 + $0x50] sm:$0xff] %v1619
    %1636 = vst [vmem:[#allocation3 + $0x58] sm:$0xff] %v1620
    %1637 = vst [vmem:[#allocation3 + $0x60] sm:$0xff] %v1621
    %1638 = vst [vmem:[#allocation3 + $0x68] sm:$0xff] %v1622
    %1639 = vst [vmem:[#allocation3 + $0x70] sm:$0xff] %v1623
    %1640 = vst [vmem:[#allocation3 + $0x78] sm:$0xff] %v1624
    // Predicated region
    $region46: #{recurrent_gcn_forward.2} parent=1 // pred_check
      %p1641 = pneg %p96
    $region47: #{recurrent_gcn_forward.2} parent=1 // pred_check_branch
      %1643 = sbr.rel (%p1641) target = $region49
    $region48: #{recurrent_gcn_forward.2} parent=1 // pred_region
      %v1644 = vld [vmem:[#allocation3] sm:$0xff]
      %v1645 = vld [vmem:[#allocation3 + $0x8] sm:$0xff]
      %v1646 = vld [vmem:[#allocation3 + $0x10] sm:$0xff]
      %v1647 = vld [vmem:[#allocation3 + $0x18] sm:$0xff]
      %v1648 = vld [vmem:[#allocation3 + $0x20] sm:$0xff]
      %v1649 = vld [vmem:[#allocation3 + $0x28] sm:$0xff]
      %v1650 = vld [vmem:[#allocation3 + $0x30] sm:$0xff]
      %v1651 = vld [vmem:[#allocation3 + $0x38] sm:$0xff]
      %v1652 = vld [vmem:[#allocation3 + $0x40] sm:$0xff]
      %v1653 = vld [vmem:[#allocation3 + $0x48] sm:$0xff]
      %v1654 = vld [vmem:[#allocation3 + $0x50] sm:$0xff]
      %v1655 = vld [vmem:[#allocation3 + $0x58] sm:$0xff]
      %v1656 = vld [vmem:[#allocation3 + $0x60] sm:$0xff]
      %v1657 = vld [vmem:[#allocation3 + $0x68] sm:$0xff]
      %v1658 = vld [vmem:[#allocation3 + $0x70] sm:$0xff]
      %v1659 = vld [vmem:[#allocation3 + $0x78] sm:$0xff]
      %v1660 = vpack.c.bf16 %v1645, %v1644
      %v1661 = vpack.c.bf16 %v1647, %v1646
      %v1662 = vpack.c.bf16 %v1649, %v1648
      %v1663 = vpack.c.bf16 %v1651, %v1650
      %v1664 = vpack.c.bf16 %v1653, %v1652
      %v1665 = vpack.c.bf16 %v1655, %v1654
      %v1666 = vpack.c.bf16 %v1657, %v1656
      %v1667 = vpack.c.bf16 %v1659, %v1658
      %v1668 = vld [vmem:[#allocation2] sm:$0xf]
      %v1669 = vld [vmem:[#allocation2 + $0x4] sm:$0xf]
      %v1670 = vld [vmem:[#allocation2 + $0x8] sm:$0xf]
      %v1671 = vld [vmem:[#allocation2 + $0xc] sm:$0xf]
      %v1672 = vld [vmem:[#allocation2 + $0x10] sm:$0xf]
      %v1673 = vld [vmem:[#allocation2 + $0x14] sm:$0xf]
      %v1674 = vld [vmem:[#allocation2 + $0x18] sm:$0xf]
      %v1675 = vld [vmem:[#allocation2 + $0x1c] sm:$0xf]
      %v1676 = vld [vmem:[#allocation2 + $0x20] sm:$0xf]
      %v1677 = vld [vmem:[#allocation2 + $0x24] sm:$0xf]
      %v1678 = vld [vmem:[#allocation2 + $0x28] sm:$0xf]
      %v1679 = vld [vmem:[#allocation2 + $0x2c] sm:$0xf]
      %v1680 = vld [vmem:[#allocation2 + $0x30] sm:$0xf]
      %v1681 = vld [vmem:[#allocation2 + $0x34] sm:$0xf]
      %v1682 = vld [vmem:[#allocation2 + $0x38] sm:$0xf]
      %v1683 = vld [vmem:[#allocation2 + $0x3c] sm:$0xf]
      %v1700 = vunpack.c.l.b16 %v1668
      %v1701 = vunpack.c.l.b16 %v1669
      %v1702 = vunpack.c.l.b16 %v1670
      %v1703 = vunpack.c.l.b16 %v1671
      %v1704 = vunpack.c.l.b16 %v1672
      %v1705 = vunpack.c.l.b16 %v1673
      %v1706 = vunpack.c.l.b16 %v1674
      %v1707 = vunpack.c.l.b16 %v1675
      %v1708 = vunpack.c.l.b16 %v1676
      %v1709 = vunpack.c.l.b16 %v1677
      %v1710 = vunpack.c.l.b16 %v1678
      %v1711 = vunpack.c.l.b16 %v1679
      %v1712 = vunpack.c.l.b16 %v1680
      %v1713 = vunpack.c.l.b16 %v1681
      %v1714 = vunpack.c.l.b16 %v1682
      %v1715 = vunpack.c.l.b16 %v1683
      %v1716 = vpack.c.b16 %v1701, %v1700
      %v1717 = vpack.c.b16 %v1703, %v1702
      %v1718 = vpack.c.b16 %v1705, %v1704
      %v1719 = vpack.c.b16 %v1707, %v1706
      %v1720 = vpack.c.b16 %v1709, %v1708
      %v1721 = vpack.c.b16 %v1711, %v1710
      %v1722 = vpack.c.b16 %v1713, %v1712
      %v1723 = vpack.c.b16 %v1715, %v1714
      %1732 = vmatpush.bf16.msra.mxu0 %v1723
      %1733 = vmatpush.bf16.msra.mxu0 %v1722
      %1734 = vmatpush.bf16.msra.mxu0 %v1721
      %1735 = vmatpush.bf16.msra.mxu0 %v1720
      %1736 = vmatpush.bf16.msra.mxu0 %v1719
      %1737 = vmatpush.bf16.msra.mxu0 %v1718
      %1738 = vmatpush.bf16.msra.mxu0 %v1717
      %1739 = vmatpush.bf16.msra.mxu0 %v1716
      %1740 = vmatmul.bf16.gmra.mxu0 %v1660
      %v1741 = vpop.f32.mrf.mxu0
      %v1742 = vadd.f32 0.0, %v1741
      %v1743 = vpop.f32.mrf.mxu0
      %v1744 = vadd.f32 0.0, %v1743
      %1745 = vmatmul.bf16.gmra.mxu0 %v1661
      %v1746 = vpop.f32.mrf.mxu0
      %v1747 = vadd.f32 0.0, %v1746
      %v1748 = vpop.f32.mrf.mxu0
      %v1749 = vadd.f32 0.0, %v1748
      %1750 = vmatmul.bf16.gmra.mxu0 %v1662
      %v1751 = vpop.f32.mrf.mxu0
      %v1752 = vadd.f32 0.0, %v1751
      %v1753 = vpop.f32.mrf.mxu0
      %v1754 = vadd.f32 0.0, %v1753
      %1755 = vmatmul.bf16.gmra.mxu0 %v1663
      %v1756 = vpop.f32.mrf.mxu0
      %v1757 = vadd.f32 0.0, %v1756
      %v1758 = vpop.f32.mrf.mxu0
      %v1759 = vadd.f32 0.0, %v1758
      %1760 = vmatmul.bf16.gmra.mxu0 %v1664
      %v1761 = vpop.f32.mrf.mxu0
      %v1762 = vadd.f32 0.0, %v1761
      %v1763 = vpop.f32.mrf.mxu0
      %v1764 = vadd.f32 0.0, %v1763
      %1765 = vmatmul.bf16.gmra.mxu0 %v1665
      %v1766 = vpop.f32.mrf.mxu0
      %v1767 = vadd.f32 0.0, %v1766
      %v1768 = vpop.f32.mrf.mxu0
      %v1769 = vadd.f32 0.0, %v1768
      %1770 = vmatmul.bf16.gmra.mxu0 %v1666
      %v1771 = vpop.f32.mrf.mxu0
      %v1772 = vadd.f32 0.0, %v1771
      %v1773 = vpop.f32.mrf.mxu0
      %v1774 = vadd.f32 0.0, %v1773
      %1775 = vmatmul.bf16.gmra.mxu0 %v1667
      %v1776 = vpop.f32.mrf.mxu0
      %v1777 = vadd.f32 0.0, %v1776
      %v1778 = vpop.f32.mrf.mxu0
      %v1779 = vadd.f32 0.0, %v1778
      %1780 = vdwg.mxu0
      %v1781 = vmax.f32 %v1742, 0.0
      %v1782 = vmax.f32 %v1744, 0.0
      %v1783 = vmax.f32 %v1747, 0.0
      %v1784 = vmax.f32 %v1749, 0.0
      %v1785 = vmax.f32 %v1752, 0.0
      %v1786 = vmax.f32 %v1754, 0.0
      %v1787 = vmax.f32 %v1757, 0.0
      %v1788 = vmax.f32 %v1759, 0.0
      %v1789 = vmax.f32 %v1762, 0.0
      %v1790 = vmax.f32 %v1764, 0.0
      %v1791 = vmax.f32 %v1767, 0.0
      %v1792 = vmax.f32 %v1769, 0.0
      %v1793 = vmax.f32 %v1772, 0.0
      %v1794 = vmax.f32 %v1774, 0.0
      %v1795 = vmax.f32 %v1777, 0.0
      %v1796 = vmax.f32 %v1779, 0.0
      %v1797 = vpack.c.bf16 %v1781, %v1781
      %v1798 = vpack.c.bf16 %v1782, %v1782
      %v1799 = vpack.c.bf16 %v1783, %v1783
      %v1800 = vpack.c.bf16 %v1784, %v1784
      %v1801 = vpack.c.bf16 %v1785, %v1785
      %v1802 = vpack.c.bf16 %v1786, %v1786
      %v1803 = vpack.c.bf16 %v1787, %v1787
      %v1804 = vpack.c.bf16 %v1788, %v1788
      %v1805 = vpack.c.bf16 %v1789, %v1789
      %v1806 = vpack.c.bf16 %v1790, %v1790
      %v1807 = vpack.c.bf16 %v1791, %v1791
      %v1808 = vpack.c.bf16 %v1792, %v1792
      %v1809 = vpack.c.bf16 %v1793, %v1793
      %v1810 = vpack.c.bf16 %v1794, %v1794
      %v1811 = vpack.c.bf16 %v1795, %v1795
      %v1812 = vpack.c.bf16 %v1796, %v1796
      %1813 = vst [vmem:[%s5] sm:$0xf] %v1797
      %1814 = vst [vmem:[%s5 + $0x4] sm:$0xf] %v1798
      %1815 = vst [vmem:[%s5 + $0x8] sm:$0xf] %v1799
      %1816 = vst [vmem:[%s5 + $0xc] sm:$0xf] %v1800
      %1817 = vst [vmem:[%s5 + $0x10] sm:$0xf] %v1801
      %1818 = vst [vmem:[%s5 + $0x14] sm:$0xf] %v1802
      %1819 = vst [vmem:[%s5 + $0x18] sm:$0xf] %v1803
      %1820 = vst [vmem:[%s5 + $0x1c] sm:$0xf] %v1804
      %1821 = vst [vmem:[%s5 + $0x20] sm:$0xf] %v1805
      %1822 = vst [vmem:[%s5 + $0x24] sm:$0xf] %v1806
      %1823 = vst [vmem:[%s5 + $0x28] sm:$0xf] %v1807
      %1824 = vst [vmem:[%s5 + $0x2c] sm:$0xf] %v1808
      %1825 = vst [vmem:[%s5 + $0x30] sm:$0xf] %v1809
      %1826 = vst [vmem:[%s5 + $0x34] sm:$0xf] %v1810
      %1827 = vst [vmem:[%s5 + $0x38] sm:$0xf] %v1811
      %1828 = vst [vmem:[%s5 + $0x3c] sm:$0xf] %v1812
    $region49: #{recurrent_gcn_forward.2} parent=1 // pred_fallthru
      _
    // Predicated region
    $region50: #{recurrent_gcn_forward.2} parent=1 // pred_check
      _
    $region51: #{recurrent_gcn_forward.2} parent=1 // pred_check_branch
      %1830 = sbr.rel (0) target = $region53
    $region52: #{recurrent_gcn_forward.2} parent=1 // pred_region
      _
    $region53: #{recurrent_gcn_forward.2} parent=1 // pred_fallthru
      _
    // Predicated region
    $region54: #{recurrent_gcn_forward.2} parent=1 // pred_check
      _
    $region55: #{recurrent_gcn_forward.2} parent=1 // pred_check_branch
      %1832 = sbr.rel (0) target = $region57
    $region56: #{recurrent_gcn_forward.2} parent=1 // pred_region
      _
    $region57: #{recurrent_gcn_forward.2} parent=1 // pred_fallthru
      _
    %1833 = vsyncpa [#allocation5], 1
    %1834 = vsyncpa [#allocation7], 1
    %1835 = vsyncpa [#allocation10], 1

</llo_original>
